<compile_context>
chip_gen: v6e
topology: v6e:2x2x1
jax: 0.10.0
libtpu: 0.0.40
codegen_flags: <defaults>
</compile_context>

<pallas_src>
import math

import jax
import jax.numpy as jnp
from jax.experimental import pallas as pl
from jax.experimental.pallas import tpu as pltpu

BETA = 0.95
NUM_INPUTS = 28 * 28        # 784
NUM_OUTPUTS = 10
NUM_STEPS = 25
THRESHOLD = 1.0             # snntorch Leaky default threshold
LANE = 128


def _round_up(x, m):
    return -(-x // m) * m


def minimal_snn_kernel(x_ref, w_ref, b_ref, spk_ref, mem_ref):
    """One batch tile, batch mapped to lanes.

    x_ref:   (TB, 784)     f32 VMEM  (natural HBM layout, batch on sublanes)
    w_ref:   (10, 784)     f32 VMEM  (torch Linear weight as-is, grid-resident)
    b_ref:   (10, 1)       f32 VMEM  (grid-resident)
    spk_ref: (25, 10, TB)  f32 VMEM  spikes,   batch on lanes
    mem_ref: (25, 10, TB)  f32 VMEM  membrane, batch on lanes
    """
    # cur[o, b] = sum_k w[o, k] * x[b, k]  -> (10, TB): NT matmul, batch on lanes.
    cur = jax.lax.dot_general(
        w_ref[...], x_ref[...],
        dimension_numbers=(((1,), (1,)), ((), ())),
        preferred_element_type=jnp.float32,
        precision=jax.lax.Precision.HIGHEST,
    )
    cur = cur + b_ref[...]                      # (10, TB) + (10, 1)

    # lif_out.init_leaky(): mem = 0.  (10, TB) f32 ~ 2*(TB/128) vregs -> registers.
    mem = jnp.zeros_like(cur)

    # Fully-unrolled LIF loop; each step stores one full-lane-width (10, TB) slab.
    for step in range(NUM_STEPS):
        reset = (mem > THRESHOLD).astype(jnp.float32)      # from previous mem
        mem = BETA * mem + cur - reset * THRESHOLD
        spk = (mem > THRESHOLD).astype(jnp.float32)
        spk_ref[step, :, :] = spk
        mem_ref[step, :, :] = mem


def _tile_plan(B, max_tile):
    """Return (tb, n_tiles, b_pad).

    Small batches: a single tile (block == full dim is always legal).
    Large batches: lane-aligned (128-multiple) tiles and at least 2 tiles so the
    "parallel" batch axis shards across both v7x TensorCores.
    """
    if B <= 256:
        return B, 1, B
    n_tiles = max(2, math.ceil(B / max_tile))
    tb = _round_up(math.ceil(B / n_tiles), LANE)
    n_tiles = max(2, math.ceil(B / tb))
    return tb, n_tiles, n_tiles * tb


def _vmem_limit_bytes(tb):
    """Double-buffered VMEM footprint for one grid step, with headroom."""
    tb_sub = _round_up(tb, 8)
    tb_lanes = _round_up(tb, LANE)
    in_lanes = _round_up(NUM_INPUTS, LANE)                       # 784 -> 896
    x_tile = tb_sub * in_lanes * 4
    out_tile = NUM_STEPS * _round_up(NUM_OUTPUTS, 8) * tb_lanes * 4
    wb_tile = _round_up(NUM_OUTPUTS, 8) * (in_lanes + LANE) * 4  # weight + bias
    needed = 2 * x_tile + 2 * 2 * out_tile + 2 * wb_tile
    return int(min(needed + (8 << 20), 112 << 20))


def minimal_net_forward(x, weight, bias, *, max_tile=1024):
    """x: (B, 784) f32; weight: (10, 784) f32 (torch layout); bias: (10,) f32.

    Returns (spk_all, mem_all), each (25, B, 10) — matching torch.stack(dim=0).
    """
    B = x.shape[0]
    x = x.astype(jnp.float32)
    w = weight.astype(jnp.float32)                       # (10, 784), used untransposed
    b = bias.reshape(NUM_OUTPUTS, 1).astype(jnp.float32)

    tb, n_tiles, b_pad = _tile_plan(B, max_tile)
    if b_pad != B:
        x = jnp.pad(x, ((0, b_pad - B), (0, 0)))

    flops = 2 * b_pad * NUM_INPUTS * NUM_OUTPUTS
    bytes_accessed = 4 * (b_pad * NUM_INPUTS                       # x in
                          + NUM_OUTPUTS * NUM_INPUTS + NUM_OUTPUTS  # w, b
                          + 2 * NUM_STEPS * NUM_OUTPUTS * b_pad)    # spk + mem out

    spk_t, mem_t = pl.pallas_call(
        minimal_snn_kernel,
        out_shape=(
            jax.ShapeDtypeStruct((NUM_STEPS, NUM_OUTPUTS, b_pad), jnp.float32),
            jax.ShapeDtypeStruct((NUM_STEPS, NUM_OUTPUTS, b_pad), jnp.float32),
        ),
        grid=(n_tiles,),
        in_specs=[
            pl.BlockSpec((tb, NUM_INPUTS), lambda i: (i, 0)),
            pl.BlockSpec((NUM_OUTPUTS, NUM_INPUTS), lambda i: (0, 0)),  # resident
            pl.BlockSpec((NUM_OUTPUTS, 1), lambda i: (0, 0)),           # resident
        ],
        out_specs=(
            pl.BlockSpec((NUM_STEPS, NUM_OUTPUTS, tb), lambda i: (0, 0, i)),
            pl.BlockSpec((NUM_STEPS, NUM_OUTPUTS, tb), lambda i: (0, 0, i)),
        ),
        compiler_params=pltpu.CompilerParams(
            dimension_semantics=("parallel",),     # batch tiles independent -> megacore
            vmem_limit_bytes=_vmem_limit_bytes(tb),
        ),
        cost_estimate=pl.CostEstimate(
            flops=flops, transcendentals=0, bytes_accessed=bytes_accessed),
    )(x, w, b)

    # (25, 10, b_pad) -> drop padded batch rows -> (25, B, 10).
    spk = spk_t[:, :, :B].transpose(0, 2, 1)
    mem = mem_t[:, :, :B].transpose(0, 2, 1)
    return spk, mem


def reference_forward(x, weight, bias):
    """Pure-JAX reference mirroring the PyTorch/snntorch semantics."""
    cur = jnp.dot(x, weight.T, precision=jax.lax.Precision.HIGHEST) + bias
    mem = jnp.zeros((x.shape[0], NUM_OUTPUTS), jnp.float32)
    spk_all, mem_all = [], []
    for _ in range(NUM_STEPS):
        reset = (mem > THRESHOLD).astype(jnp.float32)
        mem = BETA * mem + cur - reset * THRESHOLD
        spk = (mem > THRESHOLD).astype(jnp.float32)
        spk_all.append(spk)
        mem_all.append(mem)
    return jnp.stack(spk_all, 0), jnp.stack(mem_all, 0)


def _check(B, max_tile, key):
    k_x, k_w, k_b = jax.random.split(key, 3)
    x = jax.random.normal(k_x, (B, NUM_INPUTS), dtype=jnp.float32)
    bound = 1.0 / (NUM_INPUTS ** 0.5)  # torch.nn.Linear init range
    weight = jax.random.uniform(k_w, (NUM_OUTPUTS, NUM_INPUTS),
                                minval=-bound, maxval=bound, dtype=jnp.float32)
    bias = jax.random.uniform(k_b, (NUM_OUTPUTS,),
                              minval=-bound, maxval=bound, dtype=jnp.float32)

    spk_all, mem_all = jax.block_until_ready(
        minimal_net_forward(x, weight, bias, max_tile=max_tile))
    spk_ref, mem_ref = reference_forward(x, weight, bias)

    assert spk_all.shape == (NUM_STEPS, B, NUM_OUTPUTS)
    assert mem_all.shape == (NUM_STEPS, B, NUM_OUTPUTS)
    assert jnp.allclose(mem_all, mem_ref, atol=1e-4, rtol=1e-4)
    # Spikes are hard threshold crossings; tolerate disagreement only where the
    # reference membrane sits numerically on the threshold itself.
    mismatch = spk_all != spk_ref
    near_threshold = jnp.abs(mem_ref - THRESHOLD) < 1e-3
    assert bool(jnp.all(jnp.logical_or(~mismatch, near_threshold)))


if __name__ == "__main__":
    key = jax.random.PRNGKey(0)
    k1, k2, k3 = jax.random.split(key, 3)

    # Tiny batch: single tile (block == full batch dim).
    _check(B=8, max_tile=1024, key=k1)
    # Non-multiple-of-8 batch, still a single tile.
    _check(B=20, max_tile=1024, key=k2)
    # Multi-tile + padding path: B=300 with 128-row lane-aligned tiles -> 3 tiles, pad to 384.
    _check(B=300, max_tile=128, key=k3)

    print("KERNEL_OK")
</pallas_src>

<mosaic_0001>
module attributes {stable_mosaic.version = 11 : i64} {
  func.func @minimal_snn_kernel(%arg0: i32, %arg1: memref<8x784xf32, #tpu.memory_space<vmem>>, %arg2: memref<10x784xf32, #tpu.memory_space<vmem>>, %arg3: memref<10x1xf32, #tpu.memory_space<vmem>>, %arg4: memref<25x10x8xf32, #tpu.memory_space<vmem>>, %arg5: memref<25x10x8xf32, #tpu.memory_space<vmem>>) attributes {dimension_semantics = [#tpu.dimension_semantics<parallel>], iteration_bounds = array<i64: 1>, scalar_prefetch = 0 : i64, scratch_operands = 0 : i64, tpu.core_type = #tpu.core_type<tc>, window_params = [{transform_indices = @transform_0, window_bounds = array<i64: 8, 784>}, {pipeline_mode = #tpu.pipeline_mode<synchronous>, transform_indices = @transform_1, window_bounds = array<i64: 10, 784>}, {pipeline_mode = #tpu.pipeline_mode<synchronous>, transform_indices = @transform_2, window_bounds = array<i64: 10, 1>}, {transform_indices = @transform_3, window_bounds = array<i64: 25, 10, 8>}, {transform_indices = @transform_4, window_bounds = array<i64: 25, 10, 8>}]} {
    %c0 = arith.constant 0 : index
    %c0_0 = arith.constant 0 : index
    %0 = vector.load %arg2[%c0, %c0_0] : memref<10x784xf32, #tpu.memory_space<vmem>>, vector<10x784xf32>
    %c0_1 = arith.constant 0 : index
    %c0_2 = arith.constant 0 : index
    %1 = vector.load %arg1[%c0_1, %c0_2] : memref<8x784xf32, #tpu.memory_space<vmem>>, vector<8x784xf32>
    %cst = arith.constant dense<0.000000e+00> : vector<10x8xf32>
    %2 = tpu.matmul %0, %1, %cst {dimension_numbers = #tpu.dot_dimension_numbers<[1], [1], [0], [0], [0, 0, 1, 0], [], []>, precision = #tpu.contract_precision<fp32>} : vector<10x784xf32>, vector<8x784xf32>, vector<10x8xf32> -> vector<10x8xf32>
    %c0_3 = arith.constant 0 : index
    %c0_4 = arith.constant 0 : index
    %3 = vector.load %arg3[%c0_3, %c0_4] : memref<10x1xf32, #tpu.memory_space<vmem>>, vector<10x1xf32>
    %4 = vector.broadcast %3 : vector<10x1xf32> to vector<10x8xf32>
    %5 = arith.addf %2, %4 : vector<10x8xf32>
    %cst_5 = arith.constant 0.000000e+00 : f32
    %6 = vector.broadcast %cst_5 : f32 to vector<10x8xf32>
    %cst_6 = arith.constant 1.000000e+00 : f32
    %7 = vector.broadcast %cst_6 : f32 to vector<10x8xf32>
    %8 = arith.cmpf ogt, %6, %7 : vector<10x8xf32>
    %9 = arith.extui %8 : vector<10x8xi1> to vector<10x8xi32>
    %10 = arith.sitofp %9 : vector<10x8xi32> to vector<10x8xf32>
    %cst_7 = arith.constant 0.949999988 : f32
    %11 = vector.broadcast %cst_7 : f32 to vector<10x8xf32>
    %12 = arith.mulf %11, %6 : vector<10x8xf32>
    %13 = arith.addf %12, %5 : vector<10x8xf32>
    %cst_8 = arith.constant 1.000000e+00 : f32
    %14 = vector.broadcast %cst_8 : f32 to vector<10x8xf32>
    %15 = arith.mulf %10, %14 : vector<10x8xf32>
    %16 = arith.subf %13, %15 : vector<10x8xf32>
    %cst_9 = arith.constant 1.000000e+00 : f32
    %17 = vector.broadcast %cst_9 : f32 to vector<10x8xf32>
    %18 = arith.cmpf ogt, %16, %17 : vector<10x8xf32>
    %19 = arith.extui %18 : vector<10x8xi1> to vector<10x8xi32>
    %20 = arith.sitofp %19 : vector<10x8xi32> to vector<10x8xf32>
    %c0_10 = arith.constant 0 : index
    %c0_11 = arith.constant 0 : index
    %c0_12 = arith.constant 0 : index
    %21 = vector.load %arg4[%c0_10, %c0_11, %c0_12] : memref<25x10x8xf32, #tpu.memory_space<vmem>>, vector<1x10x8xf32>
    %22 = vector.shape_cast %21 : vector<1x10x8xf32> to vector<10x8xf32>
    %23 = vector.shape_cast %20 : vector<10x8xf32> to vector<1x10x8xf32>
    tpu.vector_store %arg4[%c0_10, %c0_11, %c0_12], %23 {strides = array<i32>} : memref<25x10x8xf32, #tpu.memory_space<vmem>>, vector<1x10x8xf32>,
    %c0_13 = arith.constant 0 : index
    %c0_14 = arith.constant 0 : index
    %c0_15 = arith.constant 0 : index
    %24 = vector.load %arg5[%c0_13, %c0_14, %c0_15] : memref<25x10x8xf32, #tpu.memory_space<vmem>>, vector<1x10x8xf32>
    %25 = vector.shape_cast %24 : vector<1x10x8xf32> to vector<10x8xf32>
    %26 = vector.shape_cast %16 : vector<10x8xf32> to vector<1x10x8xf32>
    tpu.vector_store %arg5[%c0_13, %c0_14, %c0_15], %26 {strides = array<i32>} : memref<25x10x8xf32, #tpu.memory_space<vmem>>, vector<1x10x8xf32>,
    %cst_16 = arith.constant 1.000000e+00 : f32
    %27 = vector.broadcast %cst_16 : f32 to vector<10x8xf32>
    %28 = arith.cmpf ogt, %16, %27 : vector<10x8xf32>
    %29 = arith.extui %28 : vector<10x8xi1> to vector<10x8xi32>
    %30 = arith.sitofp %29 : vector<10x8xi32> to vector<10x8xf32>
    %cst_17 = arith.constant 0.949999988 : f32
    %31 = vector.broadcast %cst_17 : f32 to vector<10x8xf32>
    %32 = arith.mulf %31, %16 : vector<10x8xf32>
    %33 = arith.addf %32, %5 : vector<10x8xf32>
    %cst_18 = arith.constant 1.000000e+00 : f32
    %34 = vector.broadcast %cst_18 : f32 to vector<10x8xf32>
    %35 = arith.mulf %30, %34 : vector<10x8xf32>
    %36 = arith.subf %33, %35 : vector<10x8xf32>
    %cst_19 = arith.constant 1.000000e+00 : f32
    %37 = vector.broadcast %cst_19 : f32 to vector<10x8xf32>
    %38 = arith.cmpf ogt, %36, %37 : vector<10x8xf32>
    %39 = arith.extui %38 : vector<10x8xi1> to vector<10x8xi32>
    %40 = arith.sitofp %39 : vector<10x8xi32> to vector<10x8xf32>
    %c1 = arith.constant 1 : index
    %c0_20 = arith.constant 0 : index
    %c0_21 = arith.constant 0 : index
    %41 = vector.load %arg4[%c1, %c0_20, %c0_21] : memref<25x10x8xf32, #tpu.memory_space<vmem>>, vector<1x10x8xf32>
    %42 = vector.shape_cast %41 : vector<1x10x8xf32> to vector<10x8xf32>
    %43 = vector.shape_cast %40 : vector<10x8xf32> to vector<1x10x8xf32>
    tpu.vector_store %arg4[%c1, %c0_20, %c0_21], %43 {strides = array<i32>} : memref<25x10x8xf32, #tpu.memory_space<vmem>>, vector<1x10x8xf32>,
    %c1_22 = arith.constant 1 : index
    %c0_23 = arith.constant 0 : index
    %c0_24 = arith.constant 0 : index
    %44 = vector.load %arg5[%c1_22, %c0_23, %c0_24] : memref<25x10x8xf32, #tpu.memory_space<vmem>>, vector<1x10x8xf32>
    %45 = vector.shape_cast %44 : vector<1x10x8xf32> to vector<10x8xf32>
    %46 = vector.shape_cast %36 : vector<10x8xf32> to vector<1x10x8xf32>
    tpu.vector_store %arg5[%c1_22, %c0_23, %c0_24], %46 {strides = array<i32>} : memref<25x10x8xf32, #tpu.memory_space<vmem>>, vector<1x10x8xf32>,
    %cst_25 = arith.constant 1.000000e+00 : f32
    %47 = vector.broadcast %cst_25 : f32 to vector<10x8xf32>
    %48 = arith.cmpf ogt, %36, %47 : vector<10x8xf32>
    %49 = arith.extui %48 : vector<10x8xi1> to vector<10x8xi32>
    %50 = arith.sitofp %49 : vector<10x8xi32> to vector<10x8xf32>
    %cst_26 = arith.constant 0.949999988 : f32
    %51 = vector.broadcast %cst_26 : f32 to vector<10x8xf32>
    %52 = arith.mulf %51, %36 : vector<10x8xf32>
    %53 = arith.addf %52, %5 : vector<10x8xf32>
    %cst_27 = arith.constant 1.000000e+00 : f32
    %54 = vector.broadcast %cst_27 : f32 to vector<10x8xf32>
    %55 = arith.mulf %50, %54 : vector<10x8xf32>
    %56 = arith.subf %53, %55 : vector<10x8xf32>
    %cst_28 = arith.constant 1.000000e+00 : f32
    %57 = vector.broadcast %cst_28 : f32 to vector<10x8xf32>
    %58 = arith.cmpf ogt, %56, %57 : vector<10x8xf32>
    %59 = arith.extui %58 : vector<10x8xi1> to vector<10x8xi32>
    %60 = arith.sitofp %59 : vector<10x8xi32> to vector<10x8xf32>
    %c2 = arith.constant 2 : index
    %c0_29 = arith.constant 0 : index
    %c0_30 = arith.constant 0 : index
    %61 = vector.load %arg4[%c2, %c0_29, %c0_30] : memref<25x10x8xf32, #tpu.memory_space<vmem>>, vector<1x10x8xf32>
    %62 = vector.shape_cast %61 : vector<1x10x8xf32> to vector<10x8xf32>
    %63 = vector.shape_cast %60 : vector<10x8xf32> to vector<1x10x8xf32>
    tpu.vector_store %arg4[%c2, %c0_29, %c0_30], %63 {strides = array<i32>} : memref<25x10x8xf32, #tpu.memory_space<vmem>>, vector<1x10x8xf32>,
    %c2_31 = arith.constant 2 : index
    %c0_32 = arith.constant 0 : index
    %c0_33 = arith.constant 0 : index
    %64 = vector.load %arg5[%c2_31, %c0_32, %c0_33] : memref<25x10x8xf32, #tpu.memory_space<vmem>>, vector<1x10x8xf32>
    %65 = vector.shape_cast %64 : vector<1x10x8xf32> to vector<10x8xf32>
    %66 = vector.shape_cast %56 : vector<10x8xf32> to vector<1x10x8xf32>
    tpu.vector_store %arg5[%c2_31, %c0_32, %c0_33], %66 {strides = array<i32>} : memref<25x10x8xf32, #tpu.memory_space<vmem>>, vector<1x10x8xf32>,
    %cst_34 = arith.constant 1.000000e+00 : f32
    %67 = vector.broadcast %cst_34 : f32 to vector<10x8xf32>
    %68 = arith.cmpf ogt, %56, %67 : vector<10x8xf32>
    %69 = arith.extui %68 : vector<10x8xi1> to vector<10x8xi32>
    %70 = arith.sitofp %69 : vector<10x8xi32> to vector<10x8xf32>
    %cst_35 = arith.constant 0.949999988 : f32
    %71 = vector.broadcast %cst_35 : f32 to vector<10x8xf32>
    %72 = arith.mulf %71, %56 : vector<10x8xf32>
    %73 = arith.addf %72, %5 : vector<10x8xf32>
    %cst_36 = arith.constant 1.000000e+00 : f32
    %74 = vector.broadcast %cst_36 : f32 to vector<10x8xf32>
    %75 = arith.mulf %70, %74 : vector<10x8xf32>
    %76 = arith.subf %73, %75 : vector<10x8xf32>
    %cst_37 = arith.constant 1.000000e+00 : f32
    %77 = vector.broadcast %cst_37 : f32 to vector<10x8xf32>
    %78 = arith.cmpf ogt, %76, %77 : vector<10x8xf32>
    %79 = arith.extui %78 : vector<10x8xi1> to vector<10x8xi32>
    %80 = arith.sitofp %79 : vector<10x8xi32> to vector<10x8xf32>
    %c3 = arith.constant 3 : index
    %c0_38 = arith.constant 0 : index
    %c0_39 = arith.constant 0 : index
    %81 = vector.load %arg4[%c3, %c0_38, %c0_39] : memref<25x10x8xf32, #tpu.memory_space<vmem>>, vector<1x10x8xf32>
    %82 = vector.shape_cast %81 : vector<1x10x8xf32> to vector<10x8xf32>
    %83 = vector.shape_cast %80 : vector<10x8xf32> to vector<1x10x8xf32>
    tpu.vector_store %arg4[%c3, %c0_38, %c0_39], %83 {strides = array<i32>} : memref<25x10x8xf32, #tpu.memory_space<vmem>>, vector<1x10x8xf32>,
    %c3_40 = arith.constant 3 : index
    %c0_41 = arith.constant 0 : index
    %c0_42 = arith.constant 0 : index
    %84 = vector.load %arg5[%c3_40, %c0_41, %c0_42] : memref<25x10x8xf32, #tpu.memory_space<vmem>>, vector<1x10x8xf32>
    %85 = vector.shape_cast %84 : vector<1x10x8xf32> to vector<10x8xf32>
    %86 = vector.shape_cast %76 : vector<10x8xf32> to vector<1x10x8xf32>
    tpu.vector_store %arg5[%c3_40, %c0_41, %c0_42], %86 {strides = array<i32>} : memref<25x10x8xf32, #tpu.memory_space<vmem>>, vector<1x10x8xf32>,
    %cst_43 = arith.constant 1.000000e+00 : f32
    %87 = vector.broadcast %cst_43 : f32 to vector<10x8xf32>
    %88 = arith.cmpf ogt, %76, %87 : vector<10x8xf32>
    %89 = arith.extui %88 : vector<10x8xi1> to vector<10x8xi32>
    %90 = arith.sitofp %89 : vector<10x8xi32> to vector<10x8xf32>
    %cst_44 = arith.constant 0.949999988 : f32
    %91 = vector.broadcast %cst_44 : f32 to vector<10x8xf32>
    %92 = arith.mulf %91, %76 : vector<10x8xf32>
    %93 = arith.addf %92, %5 : vector<10x8xf32>
    %cst_45 = arith.constant 1.000000e+00 : f32
    %94 = vector.broadcast %cst_45 : f32 to vector<10x8xf32>
    %95 = arith.mulf %90, %94 : vector<10x8xf32>
    %96 = arith.subf %93, %95 : vector<10x8xf32>
    %cst_46 = arith.constant 1.000000e+00 : f32
    %97 = vector.broadcast %cst_46 : f32 to vector<10x8xf32>
    %98 = arith.cmpf ogt, %96, %97 : vector<10x8xf32>
    %99 = arith.extui %98 : vector<10x8xi1> to vector<10x8xi32>
    %100 = arith.sitofp %99 : vector<10x8xi32> to vector<10x8xf32>
    %c4 = arith.constant 4 : index
    %c0_47 = arith.constant 0 : index
    %c0_48 = arith.constant 0 : index
    %101 = vector.load %arg4[%c4, %c0_47, %c0_48] : memref<25x10x8xf32, #tpu.memory_space<vmem>>, vector<1x10x8xf32>
    %102 = vector.shape_cast %101 : vector<1x10x8xf32> to vector<10x8xf32>
    %103 = vector.shape_cast %100 : vector<10x8xf32> to vector<1x10x8xf32>
    tpu.vector_store %arg4[%c4, %c0_47, %c0_48], %103 {strides = array<i32>} : memref<25x10x8xf32, #tpu.memory_space<vmem>>, vector<1x10x8xf32>,
    %c4_49 = arith.constant 4 : index
    %c0_50 = arith.constant 0 : index
    %c0_51 = arith.constant 0 : index
    %104 = vector.load %arg5[%c4_49, %c0_50, %c0_51] : memref<25x10x8xf32, #tpu.memory_space<vmem>>, vector<1x10x8xf32>
    %105 = vector.shape_cast %104 : vector<1x10x8xf32> to vector<10x8xf32>
    %106 = vector.shape_cast %96 : vector<10x8xf32> to vector<1x10x8xf32>
    tpu.vector_store %arg5[%c4_49, %c0_50, %c0_51], %106 {strides = array<i32>} : memref<25x10x8xf32, #tpu.memory_space<vmem>>, vector<1x10x8xf32>,
    %cst_52 = arith.constant 1.000000e+00 : f32
    %107 = vector.broadcast %cst_52 : f32 to vector<10x8xf32>
    %108 = arith.cmpf ogt, %96, %107 : vector<10x8xf32>
    %109 = arith.extui %108 : vector<10x8xi1> to vector<10x8xi32>
    %110 = arith.sitofp %109 : vector<10x8xi32> to vector<10x8xf32>
    %cst_53 = arith.constant 0.949999988 : f32
    %111 = vector.broadcast %cst_53 : f32 to vector<10x8xf32>
    %112 = arith.mulf %111, %96 : vector<10x8xf32>
    %113 = arith.addf %112, %5 : vector<10x8xf32>
    %cst_54 = arith.constant 1.000000e+00 : f32
    %114 = vector.broadcast %cst_54 : f32 to vector<10x8xf32>
    %115 = arith.mulf %110, %114 : vector<10x8xf32>
    %116 = arith.subf %113, %115 : vector<10x8xf32>
    %cst_55 = arith.constant 1.000000e+00 : f32
    %117 = vector.broadcast %cst_55 : f32 to vector<10x8xf32>
    %118 = arith.cmpf ogt, %116, %117 : vector<10x8xf32>
    %119 = arith.extui %118 : vector<10x8xi1> to vector<10x8xi32>
    %120 = arith.sitofp %119 : vector<10x8xi32> to vector<10x8xf32>
    %c5 = arith.constant 5 : index
    %c0_56 = arith.constant 0 : index
    %c0_57 = arith.constant 0 : index
    %121 = vector.load %arg4[%c5, %c0_56, %c0_57] : memref<25x10x8xf32, #tpu.memory_space<vmem>>, vector<1x10x8xf32>
    %122 = vector.shape_cast %121 : vector<1x10x8xf32> to vector<10x8xf32>
    %123 = vector.shape_cast %120 : vector<10x8xf32> to vector<1x10x8xf32>
    tpu.vector_store %arg4[%c5, %c0_56, %c0_57], %123 {strides = array<i32>} : memref<25x10x8xf32, #tpu.memory_space<vmem>>, vector<1x10x8xf32>,
    %c5_58 = arith.constant 5 : index
    %c0_59 = arith.constant 0 : index
    %c0_60 = arith.constant 0 : index
    %124 = vector.load %arg5[%c5_58, %c0_59, %c0_60] : memref<25x10x8xf32, #tpu.memory_space<vmem>>, vector<1x10x8xf32>
    %125 = vector.shape_cast %124 : vector<1x10x8xf32> to vector<10x8xf32>
    %126 = vector.shape_cast %116 : vector<10x8xf32> to vector<1x10x8xf32>
    tpu.vector_store %arg5[%c5_58, %c0_59, %c0_60], %126 {strides = array<i32>} : memref<25x10x8xf32, #tpu.memory_space<vmem>>, vector<1x10x8xf32>,
    %cst_61 = arith.constant 1.000000e+00 : f32
    %127 = vector.broadcast %cst_61 : f32 to vector<10x8xf32>
    %128 = arith.cmpf ogt, %116, %127 : vector<10x8xf32>
    %129 = arith.extui %128 : vector<10x8xi1> to vector<10x8xi32>
    %130 = arith.sitofp %129 : vector<10x8xi32> to vector<10x8xf32>
    %cst_62 = arith.constant 0.949999988 : f32
    %131 = vector.broadcast %cst_62 : f32 to vector<10x8xf32>
    %132 = arith.mulf %131, %116 : vector<10x8xf32>
    %133 = arith.addf %132, %5 : vector<10x8xf32>
    %cst_63 = arith.constant 1.000000e+00 : f32
    %134 = vector.broadcast %cst_63 : f32 to vector<10x8xf32>
    %135 = arith.mulf %130, %134 : vector<10x8xf32>
    %136 = arith.subf %133, %135 : vector<10x8xf32>
    %cst_64 = arith.constant 1.000000e+00 : f32
    %137 = vector.broadcast %cst_64 : f32 to vector<10x8xf32>
    %138 = arith.cmpf ogt, %136, %137 : vector<10x8xf32>
    %139 = arith.extui %138 : vector<10x8xi1> to vector<10x8xi32>
    %140 = arith.sitofp %139 : vector<10x8xi32> to vector<10x8xf32>
    %c6 = arith.constant 6 : index
    %c0_65 = arith.constant 0 : index
    %c0_66 = arith.constant 0 : index
    %141 = vector.load %arg4[%c6, %c0_65, %c0_66] : memref<25x10x8xf32, #tpu.memory_space<vmem>>, vector<1x10x8xf32>
    %142 = vector.shape_cast %141 : vector<1x10x8xf32> to vector<10x8xf32>
    %143 = vector.shape_cast %140 : vector<10x8xf32> to vector<1x10x8xf32>
    tpu.vector_store %arg4[%c6, %c0_65, %c0_66], %143 {strides = array<i32>} : memref<25x10x8xf32, #tpu.memory_space<vmem>>, vector<1x10x8xf32>,
    %c6_67 = arith.constant 6 : index
    %c0_68 = arith.constant 0 : index
    %c0_69 = arith.constant 0 : index
    %144 = vector.load %arg5[%c6_67, %c0_68, %c0_69] : memref<25x10x8xf32, #tpu.memory_space<vmem>>, vector<1x10x8xf32>
    %145 = vector.shape_cast %144 : vector<1x10x8xf32> to vector<10x8xf32>
    %146 = vector.shape_cast %136 : vector<10x8xf32> to vector<1x10x8xf32>
    tpu.vector_store %arg5[%c6_67, %c0_68, %c0_69], %146 {strides = array<i32>} : memref<25x10x8xf32, #tpu.memory_space<vmem>>, vector<1x10x8xf32>,
    %cst_70 = arith.constant 1.000000e+00 : f32
    %147 = vector.broadcast %cst_70 : f32 to vector<10x8xf32>
    %148 = arith.cmpf ogt, %136, %147 : vector<10x8xf32>
    %149 = arith.extui %148 : vector<10x8xi1> to vector<10x8xi32>
    %150 = arith.sitofp %149 : vector<10x8xi32> to vector<10x8xf32>
    %cst_71 = arith.constant 0.949999988 : f32
    %151 = vector.broadcast %cst_71 : f32 to vector<10x8xf32>
    %152 = arith.mulf %151, %136 : vector<10x8xf32>
    %153 = arith.addf %152, %5 : vector<10x8xf32>
    %cst_72 = arith.constant 1.000000e+00 : f32
    %154 = vector.broadcast %cst_72 : f32 to vector<10x8xf32>
    %155 = arith.mulf %150, %154 : vector<10x8xf32>
    %156 = arith.subf %153, %155 : vector<10x8xf32>
    %cst_73 = arith.constant 1.000000e+00 : f32
    %157 = vector.broadcast %cst_73 : f32 to vector<10x8xf32>
    %158 = arith.cmpf ogt, %156, %157 : vector<10x8xf32>
    %159 = arith.extui %158 : vector<10x8xi1> to vector<10x8xi32>
    %160 = arith.sitofp %159 : vector<10x8xi32> to vector<10x8xf32>
    %c7 = arith.constant 7 : index
    %c0_74 = arith.constant 0 : index
    %c0_75 = arith.constant 0 : index
    %161 = vector.load %arg4[%c7, %c0_74, %c0_75] : memref<25x10x8xf32, #tpu.memory_space<vmem>>, vector<1x10x8xf32>
    %162 = vector.shape_cast %161 : vector<1x10x8xf32> to vector<10x8xf32>
    %163 = vector.shape_cast %160 : vector<10x8xf32> to vector<1x10x8xf32>
    tpu.vector_store %arg4[%c7, %c0_74, %c0_75], %163 {strides = array<i32>} : memref<25x10x8xf32, #tpu.memory_space<vmem>>, vector<1x10x8xf32>,
    %c7_76 = arith.constant 7 : index
    %c0_77 = arith.constant 0 : index
    %c0_78 = arith.constant 0 : index
    %164 = vector.load %arg5[%c7_76, %c0_77, %c0_78] : memref<25x10x8xf32, #tpu.memory_space<vmem>>, vector<1x10x8xf32>
    %165 = vector.shape_cast %164 : vector<1x10x8xf32> to vector<10x8xf32>
    %166 = vector.shape_cast %156 : vector<10x8xf32> to vector<1x10x8xf32>
    tpu.vector_store %arg5[%c7_76, %c0_77, %c0_78], %166 {strides = array<i32>} : memref<25x10x8xf32, #tpu.memory_space<vmem>>, vector<1x10x8xf32>,
    %cst_79 = arith.constant 1.000000e+00 : f32
    %167 = vector.broadcast %cst_79 : f32 to vector<10x8xf32>
    %168 = arith.cmpf ogt, %156, %167 : vector<10x8xf32>
    %169 = arith.extui %168 : vector<10x8xi1> to vector<10x8xi32>
    %170 = arith.sitofp %169 : vector<10x8xi32> to vector<10x8xf32>
    %cst_80 = arith.constant 0.949999988 : f32
    %171 = vector.broadcast %cst_80 : f32 to vector<10x8xf32>
    %172 = arith.mulf %171, %156 : vector<10x8xf32>
    %173 = arith.addf %172, %5 : vector<10x8xf32>
    %cst_81 = arith.constant 1.000000e+00 : f32
    %174 = vector.broadcast %cst_81 : f32 to vector<10x8xf32>
    %175 = arith.mulf %170, %174 : vector<10x8xf32>
    %176 = arith.subf %173, %175 : vector<10x8xf32>
    %cst_82 = arith.constant 1.000000e+00 : f32
    %177 = vector.broadcast %cst_82 : f32 to vector<10x8xf32>
    %178 = arith.cmpf ogt, %176, %177 : vector<10x8xf32>
    %179 = arith.extui %178 : vector<10x8xi1> to vector<10x8xi32>
    %180 = arith.sitofp %179 : vector<10x8xi32> to vector<10x8xf32>
    %c8 = arith.constant 8 : index
    %c0_83 = arith.constant 0 : index
    %c0_84 = arith.constant 0 : index
    %181 = vector.load %arg4[%c8, %c0_83, %c0_84] : memref<25x10x8xf32, #tpu.memory_space<vmem>>, vector<1x10x8xf32>
    %182 = vector.shape_cast %181 : vector<1x10x8xf32> to vector<10x8xf32>
    %183 = vector.shape_cast %180 : vector<10x8xf32> to vector<1x10x8xf32>
    tpu.vector_store %arg4[%c8, %c0_83, %c0_84], %183 {strides = array<i32>} : memref<25x10x8xf32, #tpu.memory_space<vmem>>, vector<1x10x8xf32>,
    %c8_85 = arith.constant 8 : index
    %c0_86 = arith.constant 0 : index
    %c0_87 = arith.constant 0 : index
    %184 = vector.load %arg5[%c8_85, %c0_86, %c0_87] : memref<25x10x8xf32, #tpu.memory_space<vmem>>, vector<1x10x8xf32>
    %185 = vector.shape_cast %184 : vector<1x10x8xf32> to vector<10x8xf32>
    %186 = vector.shape_cast %176 : vector<10x8xf32> to vector<1x10x8xf32>
    tpu.vector_store %arg5[%c8_85, %c0_86, %c0_87], %186 {strides = array<i32>} : memref<25x10x8xf32, #tpu.memory_space<vmem>>, vector<1x10x8xf32>,
    %cst_88 = arith.constant 1.000000e+00 : f32
    %187 = vector.broadcast %cst_88 : f32 to vector<10x8xf32>
    %188 = arith.cmpf ogt, %176, %187 : vector<10x8xf32>
    %189 = arith.extui %188 : vector<10x8xi1> to vector<10x8xi32>
    %190 = arith.sitofp %189 : vector<10x8xi32> to vector<10x8xf32>
    %cst_89 = arith.constant 0.949999988 : f32
    %191 = vector.broadcast %cst_89 : f32 to vector<10x8xf32>
    %192 = arith.mulf %191, %176 : vector<10x8xf32>
    %193 = arith.addf %192, %5 : vector<10x8xf32>
    %cst_90 = arith.constant 1.000000e+00 : f32
    %194 = vector.broadcast %cst_90 : f32 to vector<10x8xf32>
    %195 = arith.mulf %190, %194 : vector<10x8xf32>
    %196 = arith.subf %193, %195 : vector<10x8xf32>
    %cst_91 = arith.constant 1.000000e+00 : f32
    %197 = vector.broadcast %cst_91 : f32 to vector<10x8xf32>
    %198 = arith.cmpf ogt, %196, %197 : vector<10x8xf32>
    %199 = arith.extui %198 : vector<10x8xi1> to vector<10x8xi32>
    %200 = arith.sitofp %199 : vector<10x8xi32> to vector<10x8xf32>
    %c9 = arith.constant 9 : index
    %c0_92 = arith.constant 0 : index
    %c0_93 = arith.constant 0 : index
    %201 = vector.load %arg4[%c9, %c0_92, %c0_93] : memref<25x10x8xf32, #tpu.memory_space<vmem>>, vector<1x10x8xf32>
    %202 = vector.shape_cast %201 : vector<1x10x8xf32> to vector<10x8xf32>
    %203 = vector.shape_cast %200 : vector<10x8xf32> to vector<1x10x8xf32>
    tpu.vector_store %arg4[%c9, %c0_92, %c0_93], %203 {strides = array<i32>} : memref<25x10x8xf32, #tpu.memory_space<vmem>>, vector<1x10x8xf32>,
    %c9_94 = arith.constant 9 : index
    %c0_95 = arith.constant 0 : index
    %c0_96 = arith.constant 0 : index
    %204 = vector.load %arg5[%c9_94, %c0_95, %c0_96] : memref<25x10x8xf32, #tpu.memory_space<vmem>>, vector<1x10x8xf32>
    %205 = vector.shape_cast %204 : vector<1x10x8xf32> to vector<10x8xf32>
    %206 = vector.shape_cast %196 : vector<10x8xf32> to vector<1x10x8xf32>
    tpu.vector_store %arg5[%c9_94, %c0_95, %c0_96], %206 {strides = array<i32>} : memref<25x10x8xf32, #tpu.memory_space<vmem>>, vector<1x10x8xf32>,
    %cst_97 = arith.constant 1.000000e+00 : f32
    %207 = vector.broadcast %cst_97 : f32 to vector<10x8xf32>
    %208 = arith.cmpf ogt, %196, %207 : vector<10x8xf32>
    %209 = arith.extui %208 : vector<10x8xi1> to vector<10x8xi32>
    %210 = arith.sitofp %209 : vector<10x8xi32> to vector<10x8xf32>
    %cst_98 = arith.constant 0.949999988 : f32
    %211 = vector.broadcast %cst_98 : f32 to vector<10x8xf32>
    %212 = arith.mulf %211, %196 : vector<10x8xf32>
    %213 = arith.addf %212, %5 : vector<10x8xf32>
    %cst_99 = arith.constant 1.000000e+00 : f32
    %214 = vector.broadcast %cst_99 : f32 to vector<10x8xf32>
    %215 = arith.mulf %210, %214 : vector<10x8xf32>
    %216 = arith.subf %213, %215 : vector<10x8xf32>
    %cst_100 = arith.constant 1.000000e+00 : f32
    %217 = vector.broadcast %cst_100 : f32 to vector<10x8xf32>
    %218 = arith.cmpf ogt, %216, %217 : vector<10x8xf32>
    %219 = arith.extui %218 : vector<10x8xi1> to vector<10x8xi32>
    %220 = arith.sitofp %219 : vector<10x8xi32> to vector<10x8xf32>
    %c10 = arith.constant 10 : index
    %c0_101 = arith.constant 0 : index
    %c0_102 = arith.constant 0 : index
    %221 = vector.load %arg4[%c10, %c0_101, %c0_102] : memref<25x10x8xf32, #tpu.memory_space<vmem>>, vector<1x10x8xf32>
    %222 = vector.shape_cast %221 : vector<1x10x8xf32> to vector<10x8xf32>
    %223 = vector.shape_cast %220 : vector<10x8xf32> to vector<1x10x8xf32>
    tpu.vector_store %arg4[%c10, %c0_101, %c0_102], %223 {strides = array<i32>} : memref<25x10x8xf32, #tpu.memory_space<vmem>>, vector<1x10x8xf32>,
    %c10_103 = arith.constant 10 : index
    %c0_104 = arith.constant 0 : index
    %c0_105 = arith.constant 0 : index
    %224 = vector.load %arg5[%c10_103, %c0_104, %c0_105] : memref<25x10x8xf32, #tpu.memory_space<vmem>>, vector<1x10x8xf32>
    %225 = vector.shape_cast %224 : vector<1x10x8xf32> to vector<10x8xf32>
    %226 = vector.shape_cast %216 : vector<10x8xf32> to vector<1x10x8xf32>
    tpu.vector_store %arg5[%c10_103, %c0_104, %c0_105], %226 {strides = array<i32>} : memref<25x10x8xf32, #tpu.memory_space<vmem>>, vector<1x10x8xf32>,
    %cst_106 = arith.constant 1.000000e+00 : f32
    %227 = vector.broadcast %cst_106 : f32 to vector<10x8xf32>
    %228 = arith.cmpf ogt, %216, %227 : vector<10x8xf32>
    %229 = arith.extui %228 : vector<10x8xi1> to vector<10x8xi32>
    %230 = arith.sitofp %229 : vector<10x8xi32> to vector<10x8xf32>
    %cst_107 = arith.constant 0.949999988 : f32
    %231 = vector.broadcast %cst_107 : f32 to vector<10x8xf32>
    %232 = arith.mulf %231, %216 : vector<10x8xf32>
    %233 = arith.addf %232, %5 : vector<10x8xf32>
    %cst_108 = arith.constant 1.000000e+00 : f32
    %234 = vector.broadcast %cst_108 : f32 to vector<10x8xf32>
    %235 = arith.mulf %230, %234 : vector<10x8xf32>
    %236 = arith.subf %233, %235 : vector<10x8xf32>
    %cst_109 = arith.constant 1.000000e+00 : f32
    %237 = vector.broadcast %cst_109 : f32 to vector<10x8xf32>
    %238 = arith.cmpf ogt, %236, %237 : vector<10x8xf32>
    %239 = arith.extui %238 : vector<10x8xi1> to vector<10x8xi32>
    %240 = arith.sitofp %239 : vector<10x8xi32> to vector<10x8xf32>
    %c11 = arith.constant 11 : index
    %c0_110 = arith.constant 0 : index
    %c0_111 = arith.constant 0 : index
    %241 = vector.load %arg4[%c11, %c0_110, %c0_111] : memref<25x10x8xf32, #tpu.memory_space<vmem>>, vector<1x10x8xf32>
    %242 = vector.shape_cast %241 : vector<1x10x8xf32> to vector<10x8xf32>
    %243 = vector.shape_cast %240 : vector<10x8xf32> to vector<1x10x8xf32>
    tpu.vector_store %arg4[%c11, %c0_110, %c0_111], %243 {strides = array<i32>} : memref<25x10x8xf32, #tpu.memory_space<vmem>>, vector<1x10x8xf32>,
    %c11_112 = arith.constant 11 : index
    %c0_113 = arith.constant 0 : index
    %c0_114 = arith.constant 0 : index
    %244 = vector.load %arg5[%c11_112, %c0_113, %c0_114] : memref<25x10x8xf32, #tpu.memory_space<vmem>>, vector<1x10x8xf32>
    %245 = vector.shape_cast %244 : vector<1x10x8xf32> to vector<10x8xf32>
    %246 = vector.shape_cast %236 : vector<10x8xf32> to vector<1x10x8xf32>
    tpu.vector_store %arg5[%c11_112, %c0_113, %c0_114], %246 {strides = array<i32>} : memref<25x10x8xf32, #tpu.memory_space<vmem>>, vector<1x10x8xf32>,
    %cst_115 = arith.constant 1.000000e+00 : f32
    %247 = vector.broadcast %cst_115 : f32 to vector<10x8xf32>
    %248 = arith.cmpf ogt, %236, %247 : vector<10x8xf32>
    %249 = arith.extui %248 : vector<10x8xi1> to vector<10x8xi32>
    %250 = arith.sitofp %249 : vector<10x8xi32> to vector<10x8xf32>
    %cst_116 = arith.constant 0.949999988 : f32
    %251 = vector.broadcast %cst_116 : f32 to vector<10x8xf32>
    %252 = arith.mulf %251, %236 : vector<10x8xf32>
    %253 = arith.addf %252, %5 : vector<10x8xf32>
    %cst_117 = arith.constant 1.000000e+00 : f32
    %254 = vector.broadcast %cst_117 : f32 to vector<10x8xf32>
    %255 = arith.mulf %250, %254 : vector<10x8xf32>
    %256 = arith.subf %253, %255 : vector<10x8xf32>
    %cst_118 = arith.constant 1.000000e+00 : f32
    %257 = vector.broadcast %cst_118 : f32 to vector<10x8xf32>
    %258 = arith.cmpf ogt, %256, %257 : vector<10x8xf32>
    %259 = arith.extui %258 : vector<10x8xi1> to vector<10x8xi32>
    %260 = arith.sitofp %259 : vector<10x8xi32> to vector<10x8xf32>
    %c12 = arith.constant 12 : index
    %c0_119 = arith.constant 0 : index
    %c0_120 = arith.constant 0 : index
    %261 = vector.load %arg4[%c12, %c0_119, %c0_120] : memref<25x10x8xf32, #tpu.memory_space<vmem>>, vector<1x10x8xf32>
    %262 = vector.shape_cast %261 : vector<1x10x8xf32> to vector<10x8xf32>
    %263 = vector.shape_cast %260 : vector<10x8xf32> to vector<1x10x8xf32>
    tpu.vector_store %arg4[%c12, %c0_119, %c0_120], %263 {strides = array<i32>} : memref<25x10x8xf32, #tpu.memory_space<vmem>>, vector<1x10x8xf32>,
    %c12_121 = arith.constant 12 : index
    %c0_122 = arith.constant 0 : index
    %c0_123 = arith.constant 0 : index
    %264 = vector.load %arg5[%c12_121, %c0_122, %c0_123] : memref<25x10x8xf32, #tpu.memory_space<vmem>>, vector<1x10x8xf32>
    %265 = vector.shape_cast %264 : vector<1x10x8xf32> to vector<10x8xf32>
    %266 = vector.shape_cast %256 : vector<10x8xf32> to vector<1x10x8xf32>
    tpu.vector_store %arg5[%c12_121, %c0_122, %c0_123], %266 {strides = array<i32>} : memref<25x10x8xf32, #tpu.memory_space<vmem>>, vector<1x10x8xf32>,
    %cst_124 = arith.constant 1.000000e+00 : f32
    %267 = vector.broadcast %cst_124 : f32 to vector<10x8xf32>
    %268 = arith.cmpf ogt, %256, %267 : vector<10x8xf32>
    %269 = arith.extui %268 : vector<10x8xi1> to vector<10x8xi32>
    %270 = arith.sitofp %269 : vector<10x8xi32> to vector<10x8xf32>
    %cst_125 = arith.constant 0.949999988 : f32
    %271 = vector.broadcast %cst_125 : f32 to vector<10x8xf32>
    %272 = arith.mulf %271, %256 : vector<10x8xf32>
    %273 = arith.addf %272, %5 : vector<10x8xf32>
    %cst_126 = arith.constant 1.000000e+00 : f32
    %274 = vector.broadcast %cst_126 : f32 to vector<10x8xf32>
    %275 = arith.mulf %270, %274 : vector<10x8xf32>
    %276 = arith.subf %273, %275 : vector<10x8xf32>
    %cst_127 = arith.constant 1.000000e+00 : f32
    %277 = vector.broadcast %cst_127 : f32 to vector<10x8xf32>
    %278 = arith.cmpf ogt, %276, %277 : vector<10x8xf32>
    %279 = arith.extui %278 : vector<10x8xi1> to vector<10x8xi32>
    %280 = arith.sitofp %279 : vector<10x8xi32> to vector<10x8xf32>
    %c13 = arith.constant 13 : index
    %c0_128 = arith.constant 0 : index
    %c0_129 = arith.constant 0 : index
    %281 = vector.load %arg4[%c13, %c0_128, %c0_129] : memref<25x10x8xf32, #tpu.memory_space<vmem>>, vector<1x10x8xf32>
    %282 = vector.shape_cast %281 : vector<1x10x8xf32> to vector<10x8xf32>
    %283 = vector.shape_cast %280 : vector<10x8xf32> to vector<1x10x8xf32>
    tpu.vector_store %arg4[%c13, %c0_128, %c0_129], %283 {strides = array<i32>} : memref<25x10x8xf32, #tpu.memory_space<vmem>>, vector<1x10x8xf32>,
    %c13_130 = arith.constant 13 : index
    %c0_131 = arith.constant 0 : index
    %c0_132 = arith.constant 0 : index
    %284 = vector.load %arg5[%c13_130, %c0_131, %c0_132] : memref<25x10x8xf32, #tpu.memory_space<vmem>>, vector<1x10x8xf32>
    %285 = vector.shape_cast %284 : vector<1x10x8xf32> to vector<10x8xf32>
    %286 = vector.shape_cast %276 : vector<10x8xf32> to vector<1x10x8xf32>
    tpu.vector_store %arg5[%c13_130, %c0_131, %c0_132], %286 {strides = array<i32>} : memref<25x10x8xf32, #tpu.memory_space<vmem>>, vector<1x10x8xf32>,
    %cst_133 = arith.constant 1.000000e+00 : f32
    %287 = vector.broadcast %cst_133 : f32 to vector<10x8xf32>
    %288 = arith.cmpf ogt, %276, %287 : vector<10x8xf32>
    %289 = arith.extui %288 : vector<10x8xi1> to vector<10x8xi32>
    %290 = arith.sitofp %289 : vector<10x8xi32> to vector<10x8xf32>
    %cst_134 = arith.constant 0.949999988 : f32
    %291 = vector.broadcast %cst_134 : f32 to vector<10x8xf32>
    %292 = arith.mulf %291, %276 : vector<10x8xf32>
    %293 = arith.addf %292, %5 : vector<10x8xf32>
    %cst_135 = arith.constant 1.000000e+00 : f32
    %294 = vector.broadcast %cst_135 : f32 to vector<10x8xf32>
    %295 = arith.mulf %290, %294 : vector<10x8xf32>
    %296 = arith.subf %293, %295 : vector<10x8xf32>
    %cst_136 = arith.constant 1.000000e+00 : f32
    %297 = vector.broadcast %cst_136 : f32 to vector<10x8xf32>
    %298 = arith.cmpf ogt, %296, %297 : vector<10x8xf32>
    %299 = arith.extui %298 : vector<10x8xi1> to vector<10x8xi32>
    %300 = arith.sitofp %299 : vector<10x8xi32> to vector<10x8xf32>
    %c14 = arith.constant 14 : index
    %c0_137 = arith.constant 0 : index
    %c0_138 = arith.constant 0 : index
    %301 = vector.load %arg4[%c14, %c0_137, %c0_138] : memref<25x10x8xf32, #tpu.memory_space<vmem>>, vector<1x10x8xf32>
    %302 = vector.shape_cast %301 : vector<1x10x8xf32> to vector<10x8xf32>
    %303 = vector.shape_cast %300 : vector<10x8xf32> to vector<1x10x8xf32>
    tpu.vector_store %arg4[%c14, %c0_137, %c0_138], %303 {strides = array<i32>} : memref<25x10x8xf32, #tpu.memory_space<vmem>>, vector<1x10x8xf32>,
    %c14_139 = arith.constant 14 : index
    %c0_140 = arith.constant 0 : index
    %c0_141 = arith.constant 0 : index
    %304 = vector.load %arg5[%c14_139, %c0_140, %c0_141] : memref<25x10x8xf32, #tpu.memory_space<vmem>>, vector<1x10x8xf32>
    %305 = vector.shape_cast %304 : vector<1x10x8xf32> to vector<10x8xf32>
    %306 = vector.shape_cast %296 : vector<10x8xf32> to vector<1x10x8xf32>
    tpu.vector_store %arg5[%c14_139, %c0_140, %c0_141], %306 {strides = array<i32>} : memref<25x10x8xf32, #tpu.memory_space<vmem>>, vector<1x10x8xf32>,
    %cst_142 = arith.constant 1.000000e+00 : f32
    %307 = vector.broadcast %cst_142 : f32 to vector<10x8xf32>
    %308 = arith.cmpf ogt, %296, %307 : vector<10x8xf32>
    %309 = arith.extui %308 : vector<10x8xi1> to vector<10x8xi32>
    %310 = arith.sitofp %309 : vector<10x8xi32> to vector<10x8xf32>
    %cst_143 = arith.constant 0.949999988 : f32
    %311 = vector.broadcast %cst_143 : f32 to vector<10x8xf32>
    %312 = arith.mulf %311, %296 : vector<10x8xf32>
    %313 = arith.addf %312, %5 : vector<10x8xf32>
    %cst_144 = arith.constant 1.000000e+00 : f32
    %314 = vector.broadcast %cst_144 : f32 to vector<10x8xf32>
    %315 = arith.mulf %310, %314 : vector<10x8xf32>
    %316 = arith.subf %313, %315 : vector<10x8xf32>
    %cst_145 = arith.constant 1.000000e+00 : f32
    %317 = vector.broadcast %cst_145 : f32 to vector<10x8xf32>
    %318 = arith.cmpf ogt, %316, %317 : vector<10x8xf32>
    %319 = arith.extui %318 : vector<10x8xi1> to vector<10x8xi32>
    %320 = arith.sitofp %319 : vector<10x8xi32> to vector<10x8xf32>
    %c15 = arith.constant 15 : index
    %c0_146 = arith.constant 0 : index
    %c0_147 = arith.constant 0 : index
    %321 = vector.load %arg4[%c15, %c0_146, %c0_147] : memref<25x10x8xf32, #tpu.memory_space<vmem>>, vector<1x10x8xf32>
    %322 = vector.shape_cast %321 : vector<1x10x8xf32> to vector<10x8xf32>
    %323 = vector.shape_cast %320 : vector<10x8xf32> to vector<1x10x8xf32>
    tpu.vector_store %arg4[%c15, %c0_146, %c0_147], %323 {strides = array<i32>} : memref<25x10x8xf32, #tpu.memory_space<vmem>>, vector<1x10x8xf32>,
    %c15_148 = arith.constant 15 : index
    %c0_149 = arith.constant 0 : index
    %c0_150 = arith.constant 0 : index
    %324 = vector.load %arg5[%c15_148, %c0_149, %c0_150] : memref<25x10x8xf32, #tpu.memory_space<vmem>>, vector<1x10x8xf32>
    %325 = vector.shape_cast %324 : vector<1x10x8xf32> to vector<10x8xf32>
    %326 = vector.shape_cast %316 : vector<10x8xf32> to vector<1x10x8xf32>
    tpu.vector_store %arg5[%c15_148, %c0_149, %c0_150], %326 {strides = array<i32>} : memref<25x10x8xf32, #tpu.memory_space<vmem>>, vector<1x10x8xf32>,
    %cst_151 = arith.constant 1.000000e+00 : f32
    %327 = vector.broadcast %cst_151 : f32 to vector<10x8xf32>
    %328 = arith.cmpf ogt, %316, %327 : vector<10x8xf32>
    %329 = arith.extui %328 : vector<10x8xi1> to vector<10x8xi32>
    %330 = arith.sitofp %329 : vector<10x8xi32> to vector<10x8xf32>
    %cst_152 = arith.constant 0.949999988 : f32
    %331 = vector.broadcast %cst_152 : f32 to vector<10x8xf32>
    %332 = arith.mulf %331, %316 : vector<10x8xf32>
    %333 = arith.addf %332, %5 : vector<10x8xf32>
    %cst_153 = arith.constant 1.000000e+00 : f32
    %334 = vector.broadcast %cst_153 : f32 to vector<10x8xf32>
    %335 = arith.mulf %330, %334 : vector<10x8xf32>
    %336 = arith.subf %333, %335 : vector<10x8xf32>
    %cst_154 = arith.constant 1.000000e+00 : f32
    %337 = vector.broadcast %cst_154 : f32 to vector<10x8xf32>
    %338 = arith.cmpf ogt, %336, %337 : vector<10x8xf32>
    %339 = arith.extui %338 : vector<10x8xi1> to vector<10x8xi32>
    %340 = arith.sitofp %339 : vector<10x8xi32> to vector<10x8xf32>
    %c16 = arith.constant 16 : index
    %c0_155 = arith.constant 0 : index
    %c0_156 = arith.constant 0 : index
    %341 = vector.load %arg4[%c16, %c0_155, %c0_156] : memref<25x10x8xf32, #tpu.memory_space<vmem>>, vector<1x10x8xf32>
    %342 = vector.shape_cast %341 : vector<1x10x8xf32> to vector<10x8xf32>
    %343 = vector.shape_cast %340 : vector<10x8xf32> to vector<1x10x8xf32>
    tpu.vector_store %arg4[%c16, %c0_155, %c0_156], %343 {strides = array<i32>} : memref<25x10x8xf32, #tpu.memory_space<vmem>>, vector<1x10x8xf32>,
    %c16_157 = arith.constant 16 : index
    %c0_158 = arith.constant 0 : index
    %c0_159 = arith.constant 0 : index
    %344 = vector.load %arg5[%c16_157, %c0_158, %c0_159] : memref<25x10x8xf32, #tpu.memory_space<vmem>>, vector<1x10x8xf32>
    %345 = vector.shape_cast %344 : vector<1x10x8xf32> to vector<10x8xf32>
    %346 = vector.shape_cast %336 : vector<10x8xf32> to vector<1x10x8xf32>
    tpu.vector_store %arg5[%c16_157, %c0_158, %c0_159], %346 {strides = array<i32>} : memref<25x10x8xf32, #tpu.memory_space<vmem>>, vector<1x10x8xf32>,
    %cst_160 = arith.constant 1.000000e+00 : f32
    %347 = vector.broadcast %cst_160 : f32 to vector<10x8xf32>
    %348 = arith.cmpf ogt, %336, %347 : vector<10x8xf32>
    %349 = arith.extui %348 : vector<10x8xi1> to vector<10x8xi32>
    %350 = arith.sitofp %349 : vector<10x8xi32> to vector<10x8xf32>
    %cst_161 = arith.constant 0.949999988 : f32
    %351 = vector.broadcast %cst_161 : f32 to vector<10x8xf32>
    %352 = arith.mulf %351, %336 : vector<10x8xf32>
    %353 = arith.addf %352, %5 : vector<10x8xf32>
    %cst_162 = arith.constant 1.000000e+00 : f32
    %354 = vector.broadcast %cst_162 : f32 to vector<10x8xf32>
    %355 = arith.mulf %350, %354 : vector<10x8xf32>
    %356 = arith.subf %353, %355 : vector<10x8xf32>
    %cst_163 = arith.constant 1.000000e+00 : f32
    %357 = vector.broadcast %cst_163 : f32 to vector<10x8xf32>
    %358 = arith.cmpf ogt, %356, %357 : vector<10x8xf32>
    %359 = arith.extui %358 : vector<10x8xi1> to vector<10x8xi32>
    %360 = arith.sitofp %359 : vector<10x8xi32> to vector<10x8xf32>
    %c17 = arith.constant 17 : index
    %c0_164 = arith.constant 0 : index
    %c0_165 = arith.constant 0 : index
    %361 = vector.load %arg4[%c17, %c0_164, %c0_165] : memref<25x10x8xf32, #tpu.memory_space<vmem>>, vector<1x10x8xf32>
    %362 = vector.shape_cast %361 : vector<1x10x8xf32> to vector<10x8xf32>
    %363 = vector.shape_cast %360 : vector<10x8xf32> to vector<1x10x8xf32>
    tpu.vector_store %arg4[%c17, %c0_164, %c0_165], %363 {strides = array<i32>} : memref<25x10x8xf32, #tpu.memory_space<vmem>>, vector<1x10x8xf32>,
    %c17_166 = arith.constant 17 : index
    %c0_167 = arith.constant 0 : index
    %c0_168 = arith.constant 0 : index
    %364 = vector.load %arg5[%c17_166, %c0_167, %c0_168] : memref<25x10x8xf32, #tpu.memory_space<vmem>>, vector<1x10x8xf32>
    %365 = vector.shape_cast %364 : vector<1x10x8xf32> to vector<10x8xf32>
    %366 = vector.shape_cast %356 : vector<10x8xf32> to vector<1x10x8xf32>
    tpu.vector_store %arg5[%c17_166, %c0_167, %c0_168], %366 {strides = array<i32>} : memref<25x10x8xf32, #tpu.memory_space<vmem>>, vector<1x10x8xf32>,
    %cst_169 = arith.constant 1.000000e+00 : f32
    %367 = vector.broadcast %cst_169 : f32 to vector<10x8xf32>
    %368 = arith.cmpf ogt, %356, %367 : vector<10x8xf32>
    %369 = arith.extui %368 : vector<10x8xi1> to vector<10x8xi32>
    %370 = arith.sitofp %369 : vector<10x8xi32> to vector<10x8xf32>
    %cst_170 = arith.constant 0.949999988 : f32
    %371 = vector.broadcast %cst_170 : f32 to vector<10x8xf32>
    %372 = arith.mulf %371, %356 : vector<10x8xf32>
    %373 = arith.addf %372, %5 : vector<10x8xf32>
    %cst_171 = arith.constant 1.000000e+00 : f32
    %374 = vector.broadcast %cst_171 : f32 to vector<10x8xf32>
    %375 = arith.mulf %370, %374 : vector<10x8xf32>
    %376 = arith.subf %373, %375 : vector<10x8xf32>
    %cst_172 = arith.constant 1.000000e+00 : f32
    %377 = vector.broadcast %cst_172 : f32 to vector<10x8xf32>
    %378 = arith.cmpf ogt, %376, %377 : vector<10x8xf32>
    %379 = arith.extui %378 : vector<10x8xi1> to vector<10x8xi32>
    %380 = arith.sitofp %379 : vector<10x8xi32> to vector<10x8xf32>
    %c18 = arith.constant 18 : index
    %c0_173 = arith.constant 0 : index
    %c0_174 = arith.constant 0 : index
    %381 = vector.load %arg4[%c18, %c0_173, %c0_174] : memref<25x10x8xf32, #tpu.memory_space<vmem>>, vector<1x10x8xf32>
    %382 = vector.shape_cast %381 : vector<1x10x8xf32> to vector<10x8xf32>
    %383 = vector.shape_cast %380 : vector<10x8xf32> to vector<1x10x8xf32>
    tpu.vector_store %arg4[%c18, %c0_173, %c0_174], %383 {strides = array<i32>} : memref<25x10x8xf32, #tpu.memory_space<vmem>>, vector<1x10x8xf32>,
    %c18_175 = arith.constant 18 : index
    %c0_176 = arith.constant 0 : index
    %c0_177 = arith.constant 0 : index
    %384 = vector.load %arg5[%c18_175, %c0_176, %c0_177] : memref<25x10x8xf32, #tpu.memory_space<vmem>>, vector<1x10x8xf32>
    %385 = vector.shape_cast %384 : vector<1x10x8xf32> to vector<10x8xf32>
    %386 = vector.shape_cast %376 : vector<10x8xf32> to vector<1x10x8xf32>
    tpu.vector_store %arg5[%c18_175, %c0_176, %c0_177], %386 {strides = array<i32>} : memref<25x10x8xf32, #tpu.memory_space<vmem>>, vector<1x10x8xf32>,
    %cst_178 = arith.constant 1.000000e+00 : f32
    %387 = vector.broadcast %cst_178 : f32 to vector<10x8xf32>
    %388 = arith.cmpf ogt, %376, %387 : vector<10x8xf32>
    %389 = arith.extui %388 : vector<10x8xi1> to vector<10x8xi32>
    %390 = arith.sitofp %389 : vector<10x8xi32> to vector<10x8xf32>
    %cst_179 = arith.constant 0.949999988 : f32
    %391 = vector.broadcast %cst_179 : f32 to vector<10x8xf32>
    %392 = arith.mulf %391, %376 : vector<10x8xf32>
    %393 = arith.addf %392, %5 : vector<10x8xf32>
    %cst_180 = arith.constant 1.000000e+00 : f32
    %394 = vector.broadcast %cst_180 : f32 to vector<10x8xf32>
    %395 = arith.mulf %390, %394 : vector<10x8xf32>
    %396 = arith.subf %393, %395 : vector<10x8xf32>
    %cst_181 = arith.constant 1.000000e+00 : f32
    %397 = vector.broadcast %cst_181 : f32 to vector<10x8xf32>
    %398 = arith.cmpf ogt, %396, %397 : vector<10x8xf32>
    %399 = arith.extui %398 : vector<10x8xi1> to vector<10x8xi32>
    %400 = arith.sitofp %399 : vector<10x8xi32> to vector<10x8xf32>
    %c19 = arith.constant 19 : index
    %c0_182 = arith.constant 0 : index
    %c0_183 = arith.constant 0 : index
    %401 = vector.load %arg4[%c19, %c0_182, %c0_183] : memref<25x10x8xf32, #tpu.memory_space<vmem>>, vector<1x10x8xf32>
    %402 = vector.shape_cast %401 : vector<1x10x8xf32> to vector<10x8xf32>
    %403 = vector.shape_cast %400 : vector<10x8xf32> to vector<1x10x8xf32>
    tpu.vector_store %arg4[%c19, %c0_182, %c0_183], %403 {strides = array<i32>} : memref<25x10x8xf32, #tpu.memory_space<vmem>>, vector<1x10x8xf32>,
    %c19_184 = arith.constant 19 : index
    %c0_185 = arith.constant 0 : index
    %c0_186 = arith.constant 0 : index
    %404 = vector.load %arg5[%c19_184, %c0_185, %c0_186] : memref<25x10x8xf32, #tpu.memory_space<vmem>>, vector<1x10x8xf32>
    %405 = vector.shape_cast %404 : vector<1x10x8xf32> to vector<10x8xf32>
    %406 = vector.shape_cast %396 : vector<10x8xf32> to vector<1x10x8xf32>
    tpu.vector_store %arg5[%c19_184, %c0_185, %c0_186], %406 {strides = array<i32>} : memref<25x10x8xf32, #tpu.memory_space<vmem>>, vector<1x10x8xf32>,
    %cst_187 = arith.constant 1.000000e+00 : f32
    %407 = vector.broadcast %cst_187 : f32 to vector<10x8xf32>
    %408 = arith.cmpf ogt, %396, %407 : vector<10x8xf32>
    %409 = arith.extui %408 : vector<10x8xi1> to vector<10x8xi32>
    %410 = arith.sitofp %409 : vector<10x8xi32> to vector<10x8xf32>
    %cst_188 = arith.constant 0.949999988 : f32
    %411 = vector.broadcast %cst_188 : f32 to vector<10x8xf32>
    %412 = arith.mulf %411, %396 : vector<10x8xf32>
    %413 = arith.addf %412, %5 : vector<10x8xf32>
    %cst_189 = arith.constant 1.000000e+00 : f32
    %414 = vector.broadcast %cst_189 : f32 to vector<10x8xf32>
    %415 = arith.mulf %410, %414 : vector<10x8xf32>
    %416 = arith.subf %413, %415 : vector<10x8xf32>
    %cst_190 = arith.constant 1.000000e+00 : f32
    %417 = vector.broadcast %cst_190 : f32 to vector<10x8xf32>
    %418 = arith.cmpf ogt, %416, %417 : vector<10x8xf32>
    %419 = arith.extui %418 : vector<10x8xi1> to vector<10x8xi32>
    %420 = arith.sitofp %419 : vector<10x8xi32> to vector<10x8xf32>
    %c20 = arith.constant 20 : index
    %c0_191 = arith.constant 0 : index
    %c0_192 = arith.constant 0 : index
    %421 = vector.load %arg4[%c20, %c0_191, %c0_192] : memref<25x10x8xf32, #tpu.memory_space<vmem>>, vector<1x10x8xf32>
    %422 = vector.shape_cast %421 : vector<1x10x8xf32> to vector<10x8xf32>
    %423 = vector.shape_cast %420 : vector<10x8xf32> to vector<1x10x8xf32>
    tpu.vector_store %arg4[%c20, %c0_191, %c0_192], %423 {strides = array<i32>} : memref<25x10x8xf32, #tpu.memory_space<vmem>>, vector<1x10x8xf32>,
    %c20_193 = arith.constant 20 : index
    %c0_194 = arith.constant 0 : index
    %c0_195 = arith.constant 0 : index
    %424 = vector.load %arg5[%c20_193, %c0_194, %c0_195] : memref<25x10x8xf32, #tpu.memory_space<vmem>>, vector<1x10x8xf32>
    %425 = vector.shape_cast %424 : vector<1x10x8xf32> to vector<10x8xf32>
    %426 = vector.shape_cast %416 : vector<10x8xf32> to vector<1x10x8xf32>
    tpu.vector_store %arg5[%c20_193, %c0_194, %c0_195], %426 {strides = array<i32>} : memref<25x10x8xf32, #tpu.memory_space<vmem>>, vector<1x10x8xf32>,
    %cst_196 = arith.constant 1.000000e+00 : f32
    %427 = vector.broadcast %cst_196 : f32 to vector<10x8xf32>
    %428 = arith.cmpf ogt, %416, %427 : vector<10x8xf32>
    %429 = arith.extui %428 : vector<10x8xi1> to vector<10x8xi32>
    %430 = arith.sitofp %429 : vector<10x8xi32> to vector<10x8xf32>
    %cst_197 = arith.constant 0.949999988 : f32
    %431 = vector.broadcast %cst_197 : f32 to vector<10x8xf32>
    %432 = arith.mulf %431, %416 : vector<10x8xf32>
    %433 = arith.addf %432, %5 : vector<10x8xf32>
    %cst_198 = arith.constant 1.000000e+00 : f32
    %434 = vector.broadcast %cst_198 : f32 to vector<10x8xf32>
    %435 = arith.mulf %430, %434 : vector<10x8xf32>
    %436 = arith.subf %433, %435 : vector<10x8xf32>
    %cst_199 = arith.constant 1.000000e+00 : f32
    %437 = vector.broadcast %cst_199 : f32 to vector<10x8xf32>
    %438 = arith.cmpf ogt, %436, %437 : vector<10x8xf32>
    %439 = arith.extui %438 : vector<10x8xi1> to vector<10x8xi32>
    %440 = arith.sitofp %439 : vector<10x8xi32> to vector<10x8xf32>
    %c21 = arith.constant 21 : index
    %c0_200 = arith.constant 0 : index
    %c0_201 = arith.constant 0 : index
    %441 = vector.load %arg4[%c21, %c0_200, %c0_201] : memref<25x10x8xf32, #tpu.memory_space<vmem>>, vector<1x10x8xf32>
    %442 = vector.shape_cast %441 : vector<1x10x8xf32> to vector<10x8xf32>
    %443 = vector.shape_cast %440 : vector<10x8xf32> to vector<1x10x8xf32>
    tpu.vector_store %arg4[%c21, %c0_200, %c0_201], %443 {strides = array<i32>} : memref<25x10x8xf32, #tpu.memory_space<vmem>>, vector<1x10x8xf32>,
    %c21_202 = arith.constant 21 : index
    %c0_203 = arith.constant 0 : index
    %c0_204 = arith.constant 0 : index
    %444 = vector.load %arg5[%c21_202, %c0_203, %c0_204] : memref<25x10x8xf32, #tpu.memory_space<vmem>>, vector<1x10x8xf32>
    %445 = vector.shape_cast %444 : vector<1x10x8xf32> to vector<10x8xf32>
    %446 = vector.shape_cast %436 : vector<10x8xf32> to vector<1x10x8xf32>
    tpu.vector_store %arg5[%c21_202, %c0_203, %c0_204], %446 {strides = array<i32>} : memref<25x10x8xf32, #tpu.memory_space<vmem>>, vector<1x10x8xf32>,
    %cst_205 = arith.constant 1.000000e+00 : f32
    %447 = vector.broadcast %cst_205 : f32 to vector<10x8xf32>
    %448 = arith.cmpf ogt, %436, %447 : vector<10x8xf32>
    %449 = arith.extui %448 : vector<10x8xi1> to vector<10x8xi32>
    %450 = arith.sitofp %449 : vector<10x8xi32> to vector<10x8xf32>
    %cst_206 = arith.constant 0.949999988 : f32
    %451 = vector.broadcast %cst_206 : f32 to vector<10x8xf32>
    %452 = arith.mulf %451, %436 : vector<10x8xf32>
    %453 = arith.addf %452, %5 : vector<10x8xf32>
    %cst_207 = arith.constant 1.000000e+00 : f32
    %454 = vector.broadcast %cst_207 : f32 to vector<10x8xf32>
    %455 = arith.mulf %450, %454 : vector<10x8xf32>
    %456 = arith.subf %453, %455 : vector<10x8xf32>
    %cst_208 = arith.constant 1.000000e+00 : f32
    %457 = vector.broadcast %cst_208 : f32 to vector<10x8xf32>
    %458 = arith.cmpf ogt, %456, %457 : vector<10x8xf32>
    %459 = arith.extui %458 : vector<10x8xi1> to vector<10x8xi32>
    %460 = arith.sitofp %459 : vector<10x8xi32> to vector<10x8xf32>
    %c22 = arith.constant 22 : index
    %c0_209 = arith.constant 0 : index
    %c0_210 = arith.constant 0 : index
    %461 = vector.load %arg4[%c22, %c0_209, %c0_210] : memref<25x10x8xf32, #tpu.memory_space<vmem>>, vector<1x10x8xf32>
    %462 = vector.shape_cast %461 : vector<1x10x8xf32> to vector<10x8xf32>
    %463 = vector.shape_cast %460 : vector<10x8xf32> to vector<1x10x8xf32>
    tpu.vector_store %arg4[%c22, %c0_209, %c0_210], %463 {strides = array<i32>} : memref<25x10x8xf32, #tpu.memory_space<vmem>>, vector<1x10x8xf32>,
    %c22_211 = arith.constant 22 : index
    %c0_212 = arith.constant 0 : index
    %c0_213 = arith.constant 0 : index
    %464 = vector.load %arg5[%c22_211, %c0_212, %c0_213] : memref<25x10x8xf32, #tpu.memory_space<vmem>>, vector<1x10x8xf32>
    %465 = vector.shape_cast %464 : vector<1x10x8xf32> to vector<10x8xf32>
    %466 = vector.shape_cast %456 : vector<10x8xf32> to vector<1x10x8xf32>
    tpu.vector_store %arg5[%c22_211, %c0_212, %c0_213], %466 {strides = array<i32>} : memref<25x10x8xf32, #tpu.memory_space<vmem>>, vector<1x10x8xf32>,
    %cst_214 = arith.constant 1.000000e+00 : f32
    %467 = vector.broadcast %cst_214 : f32 to vector<10x8xf32>
    %468 = arith.cmpf ogt, %456, %467 : vector<10x8xf32>
    %469 = arith.extui %468 : vector<10x8xi1> to vector<10x8xi32>
    %470 = arith.sitofp %469 : vector<10x8xi32> to vector<10x8xf32>
    %cst_215 = arith.constant 0.949999988 : f32
    %471 = vector.broadcast %cst_215 : f32 to vector<10x8xf32>
    %472 = arith.mulf %471, %456 : vector<10x8xf32>
    %473 = arith.addf %472, %5 : vector<10x8xf32>
    %cst_216 = arith.constant 1.000000e+00 : f32
    %474 = vector.broadcast %cst_216 : f32 to vector<10x8xf32>
    %475 = arith.mulf %470, %474 : vector<10x8xf32>
    %476 = arith.subf %473, %475 : vector<10x8xf32>
    %cst_217 = arith.constant 1.000000e+00 : f32
    %477 = vector.broadcast %cst_217 : f32 to vector<10x8xf32>
    %478 = arith.cmpf ogt, %476, %477 : vector<10x8xf32>
    %479 = arith.extui %478 : vector<10x8xi1> to vector<10x8xi32>
    %480 = arith.sitofp %479 : vector<10x8xi32> to vector<10x8xf32>
    %c23 = arith.constant 23 : index
    %c0_218 = arith.constant 0 : index
    %c0_219 = arith.constant 0 : index
    %481 = vector.load %arg4[%c23, %c0_218, %c0_219] : memref<25x10x8xf32, #tpu.memory_space<vmem>>, vector<1x10x8xf32>
    %482 = vector.shape_cast %481 : vector<1x10x8xf32> to vector<10x8xf32>
    %483 = vector.shape_cast %480 : vector<10x8xf32> to vector<1x10x8xf32>
    tpu.vector_store %arg4[%c23, %c0_218, %c0_219], %483 {strides = array<i32>} : memref<25x10x8xf32, #tpu.memory_space<vmem>>, vector<1x10x8xf32>,
    %c23_220 = arith.constant 23 : index
    %c0_221 = arith.constant 0 : index
    %c0_222 = arith.constant 0 : index
    %484 = vector.load %arg5[%c23_220, %c0_221, %c0_222] : memref<25x10x8xf32, #tpu.memory_space<vmem>>, vector<1x10x8xf32>
    %485 = vector.shape_cast %484 : vector<1x10x8xf32> to vector<10x8xf32>
    %486 = vector.shape_cast %476 : vector<10x8xf32> to vector<1x10x8xf32>
    tpu.vector_store %arg5[%c23_220, %c0_221, %c0_222], %486 {strides = array<i32>} : memref<25x10x8xf32, #tpu.memory_space<vmem>>, vector<1x10x8xf32>,
    %cst_223 = arith.constant 1.000000e+00 : f32
    %487 = vector.broadcast %cst_223 : f32 to vector<10x8xf32>
    %488 = arith.cmpf ogt, %476, %487 : vector<10x8xf32>
    %489 = arith.extui %488 : vector<10x8xi1> to vector<10x8xi32>
    %490 = arith.sitofp %489 : vector<10x8xi32> to vector<10x8xf32>
    %cst_224 = arith.constant 0.949999988 : f32
    %491 = vector.broadcast %cst_224 : f32 to vector<10x8xf32>
    %492 = arith.mulf %491, %476 : vector<10x8xf32>
    %493 = arith.addf %492, %5 : vector<10x8xf32>
    %cst_225 = arith.constant 1.000000e+00 : f32
    %494 = vector.broadcast %cst_225 : f32 to vector<10x8xf32>
    %495 = arith.mulf %490, %494 : vector<10x8xf32>
    %496 = arith.subf %493, %495 : vector<10x8xf32>
    %cst_226 = arith.constant 1.000000e+00 : f32
    %497 = vector.broadcast %cst_226 : f32 to vector<10x8xf32>
    %498 = arith.cmpf ogt, %496, %497 : vector<10x8xf32>
    %499 = arith.extui %498 : vector<10x8xi1> to vector<10x8xi32>
    %500 = arith.sitofp %499 : vector<10x8xi32> to vector<10x8xf32>
    %c24 = arith.constant 24 : index
    %c0_227 = arith.constant 0 : index
    %c0_228 = arith.constant 0 : index
    %501 = vector.load %arg4[%c24, %c0_227, %c0_228] : memref<25x10x8xf32, #tpu.memory_space<vmem>>, vector<1x10x8xf32>
    %502 = vector.shape_cast %501 : vector<1x10x8xf32> to vector<10x8xf32>
    %503 = vector.shape_cast %500 : vector<10x8xf32> to vector<1x10x8xf32>
    tpu.vector_store %arg4[%c24, %c0_227, %c0_228], %503 {strides = array<i32>} : memref<25x10x8xf32, #tpu.memory_space<vmem>>, vector<1x10x8xf32>,
    %c24_229 = arith.constant 24 : index
    %c0_230 = arith.constant 0 : index
    %c0_231 = arith.constant 0 : index
    %504 = vector.load %arg5[%c24_229, %c0_230, %c0_231] : memref<25x10x8xf32, #tpu.memory_space<vmem>>, vector<1x10x8xf32>
    %505 = vector.shape_cast %504 : vector<1x10x8xf32> to vector<10x8xf32>
    %506 = vector.shape_cast %496 : vector<10x8xf32> to vector<1x10x8xf32>
    tpu.vector_store %arg5[%c24_229, %c0_230, %c0_231], %506 {strides = array<i32>} : memref<25x10x8xf32, #tpu.memory_space<vmem>>, vector<1x10x8xf32>,
    return
  }
  func.func @transform_0(%arg0: i32) -> (i32, i32) {
    %c0_i32 = arith.constant 0 : i32
    %c0_i32_0 = arith.constant 0 : i32
    return %arg0, %c0_i32 : i32, i32
  }
  func.func @transform_1(%arg0: i32) -> (i32, i32) {
    %c0_i32 = arith.constant 0 : i32
    %c0_i32_0 = arith.constant 0 : i32
    %c0_i32_1 = arith.constant 0 : i32
    return %c0_i32, %c0_i32_0 : i32, i32
  }
  func.func @transform_2(%arg0: i32) -> (i32, i32) {
    %c0_i32 = arith.constant 0 : i32
    %c0_i32_0 = arith.constant 0 : i32
    %c0_i32_1 = arith.constant 0 : i32
    return %c0_i32, %c0_i32_0 : i32, i32
  }
  func.func @transform_3(%arg0: i32) -> (i32, i32, i32) {
    %c0_i32 = arith.constant 0 : i32
    %c0_i32_0 = arith.constant 0 : i32
    %c0_i32_1 = arith.constant 0 : i32
    return %c0_i32, %c0_i32_0, %arg0 : i32, i32, i32
  }
  func.func @transform_4(%arg0: i32) -> (i32, i32, i32) {
    %c0_i32 = arith.constant 0 : i32
    %c0_i32_0 = arith.constant 0 : i32
    %c0_i32_1 = arith.constant 0 : i32
    return %c0_i32, %c0_i32_0, %arg0 : i32, i32, i32
  }
}

</mosaic_0001>

<llo_original>
// kernel: tpu_custom_call.1
$region0: #{tpu_custom_call.1}
  #allocation0 [shape = 'u32[]', space=smem, size = 0x4, offset = 0x4, fixed_abs, tag = 'smem constant byte address 0x4 - core index']
  #allocation1 [shape = 'u32[144,128]{1,0:T(1,128)}', space=vmem, size = 0x12000, scoped, tag = 'internal scratch']
  %s0 = inlined_call_operand.hbm [shape: f32[8,784], index: 0, kind: input, shape index: {}]
  %s1 = inlined_call_operand.hbm [shape: f32[10,784], index: 1, kind: input, shape index: {}]
  %s2 = inlined_call_operand.vmem [shape: f32[10,1], index: 2, kind: input, shape index: {}]
  %s3 = inlined_call_operand.vmem [shape: f32[25,10,8], index: 3, kind: output, shape index: {0}]
  %s4 = inlined_call_operand.vmem [shape: f32[25,10,8], index: 4, kind: output, shape index: {1}]
  %5 = xla_tuple %s3, %s4
  %s6 = sld [smem:[#allocation0]]
  $region38: #{tpu_custom_call.1} parent=0
    _
  %s8 = ssub.s32 1, %s6
  %s9 = scalar_select 0, %s8, %s6
  $region1: #{tpu_custom_call.1} parent=0
    #allocation2 [shape = 'u8[28672]{0}', space=vmem, size = 0x7000, scoped, tag = 'input window, operand 0, single buffered']
    #allocation3 [shape = 's32[1]{0}', space=sflag, size = 0x4, scoped, tag = 'scoped memory for tpu_custom_call.1']
    #allocation4 [shape = 'u8[57344]{0}', space=vmem, size = 0xe000, scoped, tag = 'input window, operand 1, single buffered']
    #allocation5 [shape = 's32[1]{0}', space=sflag, size = 0x4, scoped, tag = 'scoped memory for tpu_custom_call.1']
    %10 = vsyncpa [#allocation3], 0
    %11 = vsyncpa [#allocation5], 0
    // Predicated region
    $region2: #{tpu_custom_call.1} parent=1 // pred_check
      _
    $region3: #{tpu_custom_call.1} parent=1 // pred_check_branch
      %13 = sbr.rel (0) target = $region5
    $region4: #{tpu_custom_call.1} parent=1 // pred_region
      %s15 = ssub.s32 896, 896
      %16 = vsyncadd [#allocation3], %s15
      %s18 = sshll.u32 [#allocation2], 4
      %s19 = int_to_ptr.vmem [resolvable:$true] %s18
      %21 = dma.hbm_to_vmem [thread:$0]  %s0, 896, %s19, [#allocation3]
    $region5: #{tpu_custom_call.1} parent=1 // pred_fallthru
      _
    // Predicated region
    $region6: #{tpu_custom_call.1} parent=1 // pred_check
      _
    $region7: #{tpu_custom_call.1} parent=1 // pred_check_branch
      %23 = sbr.rel (0) target = $region9
    $region8: #{tpu_custom_call.1} parent=1 // pred_region
      %s25 = ssub.s32 1792, 1792
      %26 = vsyncadd [#allocation5], %s25
      %s27 = sshll.u32 [#allocation4], 4
      %s28 = int_to_ptr.vmem [resolvable:$true] %s27
      %33 = dma.hbm_to_vmem [thread:$0]  %s1, 1792, %s28, [#allocation5], 896, 896, 56
    $region9: #{tpu_custom_call.1} parent=1 // pred_fallthru
      _
    // Predicated region
    $region10: #{tpu_custom_call.1} parent=1 // pred_check
      _
    $region11: #{tpu_custom_call.1} parent=1 // pred_check_branch
      %35 = sbr.rel (0) target = $region13
    $region12: #{tpu_custom_call.1} parent=1 // pred_region
      _
    $region13: #{tpu_custom_call.1} parent=1 // pred_fallthru
      _
    // Predicated region
    $region14: #{tpu_custom_call.1} parent=1 // pred_check
      _
    $region15: #{tpu_custom_call.1} parent=1 // pred_check_branch
      %37 = sbr.rel (0) target = $region17
    $region16: #{tpu_custom_call.1} parent=1 // pred_region
      %38 = dma.done [#allocation3], 896
    $region17: #{tpu_custom_call.1} parent=1 // pred_fallthru
      _
    // Predicated region
    $region18: #{tpu_custom_call.1} parent=1 // pred_check
      _
    $region19: #{tpu_custom_call.1} parent=1 // pred_check_branch
      %40 = sbr.rel (0) target = $region21
    $region20: #{tpu_custom_call.1} parent=1 // pred_region
      %41 = dma.done [#allocation5], 1792
    $region21: #{tpu_custom_call.1} parent=1 // pred_fallthru
      _
    %v42 = vld [vmem:[#allocation4] sm:$0xff]
    %v43 = vld [vmem:[#allocation4 + $0x8] sm:$0xff]
    %v44 = vld [vmem:[#allocation4 + $0x10] sm:$0xff]
    %v45 = vld [vmem:[#allocation4 + $0x18] sm:$0xff]
    %v46 = vld [vmem:[#allocation4 + $0x20] sm:$0xff]
    %v47 = vld [vmem:[#allocation4 + $0x28] sm:$0xff]
    %v48 = vld [vmem:[#allocation4 + $0x30] sm:$0xff]
    %v49 = vld [vmem:[#allocation4 + $0x38] sm:$0x3]
    %v50 = vld [vmem:[#allocation4 + $0x40] sm:$0x3]
    %v51 = vld [vmem:[#allocation4 + $0x48] sm:$0x3]
    %v52 = vld [vmem:[#allocation4 + $0x50] sm:$0x3]
    %v53 = vld [vmem:[#allocation4 + $0x58] sm:$0x3]
    %v54 = vld [vmem:[#allocation4 + $0x60] sm:$0x3]
    %v55 = vld [vmem:[#allocation4 + $0x68] sm:$0x3]
    %v56 = vld [vmem:[#allocation2] sm:$0xff]
    %v57 = vld [vmem:[#allocation2 + $0x8] sm:$0xff]
    %v58 = vld [vmem:[#allocation2 + $0x10] sm:$0xff]
    %v59 = vld [vmem:[#allocation2 + $0x18] sm:$0xff]
    %v60 = vld [vmem:[#allocation2 + $0x20] sm:$0xff]
    %v61 = vld [vmem:[#allocation2 + $0x28] sm:$0xff]
    %v62 = vld [vmem:[#allocation2 + $0x30] sm:$0xff]
    %v63 = vld [vmem:[%s2] sm:$0xff]
    %v64 = vld [vmem:[%s2 + $0x8] sm:$0x3]
    %66 = vset.pattern.permute.xlu0 0
    %67 = vperm.xlu0 %66, %v63
    %v68 = vpop.permute.xlu0 %67
    %71 = vset.pattern.permute.xlu0 0
    %72 = vperm.xlu0 %71, %v64
    %v73 = vpop.permute.xlu0 %72
    %vm75 = vcmask 130048
    %v77 = vsel %vm75, %v48, 0
    %v80 = vsel %vm75, %v55, 0
    %v83 = vsel %vm75, %v62, 0
    %85 = vmatprep.subr.mxu0 0.0
    %86 = vmatpush1.xpose.msra.mxu0 0.0
    %87 = vmatprep.subr.mxu0 0.0
    %88 = vmatpush1.xpose.msra.mxu0 0.0
    %89 = vmatprep.subr.mxu0 0.0
    %90 = vmatpush1.xpose.msra.mxu0 0.0
    %91 = vmatprep.subr.mxu0 0.0
    %92 = vmatpush1.xpose.msra.mxu0 0.0
    %93 = vmatprep.subr.mxu0 0.0
    %94 = vmatpush1.xpose.msra.mxu0 0.0
    %95 = vmatprep.subr.mxu0 0.0
    %96 = vmatpush1.xpose.msra.mxu0 0.0
    %97 = vmatprep.subr.mxu0 0.0
    %98 = vmatpush1.xpose.msra.mxu0 0.0
    %99 = vmatprep.subr.mxu0 0.0
    %100 = vmatpush1.xpose.msra.mxu0 0.0
    %101 = vmatprep.subr.mxu0 0.0
    %102 = vmatpush1.xpose.msra.mxu0 0.0
    %103 = vmatprep.subr.mxu0 0.0
    %104 = vmatpush1.xpose.msra.mxu0 0.0
    %105 = vmatprep.subr.mxu0 0.0
    %106 = vmatpush1.xpose.msra.mxu0 0.0
    %107 = vmatprep.subr.mxu0 0.0
    %108 = vmatpush1.xpose.msra.mxu0 0.0
    %109 = vmatprep.subr.mxu0 0.0
    %110 = vmatpush1.xpose.msra.mxu0 0.0
    %111 = vmatprep.subr.mxu0 0.0
    %112 = vmatpush1.xpose.msra.mxu0 0.0
    %113 = vmatprep.subr.mxu0 0.0
    %114 = vmatpush1.xpose.msra.mxu0 0.0
    %v115 = vand.u32 %v57, 4294901760
    %116 = vmatprep.subr.mxu0 %v115
    %v117 = vand.u32 %v56, 4294901760
    %118 = vmatpush1.xpose.msra.mxu0 %v117
    %119 = vmatprep.subr.mxu0 0.0
    %120 = vmatpush2.xpose.msra.mxu0 0.0
    %121 = vmatprep.subr.mxu0 0.0
    %122 = vmatpush2.xpose.msra.mxu0 0.0
    %123 = vmatprep.subr.mxu0 0.0
    %124 = vmatpush2.xpose.msra.mxu0 0.0
    %125 = vmatprep.subr.mxu0 0.0
    %126 = vmatpush2.xpose.msra.mxu0 0.0
    %127 = vmatprep.subr.mxu0 0.0
    %128 = vmatpush2.xpose.msra.mxu0 0.0
    %129 = vmatprep.subr.mxu0 0.0
    %130 = vmatpush2.xpose.msra.mxu0 0.0
    %131 = vmatprep.subr.mxu0 0.0
    %132 = vmatpush2.xpose.msra.mxu0 0.0
    %133 = vmatprep.subr.mxu0 0.0
    %134 = vmatpush2.xpose.msra.mxu0 0.0
    %135 = vmatprep.subr.mxu0 0.0
    %136 = vmatpush2.xpose.msra.mxu0 0.0
    %137 = vmatprep.subr.mxu0 0.0
    %138 = vmatpush2.xpose.msra.mxu0 0.0
    %139 = vmatprep.subr.mxu0 0.0
    %140 = vmatpush2.xpose.msra.mxu0 0.0
    %141 = vmatprep.subr.mxu0 0.0
    %142 = vmatpush2.xpose.msra.mxu0 0.0
    %143 = vmatprep.subr.mxu0 0.0
    %144 = vmatpush2.xpose.msra.mxu0 0.0
    %145 = vmatprep.subr.mxu0 0.0
    %146 = vmatpush2.xpose.msra.mxu0 0.0
    %147 = vmatprep.subr.mxu0 0.0
    %148 = vmatpush2.xpose.msra.mxu0 0.0
    %149 = vmatprep.subr.mxu0 0.0
    %150 = vmatpush2.xpose.msra.mxu0 0.0
    %v151 = vand.u32 %v43, 4294901760
    %v152 = vsub.f32 %v43, %v151
    %v153 = vand.u32 %v152, 4294901760
    %v154 = vsub.f32 %v152, %v153
    %v155 = vand.u32 %v154, 4294901760
    %156 = vmatprep.mubr.f32.mxu0 %v155
    %v157 = vand.u32 %v42, 4294901760
    %v158 = vsub.f32 %v42, %v157
    %v159 = vand.u32 %v158, 4294901760
    %v160 = vsub.f32 %v158, %v159
    %v161 = vand.u32 %v160, 4294901760
    %162 = vmatmul.mubr.f32.gmra.mxu0 %v161
    %v163 = vpop.f32.mrf.mxu0
    %v164 = vadd.f32 %v68, %v163
    %v165 = vpop.f32.mrf.mxu0
    %v166 = vand.u32 %v50, 4294901760
    %v167 = vsub.f32 %v50, %v166
    %v168 = vand.u32 %v167, 4294901760
    %v169 = vsub.f32 %v167, %v168
    %v170 = vand.u32 %v169, 4294901760
    %171 = vmatprep.mubr.f32.mxu0 %v170
    %v172 = vand.u32 %v49, 4294901760
    %v173 = vsub.f32 %v49, %v172
    %v174 = vand.u32 %v173, 4294901760
    %v175 = vsub.f32 %v173, %v174
    %v176 = vand.u32 %v175, 4294901760
    %177 = vmatmul.mubr.f32.gmra.mxu0 %v176
    %v178 = vpop.f32.mrf.mxu0
    %v179 = vadd.f32 %v73, %v178
    %v180 = vpop.f32.mrf.mxu0
    %181 = vdwg.mxu0
    %182 = vmatprep.subr.mxu0 0.0
    %183 = vmatpush1.xpose.msra.mxu0 0.0
    %184 = vmatprep.subr.mxu0 0.0
    %185 = vmatpush1.xpose.msra.mxu0 0.0
    %186 = vmatprep.subr.mxu0 0.0
    %187 = vmatpush1.xpose.msra.mxu0 0.0
    %188 = vmatprep.subr.mxu0 0.0
    %189 = vmatpush1.xpose.msra.mxu0 0.0
    %190 = vmatprep.subr.mxu0 0.0
    %191 = vmatpush1.xpose.msra.mxu0 0.0
    %192 = vmatprep.subr.mxu0 0.0
    %193 = vmatpush1.xpose.msra.mxu0 0.0
    %194 = vmatprep.subr.mxu0 0.0
    %195 = vmatpush1.xpose.msra.mxu0 0.0
    %196 = vmatprep.subr.mxu0 0.0
    %197 = vmatpush1.xpose.msra.mxu0 0.0
    %198 = vmatprep.subr.mxu0 0.0
    %199 = vmatpush1.xpose.msra.mxu0 0.0
    %200 = vmatprep.subr.mxu0 0.0
    %201 = vmatpush1.xpose.msra.mxu0 0.0
    %202 = vmatprep.subr.mxu0 0.0
    %203 = vmatpush1.xpose.msra.mxu0 0.0
    %204 = vmatprep.subr.mxu0 0.0
    %205 = vmatpush1.xpose.msra.mxu0 0.0
    %206 = vmatprep.subr.mxu0 0.0
    %207 = vmatpush1.xpose.msra.mxu0 0.0
    %208 = vmatprep.subr.mxu0 0.0
    %209 = vmatpush1.xpose.msra.mxu0 0.0
    %210 = vmatprep.subr.mxu0 0.0
    %211 = vmatpush1.xpose.msra.mxu0 0.0
    %v212 = vand.u32 %v57, 4294901760
    %v213 = vsub.f32 %v57, %v212
    %v214 = vand.u32 %v213, 4294901760
    %v215 = vsub.f32 %v213, %v214
    %v216 = vand.u32 %v215, 4294901760
    %217 = vmatprep.subr.mxu0 %v216
    %v218 = vand.u32 %v56, 4294901760
    %v219 = vsub.f32 %v56, %v218
    %v220 = vand.u32 %v219, 4294901760
    %v221 = vsub.f32 %v219, %v220
    %v222 = vand.u32 %v221, 4294901760
    %223 = vmatpush1.xpose.msra.mxu0 %v222
    %224 = vmatprep.subr.mxu0 0.0
    %225 = vmatpush2.xpose.msra.mxu0 0.0
    %226 = vmatprep.subr.mxu0 0.0
    %227 = vmatpush2.xpose.msra.mxu0 0.0
    %228 = vmatprep.subr.mxu0 0.0
    %229 = vmatpush2.xpose.msra.mxu0 0.0
    %230 = vmatprep.subr.mxu0 0.0
    %231 = vmatpush2.xpose.msra.mxu0 0.0
    %232 = vmatprep.subr.mxu0 0.0
    %233 = vmatpush2.xpose.msra.mxu0 0.0
    %234 = vmatprep.subr.mxu0 0.0
    %235 = vmatpush2.xpose.msra.mxu0 0.0
    %236 = vmatprep.subr.mxu0 0.0
    %237 = vmatpush2.xpose.msra.mxu0 0.0
    %238 = vmatprep.subr.mxu0 0.0
    %239 = vmatpush2.xpose.msra.mxu0 0.0
    %240 = vmatprep.subr.mxu0 0.0
    %241 = vmatpush2.xpose.msra.mxu0 0.0
    %242 = vmatprep.subr.mxu0 0.0
    %243 = vmatpush2.xpose.msra.mxu0 0.0
    %244 = vmatprep.subr.mxu0 0.0
    %245 = vmatpush2.xpose.msra.mxu0 0.0
    %246 = vmatprep.subr.mxu0 0.0
    %247 = vmatpush2.xpose.msra.mxu0 0.0
    %248 = vmatprep.subr.mxu0 0.0
    %249 = vmatpush2.xpose.msra.mxu0 0.0
    %250 = vmatprep.subr.mxu0 0.0
    %251 = vmatpush2.xpose.msra.mxu0 0.0
    %252 = vmatprep.subr.mxu0 0.0
    %253 = vmatpush2.xpose.msra.mxu0 0.0
    %254 = vmatprep.subr.mxu0 0.0
    %255 = vmatpush2.xpose.msra.mxu0 0.0
    %v256 = vand.u32 %v43, 4294901760
    %257 = vmatprep.mubr.f32.mxu0 %v256
    %v258 = vand.u32 %v42, 4294901760
    %259 = vmatmul.mubr.f32.gmra.mxu0 %v258
    %v260 = vpop.f32.mrf.mxu0
    %v261 = vadd.f32 %v164, %v260
    %v262 = vpop.f32.mrf.mxu0
    %v263 = vand.u32 %v50, 4294901760
    %264 = vmatprep.mubr.f32.mxu0 %v263
    %v265 = vand.u32 %v49, 4294901760
    %266 = vmatmul.mubr.f32.gmra.mxu0 %v265
    %v267 = vpop.f32.mrf.mxu0
    %v268 = vadd.f32 %v179, %v267
    %v269 = vpop.f32.mrf.mxu0
    %270 = vdwg.mxu0
    %271 = vmatprep.subr.mxu0 0.0
    %272 = vmatpush1.xpose.msra.mxu0 0.0
    %273 = vmatprep.subr.mxu0 0.0
    %274 = vmatpush1.xpose.msra.mxu0 0.0
    %275 = vmatprep.subr.mxu0 0.0
    %276 = vmatpush1.xpose.msra.mxu0 0.0
    %277 = vmatprep.subr.mxu0 0.0
    %278 = vmatpush1.xpose.msra.mxu0 0.0
    %279 = vmatprep.subr.mxu0 0.0
    %280 = vmatpush1.xpose.msra.mxu0 0.0
    %281 = vmatprep.subr.mxu0 0.0
    %282 = vmatpush1.xpose.msra.mxu0 0.0
    %283 = vmatprep.subr.mxu0 0.0
    %284 = vmatpush1.xpose.msra.mxu0 0.0
    %285 = vmatprep.subr.mxu0 0.0
    %286 = vmatpush1.xpose.msra.mxu0 0.0
    %287 = vmatprep.subr.mxu0 0.0
    %288 = vmatpush1.xpose.msra.mxu0 0.0
    %289 = vmatprep.subr.mxu0 0.0
    %290 = vmatpush1.xpose.msra.mxu0 0.0
    %291 = vmatprep.subr.mxu0 0.0
    %292 = vmatpush1.xpose.msra.mxu0 0.0
    %293 = vmatprep.subr.mxu0 0.0
    %294 = vmatpush1.xpose.msra.mxu0 0.0
    %295 = vmatprep.subr.mxu0 0.0
    %296 = vmatpush1.xpose.msra.mxu0 0.0
    %297 = vmatprep.subr.mxu0 0.0
    %298 = vmatpush1.xpose.msra.mxu0 0.0
    %299 = vmatprep.subr.mxu0 0.0
    %300 = vmatpush1.xpose.msra.mxu0 0.0
    %v301 = vand.u32 %v57, 4294901760
    %v302 = vsub.f32 %v57, %v301
    %303 = vmatprep.subr.mxu0 %v302
    %v304 = vand.u32 %v56, 4294901760
    %v305 = vsub.f32 %v56, %v304
    %306 = vmatpush1.xpose.msra.mxu0 %v305
    %307 = vmatprep.subr.mxu0 0.0
    %308 = vmatpush2.xpose.msra.mxu0 0.0
    %309 = vmatprep.subr.mxu0 0.0
    %310 = vmatpush2.xpose.msra.mxu0 0.0
    %311 = vmatprep.subr.mxu0 0.0
    %312 = vmatpush2.xpose.msra.mxu0 0.0
    %313 = vmatprep.subr.mxu0 0.0
    %314 = vmatpush2.xpose.msra.mxu0 0.0
    %315 = vmatprep.subr.mxu0 0.0
    %316 = vmatpush2.xpose.msra.mxu0 0.0
    %317 = vmatprep.subr.mxu0 0.0
    %318 = vmatpush2.xpose.msra.mxu0 0.0
    %319 = vmatprep.subr.mxu0 0.0
    %320 = vmatpush2.xpose.msra.mxu0 0.0
    %321 = vmatprep.subr.mxu0 0.0
    %322 = vmatpush2.xpose.msra.mxu0 0.0
    %323 = vmatprep.subr.mxu0 0.0
    %324 = vmatpush2.xpose.msra.mxu0 0.0
    %325 = vmatprep.subr.mxu0 0.0
    %326 = vmatpush2.xpose.msra.mxu0 0.0
    %327 = vmatprep.subr.mxu0 0.0
    %328 = vmatpush2.xpose.msra.mxu0 0.0
    %329 = vmatprep.subr.mxu0 0.0
    %330 = vmatpush2.xpose.msra.mxu0 0.0
    %331 = vmatprep.subr.mxu0 0.0
    %332 = vmatpush2.xpose.msra.mxu0 0.0
    %333 = vmatprep.subr.mxu0 0.0
    %334 = vmatpush2.xpose.msra.mxu0 0.0
    %335 = vmatprep.subr.mxu0 0.0
    %336 = vmatpush2.xpose.msra.mxu0 0.0
    %337 = vmatprep.subr.mxu0 0.0
    %338 = vmatpush2.xpose.msra.mxu0 0.0
    %v339 = vand.u32 %v43, 4294901760
    %v340 = vsub.f32 %v43, %v339
    %341 = vmatprep.mubr.f32.mxu0 %v340
    %v342 = vand.u32 %v42, 4294901760
    %v343 = vsub.f32 %v42, %v342
    %344 = vmatmul.mubr.f32.gmra.mxu0 %v343
    %v345 = vpop.f32.mrf.mxu0
    %v346 = vadd.f32 %v261, %v345
    %v347 = vpop.f32.mrf.mxu0
    %v348 = vand.u32 %v50, 4294901760
    %v349 = vsub.f32 %v50, %v348
    %350 = vmatprep.mubr.f32.mxu0 %v349
    %v351 = vand.u32 %v49, 4294901760
    %v352 = vsub.f32 %v49, %v351
    %353 = vmatmul.mubr.f32.gmra.mxu0 %v352
    %v354 = vpop.f32.mrf.mxu0
    %v355 = vadd.f32 %v268, %v354
    %v356 = vpop.f32.mrf.mxu0
    %357 = vdwg.mxu0
    %358 = vmatprep.subr.mxu0 0.0
    %359 = vmatpush1.xpose.msra.mxu0 0.0
    %360 = vmatprep.subr.mxu0 0.0
    %361 = vmatpush1.xpose.msra.mxu0 0.0
    %362 = vmatprep.subr.mxu0 0.0
    %363 = vmatpush1.xpose.msra.mxu0 0.0
    %364 = vmatprep.subr.mxu0 0.0
    %365 = vmatpush1.xpose.msra.mxu0 0.0
    %366 = vmatprep.subr.mxu0 0.0
    %367 = vmatpush1.xpose.msra.mxu0 0.0
    %368 = vmatprep.subr.mxu0 0.0
    %369 = vmatpush1.xpose.msra.mxu0 0.0
    %370 = vmatprep.subr.mxu0 0.0
    %371 = vmatpush1.xpose.msra.mxu0 0.0
    %372 = vmatprep.subr.mxu0 0.0
    %373 = vmatpush1.xpose.msra.mxu0 0.0
    %374 = vmatprep.subr.mxu0 0.0
    %375 = vmatpush1.xpose.msra.mxu0 0.0
    %376 = vmatprep.subr.mxu0 0.0
    %377 = vmatpush1.xpose.msra.mxu0 0.0
    %378 = vmatprep.subr.mxu0 0.0
    %379 = vmatpush1.xpose.msra.mxu0 0.0
    %380 = vmatprep.subr.mxu0 0.0
    %381 = vmatpush1.xpose.msra.mxu0 0.0
    %382 = vmatprep.subr.mxu0 0.0
    %383 = vmatpush1.xpose.msra.mxu0 0.0
    %384 = vmatprep.subr.mxu0 0.0
    %385 = vmatpush1.xpose.msra.mxu0 0.0
    %386 = vmatprep.subr.mxu0 0.0
    %387 = vmatpush1.xpose.msra.mxu0 0.0
    %v388 = vand.u32 %v57, 4294901760
    %389 = vmatprep.subr.mxu0 %v388
    %v390 = vand.u32 %v56, 4294901760
    %391 = vmatpush1.xpose.msra.mxu0 %v390
    %392 = vmatprep.subr.mxu0 0.0
    %393 = vmatpush2.xpose.msra.mxu0 0.0
    %394 = vmatprep.subr.mxu0 0.0
    %395 = vmatpush2.xpose.msra.mxu0 0.0
    %396 = vmatprep.subr.mxu0 0.0
    %397 = vmatpush2.xpose.msra.mxu0 0.0
    %398 = vmatprep.subr.mxu0 0.0
    %399 = vmatpush2.xpose.msra.mxu0 0.0
    %400 = vmatprep.subr.mxu0 0.0
    %401 = vmatpush2.xpose.msra.mxu0 0.0
    %402 = vmatprep.subr.mxu0 0.0
    %403 = vmatpush2.xpose.msra.mxu0 0.0
    %404 = vmatprep.subr.mxu0 0.0
    %405 = vmatpush2.xpose.msra.mxu0 0.0
    %406 = vmatprep.subr.mxu0 0.0
    %407 = vmatpush2.xpose.msra.mxu0 0.0
    %408 = vmatprep.subr.mxu0 0.0
    %409 = vmatpush2.xpose.msra.mxu0 0.0
    %410 = vmatprep.subr.mxu0 0.0
    %411 = vmatpush2.xpose.msra.mxu0 0.0
    %412 = vmatprep.subr.mxu0 0.0
    %413 = vmatpush2.xpose.msra.mxu0 0.0
    %414 = vmatprep.subr.mxu0 0.0
    %415 = vmatpush2.xpose.msra.mxu0 0.0
    %416 = vmatprep.subr.mxu0 0.0
    %417 = vmatpush2.xpose.msra.mxu0 0.0
    %418 = vmatprep.subr.mxu0 0.0
    %419 = vmatpush2.xpose.msra.mxu0 0.0
    %420 = vmatprep.subr.mxu0 0.0
    %421 = vmatpush2.xpose.msra.mxu0 0.0
    %422 = vmatprep.subr.mxu0 0.0
    %423 = vmatpush2.xpose.msra.mxu0 0.0
    %v424 = vand.u32 %v43, 4294901760
    %v425 = vsub.f32 %v43, %v424
    %v426 = vand.u32 %v425, 4294901760
    %427 = vmatprep.mubr.f32.mxu0 %v426
    %v428 = vand.u32 %v42, 4294901760
    %v429 = vsub.f32 %v42, %v428
    %v430 = vand.u32 %v429, 4294901760
    %431 = vmatmul.mubr.f32.gmra.mxu0 %v430
    %v432 = vpop.f32.mrf.mxu0
    %v433 = vadd.f32 %v346, %v432
    %v434 = vpop.f32.mrf.mxu0
    %v435 = vand.u32 %v50, 4294901760
    %v436 = vsub.f32 %v50, %v435
    %v437 = vand.u32 %v436, 4294901760
    %438 = vmatprep.mubr.f32.mxu0 %v437
    %v439 = vand.u32 %v49, 4294901760
    %v440 = vsub.f32 %v49, %v439
    %v441 = vand.u32 %v440, 4294901760
    %442 = vmatmul.mubr.f32.gmra.mxu0 %v441
    %v443 = vpop.f32.mrf.mxu0
    %v444 = vadd.f32 %v355, %v443
    %v445 = vpop.f32.mrf.mxu0
    %446 = vdwg.mxu0
    %447 = vmatprep.subr.mxu0 0.0
    %448 = vmatpush1.xpose.msra.mxu0 0.0
    %449 = vmatprep.subr.mxu0 0.0
    %450 = vmatpush1.xpose.msra.mxu0 0.0
    %451 = vmatprep.subr.mxu0 0.0
    %452 = vmatpush1.xpose.msra.mxu0 0.0
    %453 = vmatprep.subr.mxu0 0.0
    %454 = vmatpush1.xpose.msra.mxu0 0.0
    %455 = vmatprep.subr.mxu0 0.0
    %456 = vmatpush1.xpose.msra.mxu0 0.0
    %457 = vmatprep.subr.mxu0 0.0
    %458 = vmatpush1.xpose.msra.mxu0 0.0
    %459 = vmatprep.subr.mxu0 0.0
    %460 = vmatpush1.xpose.msra.mxu0 0.0
    %461 = vmatprep.subr.mxu0 0.0
    %462 = vmatpush1.xpose.msra.mxu0 0.0
    %463 = vmatprep.subr.mxu0 0.0
    %464 = vmatpush1.xpose.msra.mxu0 0.0
    %465 = vmatprep.subr.mxu0 0.0
    %466 = vmatpush1.xpose.msra.mxu0 0.0
    %467 = vmatprep.subr.mxu0 0.0
    %468 = vmatpush1.xpose.msra.mxu0 0.0
    %469 = vmatprep.subr.mxu0 0.0
    %470 = vmatpush1.xpose.msra.mxu0 0.0
    %471 = vmatprep.subr.mxu0 0.0
    %472 = vmatpush1.xpose.msra.mxu0 0.0
    %473 = vmatprep.subr.mxu0 0.0
    %474 = vmatpush1.xpose.msra.mxu0 0.0
    %475 = vmatprep.subr.mxu0 0.0
    %476 = vmatpush1.xpose.msra.mxu0 0.0
    %v477 = vand.u32 %v57, 4294901760
    %v478 = vsub.f32 %v57, %v477
    %v479 = vand.u32 %v478, 4294901760
    %480 = vmatprep.subr.mxu0 %v479
    %v481 = vand.u32 %v56, 4294901760
    %v482 = vsub.f32 %v56, %v481
    %v483 = vand.u32 %v482, 4294901760
    %484 = vmatpush1.xpose.msra.mxu0 %v483
    %485 = vmatprep.subr.mxu0 0.0
    %486 = vmatpush2.xpose.msra.mxu0 0.0
    %487 = vmatprep.subr.mxu0 0.0
    %488 = vmatpush2.xpose.msra.mxu0 0.0
    %489 = vmatprep.subr.mxu0 0.0
    %490 = vmatpush2.xpose.msra.mxu0 0.0
    %491 = vmatprep.subr.mxu0 0.0
    %492 = vmatpush2.xpose.msra.mxu0 0.0
    %493 = vmatprep.subr.mxu0 0.0
    %494 = vmatpush2.xpose.msra.mxu0 0.0
    %495 = vmatprep.subr.mxu0 0.0
    %496 = vmatpush2.xpose.msra.mxu0 0.0
    %497 = vmatprep.subr.mxu0 0.0
    %498 = vmatpush2.xpose.msra.mxu0 0.0
    %499 = vmatprep.subr.mxu0 0.0
    %500 = vmatpush2.xpose.msra.mxu0 0.0
    %501 = vmatprep.subr.mxu0 0.0
    %502 = vmatpush2.xpose.msra.mxu0 0.0
    %503 = vmatprep.subr.mxu0 0.0
    %504 = vmatpush2.xpose.msra.mxu0 0.0
    %505 = vmatprep.subr.mxu0 0.0
    %506 = vmatpush2.xpose.msra.mxu0 0.0
    %507 = vmatprep.subr.mxu0 0.0
    %508 = vmatpush2.xpose.msra.mxu0 0.0
    %509 = vmatprep.subr.mxu0 0.0
    %510 = vmatpush2.xpose.msra.mxu0 0.0
    %511 = vmatprep.subr.mxu0 0.0
    %512 = vmatpush2.xpose.msra.mxu0 0.0
    %513 = vmatprep.subr.mxu0 0.0
    %514 = vmatpush2.xpose.msra.mxu0 0.0
    %515 = vmatprep.subr.mxu0 0.0
    %516 = vmatpush2.xpose.msra.mxu0 0.0
    %v517 = vand.u32 %v43, 4294901760
    %518 = vmatprep.mubr.f32.mxu0 %v517
    %v519 = vand.u32 %v42, 4294901760
    %520 = vmatmul.mubr.f32.gmra.mxu0 %v519
    %v521 = vpop.f32.mrf.mxu0
    %v522 = vadd.f32 %v433, %v521
    %v523 = vpop.f32.mrf.mxu0
    %v524 = vand.u32 %v50, 4294901760
    %525 = vmatprep.mubr.f32.mxu0 %v524
    %v526 = vand.u32 %v49, 4294901760
    %527 = vmatmul.mubr.f32.gmra.mxu0 %v526
    %v528 = vpop.f32.mrf.mxu0
    %v529 = vadd.f32 %v444, %v528
    %v530 = vpop.f32.mrf.mxu0
    %531 = vdwg.mxu0
    %532 = vmatprep.subr.mxu0 0.0
    %533 = vmatpush1.xpose.msra.mxu0 0.0
    %534 = vmatprep.subr.mxu0 0.0
    %535 = vmatpush1.xpose.msra.mxu0 0.0
    %536 = vmatprep.subr.mxu0 0.0
    %537 = vmatpush1.xpose.msra.mxu0 0.0
    %538 = vmatprep.subr.mxu0 0.0
    %539 = vmatpush1.xpose.msra.mxu0 0.0
    %540 = vmatprep.subr.mxu0 0.0
    %541 = vmatpush1.xpose.msra.mxu0 0.0
    %542 = vmatprep.subr.mxu0 0.0
    %543 = vmatpush1.xpose.msra.mxu0 0.0
    %544 = vmatprep.subr.mxu0 0.0
    %545 = vmatpush1.xpose.msra.mxu0 0.0
    %546 = vmatprep.subr.mxu0 0.0
    %547 = vmatpush1.xpose.msra.mxu0 0.0
    %548 = vmatprep.subr.mxu0 0.0
    %549 = vmatpush1.xpose.msra.mxu0 0.0
    %550 = vmatprep.subr.mxu0 0.0
    %551 = vmatpush1.xpose.msra.mxu0 0.0
    %552 = vmatprep.subr.mxu0 0.0
    %553 = vmatpush1.xpose.msra.mxu0 0.0
    %554 = vmatprep.subr.mxu0 0.0
    %555 = vmatpush1.xpose.msra.mxu0 0.0
    %556 = vmatprep.subr.mxu0 0.0
    %557 = vmatpush1.xpose.msra.mxu0 0.0
    %558 = vmatprep.subr.mxu0 0.0
    %559 = vmatpush1.xpose.msra.mxu0 0.0
    %560 = vmatprep.subr.mxu0 0.0
    %561 = vmatpush1.xpose.msra.mxu0 0.0
    %v562 = vand.u32 %v57, 4294901760
    %563 = vmatprep.subr.mxu0 %v562
    %v564 = vand.u32 %v56, 4294901760
    %565 = vmatpush1.xpose.msra.mxu0 %v564
    %566 = vmatprep.subr.mxu0 0.0
    %567 = vmatpush2.xpose.msra.mxu0 0.0
    %568 = vmatprep.subr.mxu0 0.0
    %569 = vmatpush2.xpose.msra.mxu0 0.0
    %570 = vmatprep.subr.mxu0 0.0
    %571 = vmatpush2.xpose.msra.mxu0 0.0
    %572 = vmatprep.subr.mxu0 0.0
    %573 = vmatpush2.xpose.msra.mxu0 0.0
    %574 = vmatprep.subr.mxu0 0.0
    %575 = vmatpush2.xpose.msra.mxu0 0.0
    %576 = vmatprep.subr.mxu0 0.0
    %577 = vmatpush2.xpose.msra.mxu0 0.0
    %578 = vmatprep.subr.mxu0 0.0
    %579 = vmatpush2.xpose.msra.mxu0 0.0
    %580 = vmatprep.subr.mxu0 0.0
    %581 = vmatpush2.xpose.msra.mxu0 0.0
    %582 = vmatprep.subr.mxu0 0.0
    %583 = vmatpush2.xpose.msra.mxu0 0.0
    %584 = vmatprep.subr.mxu0 0.0
    %585 = vmatpush2.xpose.msra.mxu0 0.0
    %586 = vmatprep.subr.mxu0 0.0
    %587 = vmatpush2.xpose.msra.mxu0 0.0
    %588 = vmatprep.subr.mxu0 0.0
    %589 = vmatpush2.xpose.msra.mxu0 0.0
    %590 = vmatprep.subr.mxu0 0.0
    %591 = vmatpush2.xpose.msra.mxu0 0.0
    %592 = vmatprep.subr.mxu0 0.0
    %593 = vmatpush2.xpose.msra.mxu0 0.0
    %594 = vmatprep.subr.mxu0 0.0
    %595 = vmatpush2.xpose.msra.mxu0 0.0
    %596 = vmatprep.subr.mxu0 0.0
    %597 = vmatpush2.xpose.msra.mxu0 0.0
    %v598 = vand.u32 %v43, 4294901760
    %599 = vmatprep.mubr.f32.mxu0 %v598
    %v600 = vand.u32 %v42, 4294901760
    %601 = vmatmul.mubr.f32.gmra.mxu0 %v600
    %v602 = vpop.f32.mrf.mxu0
    %v603 = vadd.f32 %v522, %v602
    %v604 = vpop.f32.mrf.mxu0
    %v605 = vand.u32 %v50, 4294901760
    %606 = vmatprep.mubr.f32.mxu0 %v605
    %v607 = vand.u32 %v49, 4294901760
    %608 = vmatmul.mubr.f32.gmra.mxu0 %v607
    %v609 = vpop.f32.mrf.mxu0
    %v610 = vadd.f32 %v529, %v609
    %v611 = vpop.f32.mrf.mxu0
    %612 = vdwg.mxu0
    %613 = vmatprep.subr.mxu0 0.0
    %614 = vmatpush1.xpose.msra.mxu0 0.0
    %615 = vmatprep.subr.mxu0 0.0
    %616 = vmatpush1.xpose.msra.mxu0 0.0
    %617 = vmatprep.subr.mxu0 0.0
    %618 = vmatpush1.xpose.msra.mxu0 0.0
    %619 = vmatprep.subr.mxu0 0.0
    %620 = vmatpush1.xpose.msra.mxu0 0.0
    %621 = vmatprep.subr.mxu0 0.0
    %622 = vmatpush1.xpose.msra.mxu0 0.0
    %623 = vmatprep.subr.mxu0 0.0
    %624 = vmatpush1.xpose.msra.mxu0 0.0
    %625 = vmatprep.subr.mxu0 0.0
    %626 = vmatpush1.xpose.msra.mxu0 0.0
    %627 = vmatprep.subr.mxu0 0.0
    %628 = vmatpush1.xpose.msra.mxu0 0.0
    %629 = vmatprep.subr.mxu0 0.0
    %630 = vmatpush1.xpose.msra.mxu0 0.0
    %631 = vmatprep.subr.mxu0 0.0
    %632 = vmatpush1.xpose.msra.mxu0 0.0
    %633 = vmatprep.subr.mxu0 0.0
    %634 = vmatpush1.xpose.msra.mxu0 0.0
    %635 = vmatprep.subr.mxu0 0.0
    %636 = vmatpush1.xpose.msra.mxu0 0.0
    %637 = vmatprep.subr.mxu0 0.0
    %638 = vmatpush1.xpose.msra.mxu0 0.0
    %639 = vmatprep.subr.mxu0 0.0
    %640 = vmatpush1.xpose.msra.mxu0 0.0
    %641 = vmatprep.subr.mxu0 0.0
    %642 = vmatpush1.xpose.msra.mxu0 0.0
    %v643 = vand.u32 %v59, 4294901760
    %644 = vmatprep.subr.mxu0 %v643
    %v645 = vand.u32 %v58, 4294901760
    %646 = vmatpush1.xpose.msra.mxu0 %v645
    %647 = vmatprep.subr.mxu0 0.0
    %648 = vmatpush2.xpose.msra.mxu0 0.0
    %649 = vmatprep.subr.mxu0 0.0
    %650 = vmatpush2.xpose.msra.mxu0 0.0
    %651 = vmatprep.subr.mxu0 0.0
    %652 = vmatpush2.xpose.msra.mxu0 0.0
    %653 = vmatprep.subr.mxu0 0.0
    %654 = vmatpush2.xpose.msra.mxu0 0.0
    %655 = vmatprep.subr.mxu0 0.0
    %656 = vmatpush2.xpose.msra.mxu0 0.0
    %657 = vmatprep.subr.mxu0 0.0
    %658 = vmatpush2.xpose.msra.mxu0 0.0
    %659 = vmatprep.subr.mxu0 0.0
    %660 = vmatpush2.xpose.msra.mxu0 0.0
    %661 = vmatprep.subr.mxu0 0.0
    %662 = vmatpush2.xpose.msra.mxu0 0.0
    %663 = vmatprep.subr.mxu0 0.0
    %664 = vmatpush2.xpose.msra.mxu0 0.0
    %665 = vmatprep.subr.mxu0 0.0
    %666 = vmatpush2.xpose.msra.mxu0 0.0
    %667 = vmatprep.subr.mxu0 0.0
    %668 = vmatpush2.xpose.msra.mxu0 0.0
    %669 = vmatprep.subr.mxu0 0.0
    %670 = vmatpush2.xpose.msra.mxu0 0.0
    %671 = vmatprep.subr.mxu0 0.0
    %672 = vmatpush2.xpose.msra.mxu0 0.0
    %673 = vmatprep.subr.mxu0 0.0
    %674 = vmatpush2.xpose.msra.mxu0 0.0
    %675 = vmatprep.subr.mxu0 0.0
    %676 = vmatpush2.xpose.msra.mxu0 0.0
    %677 = vmatprep.subr.mxu0 0.0
    %678 = vmatpush2.xpose.msra.mxu0 0.0
    %v679 = vand.u32 %v45, 4294901760
    %v680 = vsub.f32 %v45, %v679
    %v681 = vand.u32 %v680, 4294901760
    %v682 = vsub.f32 %v680, %v681
    %v683 = vand.u32 %v682, 4294901760
    %684 = vmatprep.mubr.f32.mxu0 %v683
    %v685 = vand.u32 %v44, 4294901760
    %v686 = vsub.f32 %v44, %v685
    %v687 = vand.u32 %v686, 4294901760
    %v688 = vsub.f32 %v686, %v687
    %v689 = vand.u32 %v688, 4294901760
    %690 = vmatmul.mubr.f32.gmra.mxu0 %v689
    %v691 = vpop.f32.mrf.mxu0
    %v692 = vadd.f32 %v603, %v691
    %v693 = vpop.f32.mrf.mxu0
    %v694 = vand.u32 %v52, 4294901760
    %v695 = vsub.f32 %v52, %v694
    %v696 = vand.u32 %v695, 4294901760
    %v697 = vsub.f32 %v695, %v696
    %v698 = vand.u32 %v697, 4294901760
    %699 = vmatprep.mubr.f32.mxu0 %v698
    %v700 = vand.u32 %v51, 4294901760
    %v701 = vsub.f32 %v51, %v700
    %v702 = vand.u32 %v701, 4294901760
    %v703 = vsub.f32 %v701, %v702
    %v704 = vand.u32 %v703, 4294901760
    %705 = vmatmul.mubr.f32.gmra.mxu0 %v704
    %v706 = vpop.f32.mrf.mxu0
    %v707 = vadd.f32 %v610, %v706
    %v708 = vpop.f32.mrf.mxu0
    %709 = vdwg.mxu0
    %710 = vmatprep.subr.mxu0 0.0
    %711 = vmatpush1.xpose.msra.mxu0 0.0
    %712 = vmatprep.subr.mxu0 0.0
    %713 = vmatpush1.xpose.msra.mxu0 0.0
    %714 = vmatprep.subr.mxu0 0.0
    %715 = vmatpush1.xpose.msra.mxu0 0.0
    %716 = vmatprep.subr.mxu0 0.0
    %717 = vmatpush1.xpose.msra.mxu0 0.0
    %718 = vmatprep.subr.mxu0 0.0
    %719 = vmatpush1.xpose.msra.mxu0 0.0
    %720 = vmatprep.subr.mxu0 0.0
    %721 = vmatpush1.xpose.msra.mxu0 0.0
    %722 = vmatprep.subr.mxu0 0.0
    %723 = vmatpush1.xpose.msra.mxu0 0.0
    %724 = vmatprep.subr.mxu0 0.0
    %725 = vmatpush1.xpose.msra.mxu0 0.0
    %726 = vmatprep.subr.mxu0 0.0
    %727 = vmatpush1.xpose.msra.mxu0 0.0
    %728 = vmatprep.subr.mxu0 0.0
    %729 = vmatpush1.xpose.msra.mxu0 0.0
    %730 = vmatprep.subr.mxu0 0.0
    %731 = vmatpush1.xpose.msra.mxu0 0.0
    %732 = vmatprep.subr.mxu0 0.0
    %733 = vmatpush1.xpose.msra.mxu0 0.0
    %734 = vmatprep.subr.mxu0 0.0
    %735 = vmatpush1.xpose.msra.mxu0 0.0
    %736 = vmatprep.subr.mxu0 0.0
    %737 = vmatpush1.xpose.msra.mxu0 0.0
    %738 = vmatprep.subr.mxu0 0.0
    %739 = vmatpush1.xpose.msra.mxu0 0.0
    %v740 = vand.u32 %v59, 4294901760
    %v741 = vsub.f32 %v59, %v740
    %v742 = vand.u32 %v741, 4294901760
    %v743 = vsub.f32 %v741, %v742
    %v744 = vand.u32 %v743, 4294901760
    %745 = vmatprep.subr.mxu0 %v744
    %v746 = vand.u32 %v58, 4294901760
    %v747 = vsub.f32 %v58, %v746
    %v748 = vand.u32 %v747, 4294901760
    %v749 = vsub.f32 %v747, %v748
    %v750 = vand.u32 %v749, 4294901760
    %751 = vmatpush1.xpose.msra.mxu0 %v750
    %752 = vmatprep.subr.mxu0 0.0
    %753 = vmatpush2.xpose.msra.mxu0 0.0
    %754 = vmatprep.subr.mxu0 0.0
    %755 = vmatpush2.xpose.msra.mxu0 0.0
    %756 = vmatprep.subr.mxu0 0.0
    %757 = vmatpush2.xpose.msra.mxu0 0.0
    %758 = vmatprep.subr.mxu0 0.0
    %759 = vmatpush2.xpose.msra.mxu0 0.0
    %760 = vmatprep.subr.mxu0 0.0
    %761 = vmatpush2.xpose.msra.mxu0 0.0
    %762 = vmatprep.subr.mxu0 0.0
    %763 = vmatpush2.xpose.msra.mxu0 0.0
    %764 = vmatprep.subr.mxu0 0.0
    %765 = vmatpush2.xpose.msra.mxu0 0.0
    %766 = vmatprep.subr.mxu0 0.0
    %767 = vmatpush2.xpose.msra.mxu0 0.0
    %768 = vmatprep.subr.mxu0 0.0
    %769 = vmatpush2.xpose.msra.mxu0 0.0
    %770 = vmatprep.subr.mxu0 0.0
    %771 = vmatpush2.xpose.msra.mxu0 0.0
    %772 = vmatprep.subr.mxu0 0.0
    %773 = vmatpush2.xpose.msra.mxu0 0.0
    %774 = vmatprep.subr.mxu0 0.0
    %775 = vmatpush2.xpose.msra.mxu0 0.0
    %776 = vmatprep.subr.mxu0 0.0
    %777 = vmatpush2.xpose.msra.mxu0 0.0
    %778 = vmatprep.subr.mxu0 0.0
    %779 = vmatpush2.xpose.msra.mxu0 0.0
    %780 = vmatprep.subr.mxu0 0.0
    %781 = vmatpush2.xpose.msra.mxu0 0.0
    %782 = vmatprep.subr.mxu0 0.0
    %783 = vmatpush2.xpose.msra.mxu0 0.0
    %v784 = vand.u32 %v45, 4294901760
    %785 = vmatprep.mubr.f32.mxu0 %v784
    %v786 = vand.u32 %v44, 4294901760
    %787 = vmatmul.mubr.f32.gmra.mxu0 %v786
    %v788 = vpop.f32.mrf.mxu0
    %v789 = vadd.f32 %v692, %v788
    %v790 = vpop.f32.mrf.mxu0
    %v791 = vand.u32 %v52, 4294901760
    %792 = vmatprep.mubr.f32.mxu0 %v791
    %v793 = vand.u32 %v51, 4294901760
    %794 = vmatmul.mubr.f32.gmra.mxu0 %v793
    %v795 = vpop.f32.mrf.mxu0
    %v796 = vadd.f32 %v707, %v795
    %v797 = vpop.f32.mrf.mxu0
    %798 = vdwg.mxu0
    %799 = vmatprep.subr.mxu0 0.0
    %800 = vmatpush1.xpose.msra.mxu0 0.0
    %801 = vmatprep.subr.mxu0 0.0
    %802 = vmatpush1.xpose.msra.mxu0 0.0
    %803 = vmatprep.subr.mxu0 0.0
    %804 = vmatpush1.xpose.msra.mxu0 0.0
    %805 = vmatprep.subr.mxu0 0.0
    %806 = vmatpush1.xpose.msra.mxu0 0.0
    %807 = vmatprep.subr.mxu0 0.0
    %808 = vmatpush1.xpose.msra.mxu0 0.0
    %809 = vmatprep.subr.mxu0 0.0
    %810 = vmatpush1.xpose.msra.mxu0 0.0
    %811 = vmatprep.subr.mxu0 0.0
    %812 = vmatpush1.xpose.msra.mxu0 0.0
    %813 = vmatprep.subr.mxu0 0.0
    %814 = vmatpush1.xpose.msra.mxu0 0.0
    %815 = vmatprep.subr.mxu0 0.0
    %816 = vmatpush1.xpose.msra.mxu0 0.0
    %817 = vmatprep.subr.mxu0 0.0
    %818 = vmatpush1.xpose.msra.mxu0 0.0
    %819 = vmatprep.subr.mxu0 0.0
    %820 = vmatpush1.xpose.msra.mxu0 0.0
    %821 = vmatprep.subr.mxu0 0.0
    %822 = vmatpush1.xpose.msra.mxu0 0.0
    %823 = vmatprep.subr.mxu0 0.0
    %824 = vmatpush1.xpose.msra.mxu0 0.0
    %825 = vmatprep.subr.mxu0 0.0
    %826 = vmatpush1.xpose.msra.mxu0 0.0
    %827 = vmatprep.subr.mxu0 0.0
    %828 = vmatpush1.xpose.msra.mxu0 0.0
    %v829 = vand.u32 %v59, 4294901760
    %v830 = vsub.f32 %v59, %v829
    %831 = vmatprep.subr.mxu0 %v830
    %v832 = vand.u32 %v58, 4294901760
    %v833 = vsub.f32 %v58, %v832
    %834 = vmatpush1.xpose.msra.mxu0 %v833
    %835 = vmatprep.subr.mxu0 0.0
    %836 = vmatpush2.xpose.msra.mxu0 0.0
    %837 = vmatprep.subr.mxu0 0.0
    %838 = vmatpush2.xpose.msra.mxu0 0.0
    %839 = vmatprep.subr.mxu0 0.0
    %840 = vmatpush2.xpose.msra.mxu0 0.0
    %841 = vmatprep.subr.mxu0 0.0
    %842 = vmatpush2.xpose.msra.mxu0 0.0
    %843 = vmatprep.subr.mxu0 0.0
    %844 = vmatpush2.xpose.msra.mxu0 0.0
    %845 = vmatprep.subr.mxu0 0.0
    %846 = vmatpush2.xpose.msra.mxu0 0.0
    %847 = vmatprep.subr.mxu0 0.0
    %848 = vmatpush2.xpose.msra.mxu0 0.0
    %849 = vmatprep.subr.mxu0 0.0
    %850 = vmatpush2.xpose.msra.mxu0 0.0
    %851 = vmatprep.subr.mxu0 0.0
    %852 = vmatpush2.xpose.msra.mxu0 0.0
    %853 = vmatprep.subr.mxu0 0.0
    %854 = vmatpush2.xpose.msra.mxu0 0.0
    %855 = vmatprep.subr.mxu0 0.0
    %856 = vmatpush2.xpose.msra.mxu0 0.0
    %857 = vmatprep.subr.mxu0 0.0
    %858 = vmatpush2.xpose.msra.mxu0 0.0
    %859 = vmatprep.subr.mxu0 0.0
    %860 = vmatpush2.xpose.msra.mxu0 0.0
    %861 = vmatprep.subr.mxu0 0.0
    %862 = vmatpush2.xpose.msra.mxu0 0.0
    %863 = vmatprep.subr.mxu0 0.0
    %864 = vmatpush2.xpose.msra.mxu0 0.0
    %865 = vmatprep.subr.mxu0 0.0
    %866 = vmatpush2.xpose.msra.mxu0 0.0
    %v867 = vand.u32 %v45, 4294901760
    %v868 = vsub.f32 %v45, %v867
    %869 = vmatprep.mubr.f32.mxu0 %v868
    %v870 = vand.u32 %v44, 4294901760
    %v871 = vsub.f32 %v44, %v870
    %872 = vmatmul.mubr.f32.gmra.mxu0 %v871
    %v873 = vpop.f32.mrf.mxu0
    %v874 = vadd.f32 %v789, %v873
    %v875 = vpop.f32.mrf.mxu0
    %v876 = vand.u32 %v52, 4294901760
    %v877 = vsub.f32 %v52, %v876
    %878 = vmatprep.mubr.f32.mxu0 %v877
    %v879 = vand.u32 %v51, 4294901760
    %v880 = vsub.f32 %v51, %v879
    %881 = vmatmul.mubr.f32.gmra.mxu0 %v880
    %v882 = vpop.f32.mrf.mxu0
    %v883 = vadd.f32 %v796, %v882
    %v884 = vpop.f32.mrf.mxu0
    %885 = vdwg.mxu0
    %886 = vmatprep.subr.mxu0 0.0
    %887 = vmatpush1.xpose.msra.mxu0 0.0
    %888 = vmatprep.subr.mxu0 0.0
    %889 = vmatpush1.xpose.msra.mxu0 0.0
    %890 = vmatprep.subr.mxu0 0.0
    %891 = vmatpush1.xpose.msra.mxu0 0.0
    %892 = vmatprep.subr.mxu0 0.0
    %893 = vmatpush1.xpose.msra.mxu0 0.0
    %894 = vmatprep.subr.mxu0 0.0
    %895 = vmatpush1.xpose.msra.mxu0 0.0
    %896 = vmatprep.subr.mxu0 0.0
    %897 = vmatpush1.xpose.msra.mxu0 0.0
    %898 = vmatprep.subr.mxu0 0.0
    %899 = vmatpush1.xpose.msra.mxu0 0.0
    %900 = vmatprep.subr.mxu0 0.0
    %901 = vmatpush1.xpose.msra.mxu0 0.0
    %902 = vmatprep.subr.mxu0 0.0
    %903 = vmatpush1.xpose.msra.mxu0 0.0
    %904 = vmatprep.subr.mxu0 0.0
    %905 = vmatpush1.xpose.msra.mxu0 0.0
    %906 = vmatprep.subr.mxu0 0.0
    %907 = vmatpush1.xpose.msra.mxu0 0.0
    %908 = vmatprep.subr.mxu0 0.0
    %909 = vmatpush1.xpose.msra.mxu0 0.0
    %910 = vmatprep.subr.mxu0 0.0
    %911 = vmatpush1.xpose.msra.mxu0 0.0
    %912 = vmatprep.subr.mxu0 0.0
    %913 = vmatpush1.xpose.msra.mxu0 0.0
    %914 = vmatprep.subr.mxu0 0.0
    %915 = vmatpush1.xpose.msra.mxu0 0.0
    %v916 = vand.u32 %v59, 4294901760
    %917 = vmatprep.subr.mxu0 %v916
    %v918 = vand.u32 %v58, 4294901760
    %919 = vmatpush1.xpose.msra.mxu0 %v918
    %920 = vmatprep.subr.mxu0 0.0
    %921 = vmatpush2.xpose.msra.mxu0 0.0
    %922 = vmatprep.subr.mxu0 0.0
    %923 = vmatpush2.xpose.msra.mxu0 0.0
    %924 = vmatprep.subr.mxu0 0.0
    %925 = vmatpush2.xpose.msra.mxu0 0.0
    %926 = vmatprep.subr.mxu0 0.0
    %927 = vmatpush2.xpose.msra.mxu0 0.0
    %928 = vmatprep.subr.mxu0 0.0
    %929 = vmatpush2.xpose.msra.mxu0 0.0
    %930 = vmatprep.subr.mxu0 0.0
    %931 = vmatpush2.xpose.msra.mxu0 0.0
    %932 = vmatprep.subr.mxu0 0.0
    %933 = vmatpush2.xpose.msra.mxu0 0.0
    %934 = vmatprep.subr.mxu0 0.0
    %935 = vmatpush2.xpose.msra.mxu0 0.0
    %936 = vmatprep.subr.mxu0 0.0
    %937 = vmatpush2.xpose.msra.mxu0 0.0
    %938 = vmatprep.subr.mxu0 0.0
    %939 = vmatpush2.xpose.msra.mxu0 0.0
    %940 = vmatprep.subr.mxu0 0.0
    %941 = vmatpush2.xpose.msra.mxu0 0.0
    %942 = vmatprep.subr.mxu0 0.0
    %943 = vmatpush2.xpose.msra.mxu0 0.0
    %944 = vmatprep.subr.mxu0 0.0
    %945 = vmatpush2.xpose.msra.mxu0 0.0
    %946 = vmatprep.subr.mxu0 0.0
    %947 = vmatpush2.xpose.msra.mxu0 0.0
    %948 = vmatprep.subr.mxu0 0.0
    %949 = vmatpush2.xpose.msra.mxu0 0.0
    %950 = vmatprep.subr.mxu0 0.0
    %951 = vmatpush2.xpose.msra.mxu0 0.0
    %v952 = vand.u32 %v45, 4294901760
    %v953 = vsub.f32 %v45, %v952
    %v954 = vand.u32 %v953, 4294901760
    %955 = vmatprep.mubr.f32.mxu0 %v954
    %v956 = vand.u32 %v44, 4294901760
    %v957 = vsub.f32 %v44, %v956
    %v958 = vand.u32 %v957, 4294901760
    %959 = vmatmul.mubr.f32.gmra.mxu0 %v958
    %v960 = vpop.f32.mrf.mxu0
    %v961 = vadd.f32 %v874, %v960
    %v962 = vpop.f32.mrf.mxu0
    %v963 = vand.u32 %v52, 4294901760
    %v964 = vsub.f32 %v52, %v963
    %v965 = vand.u32 %v964, 4294901760
    %966 = vmatprep.mubr.f32.mxu0 %v965
    %v967 = vand.u32 %v51, 4294901760
    %v968 = vsub.f32 %v51, %v967
    %v969 = vand.u32 %v968, 4294901760
    %970 = vmatmul.mubr.f32.gmra.mxu0 %v969
    %v971 = vpop.f32.mrf.mxu0
    %v972 = vadd.f32 %v883, %v971
    %v973 = vpop.f32.mrf.mxu0
    %974 = vdwg.mxu0
    %975 = vmatprep.subr.mxu0 0.0
    %976 = vmatpush1.xpose.msra.mxu0 0.0
    %977 = vmatprep.subr.mxu0 0.0
    %978 = vmatpush1.xpose.msra.mxu0 0.0
    %979 = vmatprep.subr.mxu0 0.0
    %980 = vmatpush1.xpose.msra.mxu0 0.0
    %981 = vmatprep.subr.mxu0 0.0
    %982 = vmatpush1.xpose.msra.mxu0 0.0
    %983 = vmatprep.subr.mxu0 0.0
    %984 = vmatpush1.xpose.msra.mxu0 0.0
    %985 = vmatprep.subr.mxu0 0.0
    %986 = vmatpush1.xpose.msra.mxu0 0.0
    %987 = vmatprep.subr.mxu0 0.0
    %988 = vmatpush1.xpose.msra.mxu0 0.0
    %989 = vmatprep.subr.mxu0 0.0
    %990 = vmatpush1.xpose.msra.mxu0 0.0
    %991 = vmatprep.subr.mxu0 0.0
    %992 = vmatpush1.xpose.msra.mxu0 0.0
    %993 = vmatprep.subr.mxu0 0.0
    %994 = vmatpush1.xpose.msra.mxu0 0.0
    %995 = vmatprep.subr.mxu0 0.0
    %996 = vmatpush1.xpose.msra.mxu0 0.0
    %997 = vmatprep.subr.mxu0 0.0
    %998 = vmatpush1.xpose.msra.mxu0 0.0
    %999 = vmatprep.subr.mxu0 0.0
    %1000 = vmatpush1.xpose.msra.mxu0 0.0
    %1001 = vmatprep.subr.mxu0 0.0
    %1002 = vmatpush1.xpose.msra.mxu0 0.0
    %1003 = vmatprep.subr.mxu0 0.0
    %1004 = vmatpush1.xpose.msra.mxu0 0.0
    %v1005 = vand.u32 %v59, 4294901760
    %v1006 = vsub.f32 %v59, %v1005
    %v1007 = vand.u32 %v1006, 4294901760
    %1008 = vmatprep.subr.mxu0 %v1007
    %v1009 = vand.u32 %v58, 4294901760
    %v1010 = vsub.f32 %v58, %v1009
    %v1011 = vand.u32 %v1010, 4294901760
    %1012 = vmatpush1.xpose.msra.mxu0 %v1011
    %1013 = vmatprep.subr.mxu0 0.0
    %1014 = vmatpush2.xpose.msra.mxu0 0.0
    %1015 = vmatprep.subr.mxu0 0.0
    %1016 = vmatpush2.xpose.msra.mxu0 0.0
    %1017 = vmatprep.subr.mxu0 0.0
    %1018 = vmatpush2.xpose.msra.mxu0 0.0
    %1019 = vmatprep.subr.mxu0 0.0
    %1020 = vmatpush2.xpose.msra.mxu0 0.0
    %1021 = vmatprep.subr.mxu0 0.0
    %1022 = vmatpush2.xpose.msra.mxu0 0.0
    %1023 = vmatprep.subr.mxu0 0.0
    %1024 = vmatpush2.xpose.msra.mxu0 0.0
    %1025 = vmatprep.subr.mxu0 0.0
    %1026 = vmatpush2.xpose.msra.mxu0 0.0
    %1027 = vmatprep.subr.mxu0 0.0
    %1028 = vmatpush2.xpose.msra.mxu0 0.0
    %1029 = vmatprep.subr.mxu0 0.0
    %1030 = vmatpush2.xpose.msra.mxu0 0.0
    %1031 = vmatprep.subr.mxu0 0.0
    %1032 = vmatpush2.xpose.msra.mxu0 0.0
    %1033 = vmatprep.subr.mxu0 0.0
    %1034 = vmatpush2.xpose.msra.mxu0 0.0
    %1035 = vmatprep.subr.mxu0 0.0
    %1036 = vmatpush2.xpose.msra.mxu0 0.0
    %1037 = vmatprep.subr.mxu0 0.0
    %1038 = vmatpush2.xpose.msra.mxu0 0.0
    %1039 = vmatprep.subr.mxu0 0.0
    %1040 = vmatpush2.xpose.msra.mxu0 0.0
    %1041 = vmatprep.subr.mxu0 0.0
    %1042 = vmatpush2.xpose.msra.mxu0 0.0
    %1043 = vmatprep.subr.mxu0 0.0
    %1044 = vmatpush2.xpose.msra.mxu0 0.0
    %v1045 = vand.u32 %v45, 4294901760
    %1046 = vmatprep.mubr.f32.mxu0 %v1045
    %v1047 = vand.u32 %v44, 4294901760
    %1048 = vmatmul.mubr.f32.gmra.mxu0 %v1047
    %v1049 = vpop.f32.mrf.mxu0
    %v1050 = vadd.f32 %v961, %v1049
    %v1051 = vpop.f32.mrf.mxu0
    %v1052 = vand.u32 %v52, 4294901760
    %1053 = vmatprep.mubr.f32.mxu0 %v1052
    %v1054 = vand.u32 %v51, 4294901760
    %1055 = vmatmul.mubr.f32.gmra.mxu0 %v1054
    %v1056 = vpop.f32.mrf.mxu0
    %v1057 = vadd.f32 %v972, %v1056
    %v1058 = vpop.f32.mrf.mxu0
    %1059 = vdwg.mxu0
    %1060 = vmatprep.subr.mxu0 0.0
    %1061 = vmatpush1.xpose.msra.mxu0 0.0
    %1062 = vmatprep.subr.mxu0 0.0
    %1063 = vmatpush1.xpose.msra.mxu0 0.0
    %1064 = vmatprep.subr.mxu0 0.0
    %1065 = vmatpush1.xpose.msra.mxu0 0.0
    %1066 = vmatprep.subr.mxu0 0.0
    %1067 = vmatpush1.xpose.msra.mxu0 0.0
    %1068 = vmatprep.subr.mxu0 0.0
    %1069 = vmatpush1.xpose.msra.mxu0 0.0
    %1070 = vmatprep.subr.mxu0 0.0
    %1071 = vmatpush1.xpose.msra.mxu0 0.0
    %1072 = vmatprep.subr.mxu0 0.0
    %1073 = vmatpush1.xpose.msra.mxu0 0.0
    %1074 = vmatprep.subr.mxu0 0.0
    %1075 = vmatpush1.xpose.msra.mxu0 0.0
    %1076 = vmatprep.subr.mxu0 0.0
    %1077 = vmatpush1.xpose.msra.mxu0 0.0
    %1078 = vmatprep.subr.mxu0 0.0
    %1079 = vmatpush1.xpose.msra.mxu0 0.0
    %1080 = vmatprep.subr.mxu0 0.0
    %1081 = vmatpush1.xpose.msra.mxu0 0.0
    %1082 = vmatprep.subr.mxu0 0.0
    %1083 = vmatpush1.xpose.msra.mxu0 0.0
    %1084 = vmatprep.subr.mxu0 0.0
    %1085 = vmatpush1.xpose.msra.mxu0 0.0
    %1086 = vmatprep.subr.mxu0 0.0
    %1087 = vmatpush1.xpose.msra.mxu0 0.0
    %1088 = vmatprep.subr.mxu0 0.0
    %1089 = vmatpush1.xpose.msra.mxu0 0.0
    %v1090 = vand.u32 %v59, 4294901760
    %1091 = vmatprep.subr.mxu0 %v1090
    %v1092 = vand.u32 %v58, 4294901760
    %1093 = vmatpush1.xpose.msra.mxu0 %v1092
    %1094 = vmatprep.subr.mxu0 0.0
    %1095 = vmatpush2.xpose.msra.mxu0 0.0
    %1096 = vmatprep.subr.mxu0 0.0
    %1097 = vmatpush2.xpose.msra.mxu0 0.0
    %1098 = vmatprep.subr.mxu0 0.0
    %1099 = vmatpush2.xpose.msra.mxu0 0.0
    %1100 = vmatprep.subr.mxu0 0.0
    %1101 = vmatpush2.xpose.msra.mxu0 0.0
    %1102 = vmatprep.subr.mxu0 0.0
    %1103 = vmatpush2.xpose.msra.mxu0 0.0
    %1104 = vmatprep.subr.mxu0 0.0
    %1105 = vmatpush2.xpose.msra.mxu0 0.0
    %1106 = vmatprep.subr.mxu0 0.0
    %1107 = vmatpush2.xpose.msra.mxu0 0.0
    %1108 = vmatprep.subr.mxu0 0.0
    %1109 = vmatpush2.xpose.msra.mxu0 0.0
    %1110 = vmatprep.subr.mxu0 0.0
    %1111 = vmatpush2.xpose.msra.mxu0 0.0
    %1112 = vmatprep.subr.mxu0 0.0
    %1113 = vmatpush2.xpose.msra.mxu0 0.0
    %1114 = vmatprep.subr.mxu0 0.0
    %1115 = vmatpush2.xpose.msra.mxu0 0.0
    %1116 = vmatprep.subr.mxu0 0.0
    %1117 = vmatpush2.xpose.msra.mxu0 0.0
    %1118 = vmatprep.subr.mxu0 0.0
    %1119 = vmatpush2.xpose.msra.mxu0 0.0
    %1120 = vmatprep.subr.mxu0 0.0
    %1121 = vmatpush2.xpose.msra.mxu0 0.0
    %1122 = vmatprep.subr.mxu0 0.0
    %1123 = vmatpush2.xpose.msra.mxu0 0.0
    %1124 = vmatprep.subr.mxu0 0.0
    %1125 = vmatpush2.xpose.msra.mxu0 0.0
    %v1126 = vand.u32 %v45, 4294901760
    %1127 = vmatprep.mubr.f32.mxu0 %v1126
    %v1128 = vand.u32 %v44, 4294901760
    %1129 = vmatmul.mubr.f32.gmra.mxu0 %v1128
    %v1130 = vpop.f32.mrf.mxu0
    %v1131 = vadd.f32 %v1050, %v1130
    %v1132 = vpop.f32.mrf.mxu0
    %v1133 = vand.u32 %v52, 4294901760
    %1134 = vmatprep.mubr.f32.mxu0 %v1133
    %v1135 = vand.u32 %v51, 4294901760
    %1136 = vmatmul.mubr.f32.gmra.mxu0 %v1135
    %v1137 = vpop.f32.mrf.mxu0
    %v1138 = vadd.f32 %v1057, %v1137
    %v1139 = vpop.f32.mrf.mxu0
    %1140 = vdwg.mxu0
    %1141 = vmatprep.subr.mxu0 0.0
    %1142 = vmatpush1.xpose.msra.mxu0 0.0
    %1143 = vmatprep.subr.mxu0 0.0
    %1144 = vmatpush1.xpose.msra.mxu0 0.0
    %1145 = vmatprep.subr.mxu0 0.0
    %1146 = vmatpush1.xpose.msra.mxu0 0.0
    %1147 = vmatprep.subr.mxu0 0.0
    %1148 = vmatpush1.xpose.msra.mxu0 0.0
    %1149 = vmatprep.subr.mxu0 0.0
    %1150 = vmatpush1.xpose.msra.mxu0 0.0
    %1151 = vmatprep.subr.mxu0 0.0
    %1152 = vmatpush1.xpose.msra.mxu0 0.0
    %1153 = vmatprep.subr.mxu0 0.0
    %1154 = vmatpush1.xpose.msra.mxu0 0.0
    %1155 = vmatprep.subr.mxu0 0.0
    %1156 = vmatpush1.xpose.msra.mxu0 0.0
    %1157 = vmatprep.subr.mxu0 0.0
    %1158 = vmatpush1.xpose.msra.mxu0 0.0
    %1159 = vmatprep.subr.mxu0 0.0
    %1160 = vmatpush1.xpose.msra.mxu0 0.0
    %1161 = vmatprep.subr.mxu0 0.0
    %1162 = vmatpush1.xpose.msra.mxu0 0.0
    %1163 = vmatprep.subr.mxu0 0.0
    %1164 = vmatpush1.xpose.msra.mxu0 0.0
    %1165 = vmatprep.subr.mxu0 0.0
    %1166 = vmatpush1.xpose.msra.mxu0 0.0
    %1167 = vmatprep.subr.mxu0 0.0
    %1168 = vmatpush1.xpose.msra.mxu0 0.0
    %1169 = vmatprep.subr.mxu0 0.0
    %1170 = vmatpush1.xpose.msra.mxu0 0.0
    %v1171 = vand.u32 %v61, 4294901760
    %1172 = vmatprep.subr.mxu0 %v1171
    %v1173 = vand.u32 %v60, 4294901760
    %1174 = vmatpush1.xpose.msra.mxu0 %v1173
    %1175 = vmatprep.subr.mxu0 0.0
    %1176 = vmatpush2.xpose.msra.mxu0 0.0
    %1177 = vmatprep.subr.mxu0 0.0
    %1178 = vmatpush2.xpose.msra.mxu0 0.0
    %1179 = vmatprep.subr.mxu0 0.0
    %1180 = vmatpush2.xpose.msra.mxu0 0.0
    %1181 = vmatprep.subr.mxu0 0.0
    %1182 = vmatpush2.xpose.msra.mxu0 0.0
    %1183 = vmatprep.subr.mxu0 0.0
    %1184 = vmatpush2.xpose.msra.mxu0 0.0
    %1185 = vmatprep.subr.mxu0 0.0
    %1186 = vmatpush2.xpose.msra.mxu0 0.0
    %1187 = vmatprep.subr.mxu0 0.0
    %1188 = vmatpush2.xpose.msra.mxu0 0.0
    %1189 = vmatprep.subr.mxu0 0.0
    %1190 = vmatpush2.xpose.msra.mxu0 0.0
    %1191 = vmatprep.subr.mxu0 0.0
    %1192 = vmatpush2.xpose.msra.mxu0 0.0
    %1193 = vmatprep.subr.mxu0 0.0
    %1194 = vmatpush2.xpose.msra.mxu0 0.0
    %1195 = vmatprep.subr.mxu0 0.0
    %1196 = vmatpush2.xpose.msra.mxu0 0.0
    %1197 = vmatprep.subr.mxu0 0.0
    %1198 = vmatpush2.xpose.msra.mxu0 0.0
    %1199 = vmatprep.subr.mxu0 0.0
    %1200 = vmatpush2.xpose.msra.mxu0 0.0
    %1201 = vmatprep.subr.mxu0 0.0
    %1202 = vmatpush2.xpose.msra.mxu0 0.0
    %1203 = vmatprep.subr.mxu0 0.0
    %1204 = vmatpush2.xpose.msra.mxu0 0.0
    %1205 = vmatprep.subr.mxu0 0.0
    %1206 = vmatpush2.xpose.msra.mxu0 0.0
    %v1207 = vand.u32 %v47, 4294901760
    %v1208 = vsub.f32 %v47, %v1207
    %v1209 = vand.u32 %v1208, 4294901760
    %v1210 = vsub.f32 %v1208, %v1209
    %v1211 = vand.u32 %v1210, 4294901760
    %1212 = vmatprep.mubr.f32.mxu0 %v1211
    %v1213 = vand.u32 %v46, 4294901760
    %v1214 = vsub.f32 %v46, %v1213
    %v1215 = vand.u32 %v1214, 4294901760
    %v1216 = vsub.f32 %v1214, %v1215
    %v1217 = vand.u32 %v1216, 4294901760
    %1218 = vmatmul.mubr.f32.gmra.mxu0 %v1217
    %v1219 = vpop.f32.mrf.mxu0
    %v1220 = vadd.f32 %v1131, %v1219
    %v1221 = vpop.f32.mrf.mxu0
    %v1222 = vand.u32 %v54, 4294901760
    %v1223 = vsub.f32 %v54, %v1222
    %v1224 = vand.u32 %v1223, 4294901760
    %v1225 = vsub.f32 %v1223, %v1224
    %v1226 = vand.u32 %v1225, 4294901760
    %1227 = vmatprep.mubr.f32.mxu0 %v1226
    %v1228 = vand.u32 %v53, 4294901760
    %v1229 = vsub.f32 %v53, %v1228
    %v1230 = vand.u32 %v1229, 4294901760
    %v1231 = vsub.f32 %v1229, %v1230
    %v1232 = vand.u32 %v1231, 4294901760
    %1233 = vmatmul.mubr.f32.gmra.mxu0 %v1232
    %v1234 = vpop.f32.mrf.mxu0
    %v1235 = vadd.f32 %v1138, %v1234
    %v1236 = vpop.f32.mrf.mxu0
    %1237 = vdwg.mxu0
    %1238 = vmatprep.subr.mxu0 0.0
    %1239 = vmatpush1.xpose.msra.mxu0 0.0
    %1240 = vmatprep.subr.mxu0 0.0
    %1241 = vmatpush1.xpose.msra.mxu0 0.0
    %1242 = vmatprep.subr.mxu0 0.0
    %1243 = vmatpush1.xpose.msra.mxu0 0.0
    %1244 = vmatprep.subr.mxu0 0.0
    %1245 = vmatpush1.xpose.msra.mxu0 0.0
    %1246 = vmatprep.subr.mxu0 0.0
    %1247 = vmatpush1.xpose.msra.mxu0 0.0
    %1248 = vmatprep.subr.mxu0 0.0
    %1249 = vmatpush1.xpose.msra.mxu0 0.0
    %1250 = vmatprep.subr.mxu0 0.0
    %1251 = vmatpush1.xpose.msra.mxu0 0.0
    %1252 = vmatprep.subr.mxu0 0.0
    %1253 = vmatpush1.xpose.msra.mxu0 0.0
    %1254 = vmatprep.subr.mxu0 0.0
    %1255 = vmatpush1.xpose.msra.mxu0 0.0
    %1256 = vmatprep.subr.mxu0 0.0
    %1257 = vmatpush1.xpose.msra.mxu0 0.0
    %1258 = vmatprep.subr.mxu0 0.0
    %1259 = vmatpush1.xpose.msra.mxu0 0.0
    %1260 = vmatprep.subr.mxu0 0.0
    %1261 = vmatpush1.xpose.msra.mxu0 0.0
    %1262 = vmatprep.subr.mxu0 0.0
    %1263 = vmatpush1.xpose.msra.mxu0 0.0
    %1264 = vmatprep.subr.mxu0 0.0
    %1265 = vmatpush1.xpose.msra.mxu0 0.0
    %1266 = vmatprep.subr.mxu0 0.0
    %1267 = vmatpush1.xpose.msra.mxu0 0.0
    %v1268 = vand.u32 %v61, 4294901760
    %v1269 = vsub.f32 %v61, %v1268
    %v1270 = vand.u32 %v1269, 4294901760
    %v1271 = vsub.f32 %v1269, %v1270
    %v1272 = vand.u32 %v1271, 4294901760
    %1273 = vmatprep.subr.mxu0 %v1272
    %v1274 = vand.u32 %v60, 4294901760
    %v1275 = vsub.f32 %v60, %v1274
    %v1276 = vand.u32 %v1275, 4294901760
    %v1277 = vsub.f32 %v1275, %v1276
    %v1278 = vand.u32 %v1277, 4294901760
    %1279 = vmatpush1.xpose.msra.mxu0 %v1278
    %1280 = vmatprep.subr.mxu0 0.0
    %1281 = vmatpush2.xpose.msra.mxu0 0.0
    %1282 = vmatprep.subr.mxu0 0.0
    %1283 = vmatpush2.xpose.msra.mxu0 0.0
    %1284 = vmatprep.subr.mxu0 0.0
    %1285 = vmatpush2.xpose.msra.mxu0 0.0
    %1286 = vmatprep.subr.mxu0 0.0
    %1287 = vmatpush2.xpose.msra.mxu0 0.0
    %1288 = vmatprep.subr.mxu0 0.0
    %1289 = vmatpush2.xpose.msra.mxu0 0.0
    %1290 = vmatprep.subr.mxu0 0.0
    %1291 = vmatpush2.xpose.msra.mxu0 0.0
    %1292 = vmatprep.subr.mxu0 0.0
    %1293 = vmatpush2.xpose.msra.mxu0 0.0
    %1294 = vmatprep.subr.mxu0 0.0
    %1295 = vmatpush2.xpose.msra.mxu0 0.0
    %1296 = vmatprep.subr.mxu0 0.0
    %1297 = vmatpush2.xpose.msra.mxu0 0.0
    %1298 = vmatprep.subr.mxu0 0.0
    %1299 = vmatpush2.xpose.msra.mxu0 0.0
    %1300 = vmatprep.subr.mxu0 0.0
    %1301 = vmatpush2.xpose.msra.mxu0 0.0
    %1302 = vmatprep.subr.mxu0 0.0
    %1303 = vmatpush2.xpose.msra.mxu0 0.0
    %1304 = vmatprep.subr.mxu0 0.0
    %1305 = vmatpush2.xpose.msra.mxu0 0.0
    %1306 = vmatprep.subr.mxu0 0.0
    %1307 = vmatpush2.xpose.msra.mxu0 0.0
    %1308 = vmatprep.subr.mxu0 0.0
    %1309 = vmatpush2.xpose.msra.mxu0 0.0
    %1310 = vmatprep.subr.mxu0 0.0
    %1311 = vmatpush2.xpose.msra.mxu0 0.0
    %v1312 = vand.u32 %v47, 4294901760
    %1313 = vmatprep.mubr.f32.mxu0 %v1312
    %v1314 = vand.u32 %v46, 4294901760
    %1315 = vmatmul.mubr.f32.gmra.mxu0 %v1314
    %v1316 = vpop.f32.mrf.mxu0
    %v1317 = vadd.f32 %v1220, %v1316
    %v1318 = vpop.f32.mrf.mxu0
    %v1319 = vand.u32 %v54, 4294901760
    %1320 = vmatprep.mubr.f32.mxu0 %v1319
    %v1321 = vand.u32 %v53, 4294901760
    %1322 = vmatmul.mubr.f32.gmra.mxu0 %v1321
    %v1323 = vpop.f32.mrf.mxu0
    %v1324 = vadd.f32 %v1235, %v1323
    %v1325 = vpop.f32.mrf.mxu0
    %1326 = vdwg.mxu0
    %1327 = vmatprep.subr.mxu0 0.0
    %1328 = vmatpush1.xpose.msra.mxu0 0.0
    %1329 = vmatprep.subr.mxu0 0.0
    %1330 = vmatpush1.xpose.msra.mxu0 0.0
    %1331 = vmatprep.subr.mxu0 0.0
    %1332 = vmatpush1.xpose.msra.mxu0 0.0
    %1333 = vmatprep.subr.mxu0 0.0
    %1334 = vmatpush1.xpose.msra.mxu0 0.0
    %1335 = vmatprep.subr.mxu0 0.0
    %1336 = vmatpush1.xpose.msra.mxu0 0.0
    %1337 = vmatprep.subr.mxu0 0.0
    %1338 = vmatpush1.xpose.msra.mxu0 0.0
    %1339 = vmatprep.subr.mxu0 0.0
    %1340 = vmatpush1.xpose.msra.mxu0 0.0
    %1341 = vmatprep.subr.mxu0 0.0
    %1342 = vmatpush1.xpose.msra.mxu0 0.0
    %1343 = vmatprep.subr.mxu0 0.0
    %1344 = vmatpush1.xpose.msra.mxu0 0.0
    %1345 = vmatprep.subr.mxu0 0.0
    %1346 = vmatpush1.xpose.msra.mxu0 0.0
    %1347 = vmatprep.subr.mxu0 0.0
    %1348 = vmatpush1.xpose.msra.mxu0 0.0
    %1349 = vmatprep.subr.mxu0 0.0
    %1350 = vmatpush1.xpose.msra.mxu0 0.0
    %1351 = vmatprep.subr.mxu0 0.0
    %1352 = vmatpush1.xpose.msra.mxu0 0.0
    %1353 = vmatprep.subr.mxu0 0.0
    %1354 = vmatpush1.xpose.msra.mxu0 0.0
    %1355 = vmatprep.subr.mxu0 0.0
    %1356 = vmatpush1.xpose.msra.mxu0 0.0
    %v1357 = vand.u32 %v61, 4294901760
    %v1358 = vsub.f32 %v61, %v1357
    %1359 = vmatprep.subr.mxu0 %v1358
    %v1360 = vand.u32 %v60, 4294901760
    %v1361 = vsub.f32 %v60, %v1360
    %1362 = vmatpush1.xpose.msra.mxu0 %v1361
    %1363 = vmatprep.subr.mxu0 0.0
    %1364 = vmatpush2.xpose.msra.mxu0 0.0
    %1365 = vmatprep.subr.mxu0 0.0
    %1366 = vmatpush2.xpose.msra.mxu0 0.0
    %1367 = vmatprep.subr.mxu0 0.0
    %1368 = vmatpush2.xpose.msra.mxu0 0.0
    %1369 = vmatprep.subr.mxu0 0.0
    %1370 = vmatpush2.xpose.msra.mxu0 0.0
    %1371 = vmatprep.subr.mxu0 0.0
    %1372 = vmatpush2.xpose.msra.mxu0 0.0
    %1373 = vmatprep.subr.mxu0 0.0
    %1374 = vmatpush2.xpose.msra.mxu0 0.0
    %1375 = vmatprep.subr.mxu0 0.0
    %1376 = vmatpush2.xpose.msra.mxu0 0.0
    %1377 = vmatprep.subr.mxu0 0.0
    %1378 = vmatpush2.xpose.msra.mxu0 0.0
    %1379 = vmatprep.subr.mxu0 0.0
    %1380 = vmatpush2.xpose.msra.mxu0 0.0
    %1381 = vmatprep.subr.mxu0 0.0
    %1382 = vmatpush2.xpose.msra.mxu0 0.0
    %1383 = vmatprep.subr.mxu0 0.0
    %1384 = vmatpush2.xpose.msra.mxu0 0.0
    %1385 = vmatprep.subr.mxu0 0.0
    %1386 = vmatpush2.xpose.msra.mxu0 0.0
    %1387 = vmatprep.subr.mxu0 0.0
    %1388 = vmatpush2.xpose.msra.mxu0 0.0
    %1389 = vmatprep.subr.mxu0 0.0
    %1390 = vmatpush2.xpose.msra.mxu0 0.0
    %1391 = vmatprep.subr.mxu0 0.0
    %1392 = vmatpush2.xpose.msra.mxu0 0.0
    %1393 = vmatprep.subr.mxu0 0.0
    %1394 = vmatpush2.xpose.msra.mxu0 0.0
    %v1395 = vand.u32 %v47, 4294901760
    %v1396 = vsub.f32 %v47, %v1395
    %1397 = vmatprep.mubr.f32.mxu0 %v1396
    %v1398 = vand.u32 %v46, 4294901760
    %v1399 = vsub.f32 %v46, %v1398
    %1400 = vmatmul.mubr.f32.gmra.mxu0 %v1399
    %v1401 = vpop.f32.mrf.mxu0
    %v1402 = vadd.f32 %v1317, %v1401
    %v1403 = vpop.f32.mrf.mxu0
    %v1404 = vand.u32 %v54, 4294901760
    %v1405 = vsub.f32 %v54, %v1404
    %1406 = vmatprep.mubr.f32.mxu0 %v1405
    %v1407 = vand.u32 %v53, 4294901760
    %v1408 = vsub.f32 %v53, %v1407
    %1409 = vmatmul.mubr.f32.gmra.mxu0 %v1408
    %v1410 = vpop.f32.mrf.mxu0
    %v1411 = vadd.f32 %v1324, %v1410
    %v1412 = vpop.f32.mrf.mxu0
    %1413 = vdwg.mxu0
    %1414 = vmatprep.subr.mxu0 0.0
    %1415 = vmatpush1.xpose.msra.mxu0 0.0
    %1416 = vmatprep.subr.mxu0 0.0
    %1417 = vmatpush1.xpose.msra.mxu0 0.0
    %1418 = vmatprep.subr.mxu0 0.0
    %1419 = vmatpush1.xpose.msra.mxu0 0.0
    %1420 = vmatprep.subr.mxu0 0.0
    %1421 = vmatpush1.xpose.msra.mxu0 0.0
    %1422 = vmatprep.subr.mxu0 0.0
    %1423 = vmatpush1.xpose.msra.mxu0 0.0
    %1424 = vmatprep.subr.mxu0 0.0
    %1425 = vmatpush1.xpose.msra.mxu0 0.0
    %1426 = vmatprep.subr.mxu0 0.0
    %1427 = vmatpush1.xpose.msra.mxu0 0.0
    %1428 = vmatprep.subr.mxu0 0.0
    %1429 = vmatpush1.xpose.msra.mxu0 0.0
    %1430 = vmatprep.subr.mxu0 0.0
    %1431 = vmatpush1.xpose.msra.mxu0 0.0
    %1432 = vmatprep.subr.mxu0 0.0
    %1433 = vmatpush1.xpose.msra.mxu0 0.0
    %1434 = vmatprep.subr.mxu0 0.0
    %1435 = vmatpush1.xpose.msra.mxu0 0.0
    %1436 = vmatprep.subr.mxu0 0.0
    %1437 = vmatpush1.xpose.msra.mxu0 0.0
    %1438 = vmatprep.subr.mxu0 0.0
    %1439 = vmatpush1.xpose.msra.mxu0 0.0
    %1440 = vmatprep.subr.mxu0 0.0
    %1441 = vmatpush1.xpose.msra.mxu0 0.0
    %1442 = vmatprep.subr.mxu0 0.0
    %1443 = vmatpush1.xpose.msra.mxu0 0.0
    %v1444 = vand.u32 %v61, 4294901760
    %1445 = vmatprep.subr.mxu0 %v1444
    %v1446 = vand.u32 %v60, 4294901760
    %1447 = vmatpush1.xpose.msra.mxu0 %v1446
    %1448 = vmatprep.subr.mxu0 0.0
    %1449 = vmatpush2.xpose.msra.mxu0 0.0
    %1450 = vmatprep.subr.mxu0 0.0
    %1451 = vmatpush2.xpose.msra.mxu0 0.0
    %1452 = vmatprep.subr.mxu0 0.0
    %1453 = vmatpush2.xpose.msra.mxu0 0.0
    %1454 = vmatprep.subr.mxu0 0.0
    %1455 = vmatpush2.xpose.msra.mxu0 0.0
    %1456 = vmatprep.subr.mxu0 0.0
    %1457 = vmatpush2.xpose.msra.mxu0 0.0
    %1458 = vmatprep.subr.mxu0 0.0
    %1459 = vmatpush2.xpose.msra.mxu0 0.0
    %1460 = vmatprep.subr.mxu0 0.0
    %1461 = vmatpush2.xpose.msra.mxu0 0.0
    %1462 = vmatprep.subr.mxu0 0.0
    %1463 = vmatpush2.xpose.msra.mxu0 0.0
    %1464 = vmatprep.subr.mxu0 0.0
    %1465 = vmatpush2.xpose.msra.mxu0 0.0
    %1466 = vmatprep.subr.mxu0 0.0
    %1467 = vmatpush2.xpose.msra.mxu0 0.0
    %1468 = vmatprep.subr.mxu0 0.0
    %1469 = vmatpush2.xpose.msra.mxu0 0.0
    %1470 = vmatprep.subr.mxu0 0.0
    %1471 = vmatpush2.xpose.msra.mxu0 0.0
    %1472 = vmatprep.subr.mxu0 0.0
    %1473 = vmatpush2.xpose.msra.mxu0 0.0
    %1474 = vmatprep.subr.mxu0 0.0
    %1475 = vmatpush2.xpose.msra.mxu0 0.0
    %1476 = vmatprep.subr.mxu0 0.0
    %1477 = vmatpush2.xpose.msra.mxu0 0.0
    %1478 = vmatprep.subr.mxu0 0.0
    %1479 = vmatpush2.xpose.msra.mxu0 0.0
    %v1480 = vand.u32 %v47, 4294901760
    %v1481 = vsub.f32 %v47, %v1480
    %v1482 = vand.u32 %v1481, 4294901760
    %1483 = vmatprep.mubr.f32.mxu0 %v1482
    %v1484 = vand.u32 %v46, 4294901760
    %v1485 = vsub.f32 %v46, %v1484
    %v1486 = vand.u32 %v1485, 4294901760
    %1487 = vmatmul.mubr.f32.gmra.mxu0 %v1486
    %v1488 = vpop.f32.mrf.mxu0
    %v1489 = vadd.f32 %v1402, %v1488
    %v1490 = vpop.f32.mrf.mxu0
    %v1491 = vand.u32 %v54, 4294901760
    %v1492 = vsub.f32 %v54, %v1491
    %v1493 = vand.u32 %v1492, 4294901760
    %1494 = vmatprep.mubr.f32.mxu0 %v1493
    %v1495 = vand.u32 %v53, 4294901760
    %v1496 = vsub.f32 %v53, %v1495
    %v1497 = vand.u32 %v1496, 4294901760
    %1498 = vmatmul.mubr.f32.gmra.mxu0 %v1497
    %v1499 = vpop.f32.mrf.mxu0
    %v1500 = vadd.f32 %v1411, %v1499
    %v1501 = vpop.f32.mrf.mxu0
    %1502 = vdwg.mxu0
    %1503 = vmatprep.subr.mxu0 0.0
    %1504 = vmatpush1.xpose.msra.mxu0 0.0
    %1505 = vmatprep.subr.mxu0 0.0
    %1506 = vmatpush1.xpose.msra.mxu0 0.0
    %1507 = vmatprep.subr.mxu0 0.0
    %1508 = vmatpush1.xpose.msra.mxu0 0.0
    %1509 = vmatprep.subr.mxu0 0.0
    %1510 = vmatpush1.xpose.msra.mxu0 0.0
    %1511 = vmatprep.subr.mxu0 0.0
    %1512 = vmatpush1.xpose.msra.mxu0 0.0
    %1513 = vmatprep.subr.mxu0 0.0
    %1514 = vmatpush1.xpose.msra.mxu0 0.0
    %1515 = vmatprep.subr.mxu0 0.0
    %1516 = vmatpush1.xpose.msra.mxu0 0.0
    %1517 = vmatprep.subr.mxu0 0.0
    %1518 = vmatpush1.xpose.msra.mxu0 0.0
    %1519 = vmatprep.subr.mxu0 0.0
    %1520 = vmatpush1.xpose.msra.mxu0 0.0
    %1521 = vmatprep.subr.mxu0 0.0
    %1522 = vmatpush1.xpose.msra.mxu0 0.0
    %1523 = vmatprep.subr.mxu0 0.0
    %1524 = vmatpush1.xpose.msra.mxu0 0.0
    %1525 = vmatprep.subr.mxu0 0.0
    %1526 = vmatpush1.xpose.msra.mxu0 0.0
    %1527 = vmatprep.subr.mxu0 0.0
    %1528 = vmatpush1.xpose.msra.mxu0 0.0
    %1529 = vmatprep.subr.mxu0 0.0
    %1530 = vmatpush1.xpose.msra.mxu0 0.0
    %1531 = vmatprep.subr.mxu0 0.0
    %1532 = vmatpush1.xpose.msra.mxu0 0.0
    %v1533 = vand.u32 %v61, 4294901760
    %v1534 = vsub.f32 %v61, %v1533
    %v1535 = vand.u32 %v1534, 4294901760
    %1536 = vmatprep.subr.mxu0 %v1535
    %v1537 = vand.u32 %v60, 4294901760
    %v1538 = vsub.f32 %v60, %v1537
    %v1539 = vand.u32 %v1538, 4294901760
    %1540 = vmatpush1.xpose.msra.mxu0 %v1539
    %1541 = vmatprep.subr.mxu0 0.0
    %1542 = vmatpush2.xpose.msra.mxu0 0.0
    %1543 = vmatprep.subr.mxu0 0.0
    %1544 = vmatpush2.xpose.msra.mxu0 0.0
    %1545 = vmatprep.subr.mxu0 0.0
    %1546 = vmatpush2.xpose.msra.mxu0 0.0
    %1547 = vmatprep.subr.mxu0 0.0
    %1548 = vmatpush2.xpose.msra.mxu0 0.0
    %1549 = vmatprep.subr.mxu0 0.0
    %1550 = vmatpush2.xpose.msra.mxu0 0.0
    %1551 = vmatprep.subr.mxu0 0.0
    %1552 = vmatpush2.xpose.msra.mxu0 0.0
    %1553 = vmatprep.subr.mxu0 0.0
    %1554 = vmatpush2.xpose.msra.mxu0 0.0
    %1555 = vmatprep.subr.mxu0 0.0
    %1556 = vmatpush2.xpose.msra.mxu0 0.0
    %1557 = vmatprep.subr.mxu0 0.0
    %1558 = vmatpush2.xpose.msra.mxu0 0.0
    %1559 = vmatprep.subr.mxu0 0.0
    %1560 = vmatpush2.xpose.msra.mxu0 0.0
    %1561 = vmatprep.subr.mxu0 0.0
    %1562 = vmatpush2.xpose.msra.mxu0 0.0
    %1563 = vmatprep.subr.mxu0 0.0
    %1564 = vmatpush2.xpose.msra.mxu0 0.0
    %1565 = vmatprep.subr.mxu0 0.0
    %1566 = vmatpush2.xpose.msra.mxu0 0.0
    %1567 = vmatprep.subr.mxu0 0.0
    %1568 = vmatpush2.xpose.msra.mxu0 0.0
    %1569 = vmatprep.subr.mxu0 0.0
    %1570 = vmatpush2.xpose.msra.mxu0 0.0
    %1571 = vmatprep.subr.mxu0 0.0
    %1572 = vmatpush2.xpose.msra.mxu0 0.0
    %v1573 = vand.u32 %v47, 4294901760
    %1574 = vmatprep.mubr.f32.mxu0 %v1573
    %v1575 = vand.u32 %v46, 4294901760
    %1576 = vmatmul.mubr.f32.gmra.mxu0 %v1575
    %v1577 = vpop.f32.mrf.mxu0
    %v1578 = vadd.f32 %v1489, %v1577
    %v1579 = vpop.f32.mrf.mxu0
    %v1580 = vand.u32 %v54, 4294901760
    %1581 = vmatprep.mubr.f32.mxu0 %v1580
    %v1582 = vand.u32 %v53, 4294901760
    %1583 = vmatmul.mubr.f32.gmra.mxu0 %v1582
    %v1584 = vpop.f32.mrf.mxu0
    %v1585 = vadd.f32 %v1500, %v1584
    %v1586 = vpop.f32.mrf.mxu0
    %1587 = vdwg.mxu0
    %1588 = vmatprep.subr.mxu0 0.0
    %1589 = vmatpush1.xpose.msra.mxu0 0.0
    %1590 = vmatprep.subr.mxu0 0.0
    %1591 = vmatpush1.xpose.msra.mxu0 0.0
    %1592 = vmatprep.subr.mxu0 0.0
    %1593 = vmatpush1.xpose.msra.mxu0 0.0
    %1594 = vmatprep.subr.mxu0 0.0
    %1595 = vmatpush1.xpose.msra.mxu0 0.0
    %1596 = vmatprep.subr.mxu0 0.0
    %1597 = vmatpush1.xpose.msra.mxu0 0.0
    %1598 = vmatprep.subr.mxu0 0.0
    %1599 = vmatpush1.xpose.msra.mxu0 0.0
    %1600 = vmatprep.subr.mxu0 0.0
    %1601 = vmatpush1.xpose.msra.mxu0 0.0
    %1602 = vmatprep.subr.mxu0 0.0
    %1603 = vmatpush1.xpose.msra.mxu0 0.0
    %1604 = vmatprep.subr.mxu0 0.0
    %1605 = vmatpush1.xpose.msra.mxu0 0.0
    %1606 = vmatprep.subr.mxu0 0.0
    %1607 = vmatpush1.xpose.msra.mxu0 0.0
    %1608 = vmatprep.subr.mxu0 0.0
    %1609 = vmatpush1.xpose.msra.mxu0 0.0
    %1610 = vmatprep.subr.mxu0 0.0
    %1611 = vmatpush1.xpose.msra.mxu0 0.0
    %1612 = vmatprep.subr.mxu0 0.0
    %1613 = vmatpush1.xpose.msra.mxu0 0.0
    %1614 = vmatprep.subr.mxu0 0.0
    %1615 = vmatpush1.xpose.msra.mxu0 0.0
    %1616 = vmatprep.subr.mxu0 0.0
    %1617 = vmatpush1.xpose.msra.mxu0 0.0
    %v1618 = vand.u32 %v61, 4294901760
    %1619 = vmatprep.subr.mxu0 %v1618
    %v1620 = vand.u32 %v60, 4294901760
    %1621 = vmatpush1.xpose.msra.mxu0 %v1620
    %1622 = vmatprep.subr.mxu0 0.0
    %1623 = vmatpush2.xpose.msra.mxu0 0.0
    %1624 = vmatprep.subr.mxu0 0.0
    %1625 = vmatpush2.xpose.msra.mxu0 0.0
    %1626 = vmatprep.subr.mxu0 0.0
    %1627 = vmatpush2.xpose.msra.mxu0 0.0
    %1628 = vmatprep.subr.mxu0 0.0
    %1629 = vmatpush2.xpose.msra.mxu0 0.0
    %1630 = vmatprep.subr.mxu0 0.0
    %1631 = vmatpush2.xpose.msra.mxu0 0.0
    %1632 = vmatprep.subr.mxu0 0.0
    %1633 = vmatpush2.xpose.msra.mxu0 0.0
    %1634 = vmatprep.subr.mxu0 0.0
    %1635 = vmatpush2.xpose.msra.mxu0 0.0
    %1636 = vmatprep.subr.mxu0 0.0
    %1637 = vmatpush2.xpose.msra.mxu0 0.0
    %1638 = vmatprep.subr.mxu0 0.0
    %1639 = vmatpush2.xpose.msra.mxu0 0.0
    %1640 = vmatprep.subr.mxu0 0.0
    %1641 = vmatpush2.xpose.msra.mxu0 0.0
    %1642 = vmatprep.subr.mxu0 0.0
    %1643 = vmatpush2.xpose.msra.mxu0 0.0
    %1644 = vmatprep.subr.mxu0 0.0
    %1645 = vmatpush2.xpose.msra.mxu0 0.0
    %1646 = vmatprep.subr.mxu0 0.0
    %1647 = vmatpush2.xpose.msra.mxu0 0.0
    %1648 = vmatprep.subr.mxu0 0.0
    %1649 = vmatpush2.xpose.msra.mxu0 0.0
    %1650 = vmatprep.subr.mxu0 0.0
    %1651 = vmatpush2.xpose.msra.mxu0 0.0
    %1652 = vmatprep.subr.mxu0 0.0
    %1653 = vmatpush2.xpose.msra.mxu0 0.0
    %v1654 = vand.u32 %v47, 4294901760
    %1655 = vmatprep.mubr.f32.mxu0 %v1654
    %v1656 = vand.u32 %v46, 4294901760
    %1657 = vmatmul.mubr.f32.gmra.mxu0 %v1656
    %v1658 = vpop.f32.mrf.mxu0
    %v1659 = vadd.f32 %v1578, %v1658
    %v1660 = vpop.f32.mrf.mxu0
    %v1661 = vand.u32 %v54, 4294901760
    %1662 = vmatprep.mubr.f32.mxu0 %v1661
    %v1663 = vand.u32 %v53, 4294901760
    %1664 = vmatmul.mubr.f32.gmra.mxu0 %v1663
    %v1665 = vpop.f32.mrf.mxu0
    %v1666 = vadd.f32 %v1585, %v1665
    %v1667 = vpop.f32.mrf.mxu0
    %1668 = vdwg.mxu0
    %1669 = vmatprep.subr.mxu0 0.0
    %1670 = vmatpush1.xpose.msra.mxu0 0.0
    %1671 = vmatprep.subr.mxu0 0.0
    %1672 = vmatpush1.xpose.msra.mxu0 0.0
    %1673 = vmatprep.subr.mxu0 0.0
    %1674 = vmatpush1.xpose.msra.mxu0 0.0
    %1675 = vmatprep.subr.mxu0 0.0
    %1676 = vmatpush1.xpose.msra.mxu0 0.0
    %1677 = vmatprep.subr.mxu0 0.0
    %1678 = vmatpush1.xpose.msra.mxu0 0.0
    %1679 = vmatprep.subr.mxu0 0.0
    %1680 = vmatpush1.xpose.msra.mxu0 0.0
    %1681 = vmatprep.subr.mxu0 0.0
    %1682 = vmatpush1.xpose.msra.mxu0 0.0
    %1683 = vmatprep.subr.mxu0 0.0
    %1684 = vmatpush1.xpose.msra.mxu0 0.0
    %1685 = vmatprep.subr.mxu0 0.0
    %1686 = vmatpush1.xpose.msra.mxu0 0.0
    %1687 = vmatprep.subr.mxu0 0.0
    %1688 = vmatpush1.xpose.msra.mxu0 0.0
    %1689 = vmatprep.subr.mxu0 0.0
    %1690 = vmatpush1.xpose.msra.mxu0 0.0
    %1691 = vmatprep.subr.mxu0 0.0
    %1692 = vmatpush1.xpose.msra.mxu0 0.0
    %1693 = vmatprep.subr.mxu0 0.0
    %1694 = vmatpush1.xpose.msra.mxu0 0.0
    %1695 = vmatprep.subr.mxu0 0.0
    %1696 = vmatpush1.xpose.msra.mxu0 0.0
    %1697 = vmatprep.subr.mxu0 0.0
    %1698 = vmatpush1.xpose.msra.mxu0 0.0
    %1699 = vmatprep.subr.mxu0 0.0
    %v1700 = vand.u32 %v83, 4294901760
    %1701 = vmatpush1.xpose.msra.mxu0 %v1700
    %1702 = vmatprep.subr.mxu0 0.0
    %1703 = vmatpush2.xpose.msra.mxu0 0.0
    %1704 = vmatprep.subr.mxu0 0.0
    %1705 = vmatpush2.xpose.msra.mxu0 0.0
    %1706 = vmatprep.subr.mxu0 0.0
    %1707 = vmatpush2.xpose.msra.mxu0 0.0
    %1708 = vmatprep.subr.mxu0 0.0
    %1709 = vmatpush2.xpose.msra.mxu0 0.0
    %1710 = vmatprep.subr.mxu0 0.0
    %1711 = vmatpush2.xpose.msra.mxu0 0.0
    %1712 = vmatprep.subr.mxu0 0.0
    %1713 = vmatpush2.xpose.msra.mxu0 0.0
    %1714 = vmatprep.subr.mxu0 0.0
    %1715 = vmatpush2.xpose.msra.mxu0 0.0
    %1716 = vmatprep.subr.mxu0 0.0
    %1717 = vmatpush2.xpose.msra.mxu0 0.0
    %1718 = vmatprep.subr.mxu0 0.0
    %1719 = vmatpush2.xpose.msra.mxu0 0.0
    %1720 = vmatprep.subr.mxu0 0.0
    %1721 = vmatpush2.xpose.msra.mxu0 0.0
    %1722 = vmatprep.subr.mxu0 0.0
    %1723 = vmatpush2.xpose.msra.mxu0 0.0
    %1724 = vmatprep.subr.mxu0 0.0
    %1725 = vmatpush2.xpose.msra.mxu0 0.0
    %1726 = vmatprep.subr.mxu0 0.0
    %1727 = vmatpush2.xpose.msra.mxu0 0.0
    %1728 = vmatprep.subr.mxu0 0.0
    %1729 = vmatpush2.xpose.msra.mxu0 0.0
    %1730 = vmatprep.subr.mxu0 0.0
    %1731 = vmatpush2.xpose.msra.mxu0 0.0
    %1732 = vmatprep.subr.mxu0 0.0
    %1733 = vmatpush2.xpose.msra.mxu0 0.0
    %1734 = vmatprep.mubr.f32.mxu0 0.0
    %v1735 = vand.u32 %v77, 4294901760
    %v1736 = vsub.f32 %v77, %v1735
    %v1737 = vand.u32 %v1736, 4294901760
    %v1738 = vsub.f32 %v1736, %v1737
    %v1739 = vand.u32 %v1738, 4294901760
    %1740 = vmatmul.mubr.f32.gmra.mxu0 %v1739
    %v1741 = vpop.f32.mrf.mxu0
    %v1742 = vadd.f32 %v1659, %v1741
    %v1743 = vpop.f32.mrf.mxu0
    %1744 = vmatprep.mubr.f32.mxu0 0.0
    %v1745 = vand.u32 %v80, 4294901760
    %v1746 = vsub.f32 %v80, %v1745
    %v1747 = vand.u32 %v1746, 4294901760
    %v1748 = vsub.f32 %v1746, %v1747
    %v1749 = vand.u32 %v1748, 4294901760
    %1750 = vmatmul.mubr.f32.gmra.mxu0 %v1749
    %v1751 = vpop.f32.mrf.mxu0
    %v1752 = vadd.f32 %v1666, %v1751
    %v1753 = vpop.f32.mrf.mxu0
    %1754 = vdwg.mxu0
    %1755 = vmatprep.subr.mxu0 0.0
    %1756 = vmatpush1.xpose.msra.mxu0 0.0
    %1757 = vmatprep.subr.mxu0 0.0
    %1758 = vmatpush1.xpose.msra.mxu0 0.0
    %1759 = vmatprep.subr.mxu0 0.0
    %1760 = vmatpush1.xpose.msra.mxu0 0.0
    %1761 = vmatprep.subr.mxu0 0.0
    %1762 = vmatpush1.xpose.msra.mxu0 0.0
    %1763 = vmatprep.subr.mxu0 0.0
    %1764 = vmatpush1.xpose.msra.mxu0 0.0
    %1765 = vmatprep.subr.mxu0 0.0
    %1766 = vmatpush1.xpose.msra.mxu0 0.0
    %1767 = vmatprep.subr.mxu0 0.0
    %1768 = vmatpush1.xpose.msra.mxu0 0.0
    %1769 = vmatprep.subr.mxu0 0.0
    %1770 = vmatpush1.xpose.msra.mxu0 0.0
    %1771 = vmatprep.subr.mxu0 0.0
    %1772 = vmatpush1.xpose.msra.mxu0 0.0
    %1773 = vmatprep.subr.mxu0 0.0
    %1774 = vmatpush1.xpose.msra.mxu0 0.0
    %1775 = vmatprep.subr.mxu0 0.0
    %1776 = vmatpush1.xpose.msra.mxu0 0.0
    %1777 = vmatprep.subr.mxu0 0.0
    %1778 = vmatpush1.xpose.msra.mxu0 0.0
    %1779 = vmatprep.subr.mxu0 0.0
    %1780 = vmatpush1.xpose.msra.mxu0 0.0
    %1781 = vmatprep.subr.mxu0 0.0
    %1782 = vmatpush1.xpose.msra.mxu0 0.0
    %1783 = vmatprep.subr.mxu0 0.0
    %1784 = vmatpush1.xpose.msra.mxu0 0.0
    %1785 = vmatprep.subr.mxu0 0.0
    %v1786 = vand.u32 %v83, 4294901760
    %v1787 = vsub.f32 %v83, %v1786
    %v1788 = vand.u32 %v1787, 4294901760
    %v1789 = vsub.f32 %v1787, %v1788
    %v1790 = vand.u32 %v1789, 4294901760
    %1791 = vmatpush1.xpose.msra.mxu0 %v1790
    %1792 = vmatprep.subr.mxu0 0.0
    %1793 = vmatpush2.xpose.msra.mxu0 0.0
    %1794 = vmatprep.subr.mxu0 0.0
    %1795 = vmatpush2.xpose.msra.mxu0 0.0
    %1796 = vmatprep.subr.mxu0 0.0
    %1797 = vmatpush2.xpose.msra.mxu0 0.0
    %1798 = vmatprep.subr.mxu0 0.0
    %1799 = vmatpush2.xpose.msra.mxu0 0.0
    %1800 = vmatprep.subr.mxu0 0.0
    %1801 = vmatpush2.xpose.msra.mxu0 0.0
    %1802 = vmatprep.subr.mxu0 0.0
    %1803 = vmatpush2.xpose.msra.mxu0 0.0
    %1804 = vmatprep.subr.mxu0 0.0
    %1805 = vmatpush2.xpose.msra.mxu0 0.0
    %1806 = vmatprep.subr.mxu0 0.0
    %1807 = vmatpush2.xpose.msra.mxu0 0.0
    %1808 = vmatprep.subr.mxu0 0.0
    %1809 = vmatpush2.xpose.msra.mxu0 0.0
    %1810 = vmatprep.subr.mxu0 0.0
    %1811 = vmatpush2.xpose.msra.mxu0 0.0
    %1812 = vmatprep.subr.mxu0 0.0
    %1813 = vmatpush2.xpose.msra.mxu0 0.0
    %1814 = vmatprep.subr.mxu0 0.0
    %1815 = vmatpush2.xpose.msra.mxu0 0.0
    %1816 = vmatprep.subr.mxu0 0.0
    %1817 = vmatpush2.xpose.msra.mxu0 0.0
    %1818 = vmatprep.subr.mxu0 0.0
    %1819 = vmatpush2.xpose.msra.mxu0 0.0
    %1820 = vmatprep.subr.mxu0 0.0
    %1821 = vmatpush2.xpose.msra.mxu0 0.0
    %1822 = vmatprep.subr.mxu0 0.0
    %1823 = vmatpush2.xpose.msra.mxu0 0.0
    %1824 = vmatprep.mubr.f32.mxu0 0.0
    %v1825 = vand.u32 %v77, 4294901760
    %1826 = vmatmul.mubr.f32.gmra.mxu0 %v1825
    %v1827 = vpop.f32.mrf.mxu0
    %v1828 = vadd.f32 %v1742, %v1827
    %v1829 = vpop.f32.mrf.mxu0
    %1830 = vmatprep.mubr.f32.mxu0 0.0
    %v1831 = vand.u32 %v80, 4294901760
    %1832 = vmatmul.mubr.f32.gmra.mxu0 %v1831
    %v1833 = vpop.f32.mrf.mxu0
    %v1834 = vadd.f32 %v1752, %v1833
    %v1835 = vpop.f32.mrf.mxu0
    %1836 = vdwg.mxu0
    %1837 = vmatprep.subr.mxu0 0.0
    %1838 = vmatpush1.xpose.msra.mxu0 0.0
    %1839 = vmatprep.subr.mxu0 0.0
    %1840 = vmatpush1.xpose.msra.mxu0 0.0
    %1841 = vmatprep.subr.mxu0 0.0
    %1842 = vmatpush1.xpose.msra.mxu0 0.0
    %1843 = vmatprep.subr.mxu0 0.0
    %1844 = vmatpush1.xpose.msra.mxu0 0.0
    %1845 = vmatprep.subr.mxu0 0.0
    %1846 = vmatpush1.xpose.msra.mxu0 0.0
    %1847 = vmatprep.subr.mxu0 0.0
    %1848 = vmatpush1.xpose.msra.mxu0 0.0
    %1849 = vmatprep.subr.mxu0 0.0
    %1850 = vmatpush1.xpose.msra.mxu0 0.0
    %1851 = vmatprep.subr.mxu0 0.0
    %1852 = vmatpush1.xpose.msra.mxu0 0.0
    %1853 = vmatprep.subr.mxu0 0.0
    %1854 = vmatpush1.xpose.msra.mxu0 0.0
    %1855 = vmatprep.subr.mxu0 0.0
    %1856 = vmatpush1.xpose.msra.mxu0 0.0
    %1857 = vmatprep.subr.mxu0 0.0
    %1858 = vmatpush1.xpose.msra.mxu0 0.0
    %1859 = vmatprep.subr.mxu0 0.0
    %1860 = vmatpush1.xpose.msra.mxu0 0.0
    %1861 = vmatprep.subr.mxu0 0.0
    %1862 = vmatpush1.xpose.msra.mxu0 0.0
    %1863 = vmatprep.subr.mxu0 0.0
    %1864 = vmatpush1.xpose.msra.mxu0 0.0
    %1865 = vmatprep.subr.mxu0 0.0
    %1866 = vmatpush1.xpose.msra.mxu0 0.0
    %1867 = vmatprep.subr.mxu0 0.0
    %v1868 = vand.u32 %v83, 4294901760
    %v1869 = vsub.f32 %v83, %v1868
    %1870 = vmatpush1.xpose.msra.mxu0 %v1869
    %1871 = vmatprep.subr.mxu0 0.0
    %1872 = vmatpush2.xpose.msra.mxu0 0.0
    %1873 = vmatprep.subr.mxu0 0.0
    %1874 = vmatpush2.xpose.msra.mxu0 0.0
    %1875 = vmatprep.subr.mxu0 0.0
    %1876 = vmatpush2.xpose.msra.mxu0 0.0
    %1877 = vmatprep.subr.mxu0 0.0
    %1878 = vmatpush2.xpose.msra.mxu0 0.0
    %1879 = vmatprep.subr.mxu0 0.0
    %1880 = vmatpush2.xpose.msra.mxu0 0.0
    %1881 = vmatprep.subr.mxu0 0.0
    %1882 = vmatpush2.xpose.msra.mxu0 0.0
    %1883 = vmatprep.subr.mxu0 0.0
    %1884 = vmatpush2.xpose.msra.mxu0 0.0
    %1885 = vmatprep.subr.mxu0 0.0
    %1886 = vmatpush2.xpose.msra.mxu0 0.0
    %1887 = vmatprep.subr.mxu0 0.0
    %1888 = vmatpush2.xpose.msra.mxu0 0.0
    %1889 = vmatprep.subr.mxu0 0.0
    %1890 = vmatpush2.xpose.msra.mxu0 0.0
    %1891 = vmatprep.subr.mxu0 0.0
    %1892 = vmatpush2.xpose.msra.mxu0 0.0
    %1893 = vmatprep.subr.mxu0 0.0
    %1894 = vmatpush2.xpose.msra.mxu0 0.0
    %1895 = vmatprep.subr.mxu0 0.0
    %1896 = vmatpush2.xpose.msra.mxu0 0.0
    %1897 = vmatprep.subr.mxu0 0.0
    %1898 = vmatpush2.xpose.msra.mxu0 0.0
    %1899 = vmatprep.subr.mxu0 0.0
    %1900 = vmatpush2.xpose.msra.mxu0 0.0
    %1901 = vmatprep.subr.mxu0 0.0
    %1902 = vmatpush2.xpose.msra.mxu0 0.0
    %1903 = vmatprep.mubr.f32.mxu0 0.0
    %v1904 = vand.u32 %v77, 4294901760
    %v1905 = vsub.f32 %v77, %v1904
    %1906 = vmatmul.mubr.f32.gmra.mxu0 %v1905
    %v1907 = vpop.f32.mrf.mxu0
    %v1908 = vadd.f32 %v1828, %v1907
    %v1909 = vpop.f32.mrf.mxu0
    %1910 = vmatprep.mubr.f32.mxu0 0.0
    %v1911 = vand.u32 %v80, 4294901760
    %v1912 = vsub.f32 %v80, %v1911
    %1913 = vmatmul.mubr.f32.gmra.mxu0 %v1912
    %v1914 = vpop.f32.mrf.mxu0
    %v1915 = vadd.f32 %v1834, %v1914
    %v1916 = vpop.f32.mrf.mxu0
    %1917 = vdwg.mxu0
    %1918 = vmatprep.subr.mxu0 0.0
    %1919 = vmatpush1.xpose.msra.mxu0 0.0
    %1920 = vmatprep.subr.mxu0 0.0
    %1921 = vmatpush1.xpose.msra.mxu0 0.0
    %1922 = vmatprep.subr.mxu0 0.0
    %1923 = vmatpush1.xpose.msra.mxu0 0.0
    %1924 = vmatprep.subr.mxu0 0.0
    %1925 = vmatpush1.xpose.msra.mxu0 0.0
    %1926 = vmatprep.subr.mxu0 0.0
    %1927 = vmatpush1.xpose.msra.mxu0 0.0
    %1928 = vmatprep.subr.mxu0 0.0
    %1929 = vmatpush1.xpose.msra.mxu0 0.0
    %1930 = vmatprep.subr.mxu0 0.0
    %1931 = vmatpush1.xpose.msra.mxu0 0.0
    %1932 = vmatprep.subr.mxu0 0.0
    %1933 = vmatpush1.xpose.msra.mxu0 0.0
    %1934 = vmatprep.subr.mxu0 0.0
    %1935 = vmatpush1.xpose.msra.mxu0 0.0
    %1936 = vmatprep.subr.mxu0 0.0
    %1937 = vmatpush1.xpose.msra.mxu0 0.0
    %1938 = vmatprep.subr.mxu0 0.0
    %1939 = vmatpush1.xpose.msra.mxu0 0.0
    %1940 = vmatprep.subr.mxu0 0.0
    %1941 = vmatpush1.xpose.msra.mxu0 0.0
    %1942 = vmatprep.subr.mxu0 0.0
    %1943 = vmatpush1.xpose.msra.mxu0 0.0
    %1944 = vmatprep.subr.mxu0 0.0
    %1945 = vmatpush1.xpose.msra.mxu0 0.0
    %1946 = vmatprep.subr.mxu0 0.0
    %1947 = vmatpush1.xpose.msra.mxu0 0.0
    %1948 = vmatprep.subr.mxu0 0.0
    %v1949 = vand.u32 %v83, 4294901760
    %1950 = vmatpush1.xpose.msra.mxu0 %v1949
    %1951 = vmatprep.subr.mxu0 0.0
    %1952 = vmatpush2.xpose.msra.mxu0 0.0
    %1953 = vmatprep.subr.mxu0 0.0
    %1954 = vmatpush2.xpose.msra.mxu0 0.0
    %1955 = vmatprep.subr.mxu0 0.0
    %1956 = vmatpush2.xpose.msra.mxu0 0.0
    %1957 = vmatprep.subr.mxu0 0.0
    %1958 = vmatpush2.xpose.msra.mxu0 0.0
    %1959 = vmatprep.subr.mxu0 0.0
    %1960 = vmatpush2.xpose.msra.mxu0 0.0
    %1961 = vmatprep.subr.mxu0 0.0
    %1962 = vmatpush2.xpose.msra.mxu0 0.0
    %1963 = vmatprep.subr.mxu0 0.0
    %1964 = vmatpush2.xpose.msra.mxu0 0.0
    %1965 = vmatprep.subr.mxu0 0.0
    %1966 = vmatpush2.xpose.msra.mxu0 0.0
    %1967 = vmatprep.subr.mxu0 0.0
    %1968 = vmatpush2.xpose.msra.mxu0 0.0
    %1969 = vmatprep.subr.mxu0 0.0
    %1970 = vmatpush2.xpose.msra.mxu0 0.0
    %1971 = vmatprep.subr.mxu0 0.0
    %1972 = vmatpush2.xpose.msra.mxu0 0.0
    %1973 = vmatprep.subr.mxu0 0.0
    %1974 = vmatpush2.xpose.msra.mxu0 0.0
    %1975 = vmatprep.subr.mxu0 0.0
    %1976 = vmatpush2.xpose.msra.mxu0 0.0
    %1977 = vmatprep.subr.mxu0 0.0
    %1978 = vmatpush2.xpose.msra.mxu0 0.0
    %1979 = vmatprep.subr.mxu0 0.0
    %1980 = vmatpush2.xpose.msra.mxu0 0.0
    %1981 = vmatprep.subr.mxu0 0.0
    %1982 = vmatpush2.xpose.msra.mxu0 0.0
    %1983 = vmatprep.mubr.f32.mxu0 0.0
    %v1984 = vand.u32 %v77, 4294901760
    %v1985 = vsub.f32 %v77, %v1984
    %v1986 = vand.u32 %v1985, 4294901760
    %1987 = vmatmul.mubr.f32.gmra.mxu0 %v1986
    %v1988 = vpop.f32.mrf.mxu0
    %v1989 = vadd.f32 %v1908, %v1988
    %v1990 = vpop.f32.mrf.mxu0
    %1991 = vmatprep.mubr.f32.mxu0 0.0
    %v1992 = vand.u32 %v80, 4294901760
    %v1993 = vsub.f32 %v80, %v1992
    %v1994 = vand.u32 %v1993, 4294901760
    %1995 = vmatmul.mubr.f32.gmra.mxu0 %v1994
    %v1996 = vpop.f32.mrf.mxu0
    %v1997 = vadd.f32 %v1915, %v1996
    %v1998 = vpop.f32.mrf.mxu0
    %1999 = vdwg.mxu0
    %2000 = vmatprep.subr.mxu0 0.0
    %2001 = vmatpush1.xpose.msra.mxu0 0.0
    %2002 = vmatprep.subr.mxu0 0.0
    %2003 = vmatpush1.xpose.msra.mxu0 0.0
    %2004 = vmatprep.subr.mxu0 0.0
    %2005 = vmatpush1.xpose.msra.mxu0 0.0
    %2006 = vmatprep.subr.mxu0 0.0
    %2007 = vmatpush1.xpose.msra.mxu0 0.0
    %2008 = vmatprep.subr.mxu0 0.0
    %2009 = vmatpush1.xpose.msra.mxu0 0.0
    %2010 = vmatprep.subr.mxu0 0.0
    %2011 = vmatpush1.xpose.msra.mxu0 0.0
    %2012 = vmatprep.subr.mxu0 0.0
    %2013 = vmatpush1.xpose.msra.mxu0 0.0
    %2014 = vmatprep.subr.mxu0 0.0
    %2015 = vmatpush1.xpose.msra.mxu0 0.0
    %2016 = vmatprep.subr.mxu0 0.0
    %2017 = vmatpush1.xpose.msra.mxu0 0.0
    %2018 = vmatprep.subr.mxu0 0.0
    %2019 = vmatpush1.xpose.msra.mxu0 0.0
    %2020 = vmatprep.subr.mxu0 0.0
    %2021 = vmatpush1.xpose.msra.mxu0 0.0
    %2022 = vmatprep.subr.mxu0 0.0
    %2023 = vmatpush1.xpose.msra.mxu0 0.0
    %2024 = vmatprep.subr.mxu0 0.0
    %2025 = vmatpush1.xpose.msra.mxu0 0.0
    %2026 = vmatprep.subr.mxu0 0.0
    %2027 = vmatpush1.xpose.msra.mxu0 0.0
    %2028 = vmatprep.subr.mxu0 0.0
    %2029 = vmatpush1.xpose.msra.mxu0 0.0
    %2030 = vmatprep.subr.mxu0 0.0
    %v2031 = vand.u32 %v83, 4294901760
    %v2032 = vsub.f32 %v83, %v2031
    %v2033 = vand.u32 %v2032, 4294901760
    %2034 = vmatpush1.xpose.msra.mxu0 %v2033
    %2035 = vmatprep.subr.mxu0 0.0
    %2036 = vmatpush2.xpose.msra.mxu0 0.0
    %2037 = vmatprep.subr.mxu0 0.0
    %2038 = vmatpush2.xpose.msra.mxu0 0.0
    %2039 = vmatprep.subr.mxu0 0.0
    %2040 = vmatpush2.xpose.msra.mxu0 0.0
    %2041 = vmatprep.subr.mxu0 0.0
    %2042 = vmatpush2.xpose.msra.mxu0 0.0
    %2043 = vmatprep.subr.mxu0 0.0
    %2044 = vmatpush2.xpose.msra.mxu0 0.0
    %2045 = vmatprep.subr.mxu0 0.0
    %2046 = vmatpush2.xpose.msra.mxu0 0.0
    %2047 = vmatprep.subr.mxu0 0.0
    %2048 = vmatpush2.xpose.msra.mxu0 0.0
    %2049 = vmatprep.subr.mxu0 0.0
    %2050 = vmatpush2.xpose.msra.mxu0 0.0
    %2051 = vmatprep.subr.mxu0 0.0
    %2052 = vmatpush2.xpose.msra.mxu0 0.0
    %2053 = vmatprep.subr.mxu0 0.0
    %2054 = vmatpush2.xpose.msra.mxu0 0.0
    %2055 = vmatprep.subr.mxu0 0.0
    %2056 = vmatpush2.xpose.msra.mxu0 0.0
    %2057 = vmatprep.subr.mxu0 0.0
    %2058 = vmatpush2.xpose.msra.mxu0 0.0
    %2059 = vmatprep.subr.mxu0 0.0
    %2060 = vmatpush2.xpose.msra.mxu0 0.0
    %2061 = vmatprep.subr.mxu0 0.0
    %2062 = vmatpush2.xpose.msra.mxu0 0.0
    %2063 = vmatprep.subr.mxu0 0.0
    %2064 = vmatpush2.xpose.msra.mxu0 0.0
    %2065 = vmatprep.subr.mxu0 0.0
    %2066 = vmatpush2.xpose.msra.mxu0 0.0
    %2067 = vmatprep.mubr.f32.mxu0 0.0
    %v2068 = vand.u32 %v77, 4294901760
    %2069 = vmatmul.mubr.f32.gmra.mxu0 %v2068
    %v2070 = vpop.f32.mrf.mxu0
    %v2071 = vadd.f32 %v1989, %v2070
    %v2072 = vpop.f32.mrf.mxu0
    %2073 = vmatprep.mubr.f32.mxu0 0.0
    %v2074 = vand.u32 %v80, 4294901760
    %2075 = vmatmul.mubr.f32.gmra.mxu0 %v2074
    %v2076 = vpop.f32.mrf.mxu0
    %v2077 = vadd.f32 %v1997, %v2076
    %v2078 = vpop.f32.mrf.mxu0
    %2079 = vdwg.mxu0
    %2080 = vmatprep.subr.mxu0 0.0
    %2081 = vmatpush1.xpose.msra.mxu0 0.0
    %2082 = vmatprep.subr.mxu0 0.0
    %2083 = vmatpush1.xpose.msra.mxu0 0.0
    %2084 = vmatprep.subr.mxu0 0.0
    %2085 = vmatpush1.xpose.msra.mxu0 0.0
    %2086 = vmatprep.subr.mxu0 0.0
    %2087 = vmatpush1.xpose.msra.mxu0 0.0
    %2088 = vmatprep.subr.mxu0 0.0
    %2089 = vmatpush1.xpose.msra.mxu0 0.0
    %2090 = vmatprep.subr.mxu0 0.0
    %2091 = vmatpush1.xpose.msra.mxu0 0.0
    %2092 = vmatprep.subr.mxu0 0.0
    %2093 = vmatpush1.xpose.msra.mxu0 0.0
    %2094 = vmatprep.subr.mxu0 0.0
    %2095 = vmatpush1.xpose.msra.mxu0 0.0
    %2096 = vmatprep.subr.mxu0 0.0
    %2097 = vmatpush1.xpose.msra.mxu0 0.0
    %2098 = vmatprep.subr.mxu0 0.0
    %2099 = vmatpush1.xpose.msra.mxu0 0.0
    %2100 = vmatprep.subr.mxu0 0.0
    %2101 = vmatpush1.xpose.msra.mxu0 0.0
    %2102 = vmatprep.subr.mxu0 0.0
    %2103 = vmatpush1.xpose.msra.mxu0 0.0
    %2104 = vmatprep.subr.mxu0 0.0
    %2105 = vmatpush1.xpose.msra.mxu0 0.0
    %2106 = vmatprep.subr.mxu0 0.0
    %2107 = vmatpush1.xpose.msra.mxu0 0.0
    %2108 = vmatprep.subr.mxu0 0.0
    %2109 = vmatpush1.xpose.msra.mxu0 0.0
    %2110 = vmatprep.subr.mxu0 0.0
    %v2111 = vand.u32 %v83, 4294901760
    %2112 = vmatpush1.xpose.msra.mxu0 %v2111
    %2113 = vmatprep.subr.mxu0 0.0
    %2114 = vmatpush2.xpose.msra.mxu0 0.0
    %2115 = vmatprep.subr.mxu0 0.0
    %2116 = vmatpush2.xpose.msra.mxu0 0.0
    %2117 = vmatprep.subr.mxu0 0.0
    %2118 = vmatpush2.xpose.msra.mxu0 0.0
    %2119 = vmatprep.subr.mxu0 0.0
    %2120 = vmatpush2.xpose.msra.mxu0 0.0
    %2121 = vmatprep.subr.mxu0 0.0
    %2122 = vmatpush2.xpose.msra.mxu0 0.0
    %2123 = vmatprep.subr.mxu0 0.0
    %2124 = vmatpush2.xpose.msra.mxu0 0.0
    %2125 = vmatprep.subr.mxu0 0.0
    %2126 = vmatpush2.xpose.msra.mxu0 0.0
    %2127 = vmatprep.subr.mxu0 0.0
    %2128 = vmatpush2.xpose.msra.mxu0 0.0
    %2129 = vmatprep.subr.mxu0 0.0
    %2130 = vmatpush2.xpose.msra.mxu0 0.0
    %2131 = vmatprep.subr.mxu0 0.0
    %2132 = vmatpush2.xpose.msra.mxu0 0.0
    %2133 = vmatprep.subr.mxu0 0.0
    %2134 = vmatpush2.xpose.msra.mxu0 0.0
    %2135 = vmatprep.subr.mxu0 0.0
    %2136 = vmatpush2.xpose.msra.mxu0 0.0
    %2137 = vmatprep.subr.mxu0 0.0
    %2138 = vmatpush2.xpose.msra.mxu0 0.0
    %2139 = vmatprep.subr.mxu0 0.0
    %2140 = vmatpush2.xpose.msra.mxu0 0.0
    %2141 = vmatprep.subr.mxu0 0.0
    %2142 = vmatpush2.xpose.msra.mxu0 0.0
    %2143 = vmatprep.subr.mxu0 0.0
    %2144 = vmatpush2.xpose.msra.mxu0 0.0
    %2145 = vmatprep.mubr.f32.mxu0 0.0
    %v2146 = vand.u32 %v77, 4294901760
    %2147 = vmatmul.mubr.f32.gmra.mxu0 %v2146
    %v2148 = vpop.f32.mrf.mxu0
    %v2149 = vadd.f32 %v2071, %v2148
    %v2150 = vpop.f32.mrf.mxu0
    %2151 = vmatprep.mubr.f32.mxu0 0.0
    %v2152 = vand.u32 %v80, 4294901760
    %2153 = vmatmul.mubr.f32.gmra.mxu0 %v2152
    %v2154 = vpop.f32.mrf.mxu0
    %v2155 = vadd.f32 %v2077, %v2154
    %v2156 = vpop.f32.mrf.mxu0
    %2157 = vdwg.mxu0
    %vm2158 = vcmp.gt.f32.partialorder 0.0, 1.0
    %v2159 = vsel %vm2158, 1, 0
    %v2160 = vcvt.s32.f32 %v2159
    %v2161 = vadd.f32 %v2149, 0.0
    %v2162 = vadd.f32 %v2155, 0.0
    %v2163 = vsub.f32 %v2161, %v2160
    %v2164 = vsub.f32 %v2162, %v2160
    %vm2165 = vcmp.gt.f32.partialorder %v2163, 1.0
    %vm2166 = vcmp.gt.f32.partialorder %v2164, 1.0
    %v2167 = vsel %vm2165, 1, 0
    %v2168 = vsel %vm2166, 1, 0
    %v2169 = vcvt.s32.f32 %v2167
    %v2170 = vcvt.s32.f32 %v2168
    %vm2171 = vcmask 64512
    %2172 = vst.msk [vmem:[%s3] sm:$0xff] %vm2171, %v2169
    %vm2173 = vcmask 58368
    %2174 = vst.msk [vmem:[%s3 + $0x8] sm:$0x3] %vm2173, %v2170
    %2175 = vst.msk [vmem:[%s4] sm:$0xff] %vm2171, %v2163
    %2176 = vst.msk [vmem:[%s4 + $0x8] sm:$0x3] %vm2173, %v2164
    %v2177 = vmul.f32 %v2163, 0.95
    %v2178 = vmul.f32 %v2164, 0.95
    %v2179 = vadd.f32 %v2177, %v2149
    %v2180 = vadd.f32 %v2178, %v2155
    %v2181 = vsub.f32 %v2179, %v2169
    %v2182 = vsub.f32 %v2180, %v2170
    %vm2183 = vcmp.gt.f32.partialorder %v2181, 1.0
    %vm2184 = vcmp.gt.f32.partialorder %v2182, 1.0
    %v2185 = vsel %vm2183, 1, 0
    %v2186 = vsel %vm2184, 1, 0
    %v2187 = vcvt.s32.f32 %v2185
    %v2188 = vcvt.s32.f32 %v2186
    %s2189 = scalar_lea.vmem %s3, 16
    %2190 = vst.msk [vmem:[%s2189] sm:$0xff] %vm2171, %v2187
    %2191 = vst.msk [vmem:[%s2189 + $0x8] sm:$0x3] %vm2173, %v2188
    %s2192 = scalar_lea.vmem %s4, 16
    %2193 = vst.msk [vmem:[%s2192] sm:$0xff] %vm2171, %v2181
    %2194 = vst.msk [vmem:[%s2192 + $0x8] sm:$0x3] %vm2173, %v2182
    %v2195 = vmul.f32 %v2181, 0.95
    %v2196 = vmul.f32 %v2182, 0.95
    %v2197 = vadd.f32 %v2195, %v2149
    %v2198 = vadd.f32 %v2196, %v2155
    %v2199 = vsub.f32 %v2197, %v2187
    %v2200 = vsub.f32 %v2198, %v2188
    %vm2201 = vcmp.gt.f32.partialorder %v2199, 1.0
    %vm2202 = vcmp.gt.f32.partialorder %v2200, 1.0
    %v2203 = vsel %vm2201, 1, 0
    %v2204 = vsel %vm2202, 1, 0
    %v2205 = vcvt.s32.f32 %v2203
    %v2206 = vcvt.s32.f32 %v2204
    %s2207 = scalar_lea.vmem %s3, 32
    %2208 = vst.msk [vmem:[%s2207] sm:$0xff] %vm2171, %v2205
    %2209 = vst.msk [vmem:[%s2207 + $0x8] sm:$0x3] %vm2173, %v2206
    %s2210 = scalar_lea.vmem %s4, 32
    %2211 = vst.msk [vmem:[%s2210] sm:$0xff] %vm2171, %v2199
    %2212 = vst.msk [vmem:[%s2210 + $0x8] sm:$0x3] %vm2173, %v2200
    %v2213 = vmul.f32 %v2199, 0.95
    %v2214 = vmul.f32 %v2200, 0.95
    %v2215 = vadd.f32 %v2213, %v2149
    %v2216 = vadd.f32 %v2214, %v2155
    %v2217 = vsub.f32 %v2215, %v2205
    %v2218 = vsub.f32 %v2216, %v2206
    %vm2219 = vcmp.gt.f32.partialorder %v2217, 1.0
    %vm2220 = vcmp.gt.f32.partialorder %v2218, 1.0
    %v2221 = vsel %vm2219, 1, 0
    %v2222 = vsel %vm2220, 1, 0
    %v2223 = vcvt.s32.f32 %v2221
    %v2224 = vcvt.s32.f32 %v2222
    %s2225 = scalar_lea.vmem %s3, 48
    %2226 = vst.msk [vmem:[%s2225] sm:$0xff] %vm2171, %v2223
    %2227 = vst.msk [vmem:[%s2225 + $0x8] sm:$0x3] %vm2173, %v2224
    %s2228 = scalar_lea.vmem %s4, 48
    %2229 = vst.msk [vmem:[%s2228] sm:$0xff] %vm2171, %v2217
    %2230 = vst.msk [vmem:[%s2228 + $0x8] sm:$0x3] %vm2173, %v2218
    %v2231 = vmul.f32 %v2217, 0.95
    %v2232 = vmul.f32 %v2218, 0.95
    %v2233 = vadd.f32 %v2231, %v2149
    %v2234 = vadd.f32 %v2232, %v2155
    %v2235 = vsub.f32 %v2233, %v2223
    %v2236 = vsub.f32 %v2234, %v2224
    %vm2237 = vcmp.gt.f32.partialorder %v2235, 1.0
    %vm2238 = vcmp.gt.f32.partialorder %v2236, 1.0
    %v2239 = vsel %vm2237, 1, 0
    %v2240 = vsel %vm2238, 1, 0
    %v2241 = vcvt.s32.f32 %v2239
    %v2242 = vcvt.s32.f32 %v2240
    %s2243 = scalar_lea.vmem %s3, 64
    %2244 = vst.msk [vmem:[%s2243] sm:$0xff] %vm2171, %v2241
    %2245 = vst.msk [vmem:[%s2243 + $0x8] sm:$0x3] %vm2173, %v2242
    %s2246 = scalar_lea.vmem %s4, 64
    %2247 = vst.msk [vmem:[%s2246] sm:$0xff] %vm2171, %v2235
    %2248 = vst.msk [vmem:[%s2246 + $0x8] sm:$0x3] %vm2173, %v2236
    %v2249 = vmul.f32 %v2235, 0.95
    %v2250 = vmul.f32 %v2236, 0.95
    %v2251 = vadd.f32 %v2249, %v2149
    %v2252 = vadd.f32 %v2250, %v2155
    %v2253 = vsub.f32 %v2251, %v2241
    %v2254 = vsub.f32 %v2252, %v2242
    %vm2255 = vcmp.gt.f32.partialorder %v2253, 1.0
    %vm2256 = vcmp.gt.f32.partialorder %v2254, 1.0
    %v2257 = vsel %vm2255, 1, 0
    %v2258 = vsel %vm2256, 1, 0
    %v2259 = vcvt.s32.f32 %v2257
    %v2260 = vcvt.s32.f32 %v2258
    %s2261 = scalar_lea.vmem %s3, 80
    %2262 = vst.msk [vmem:[%s2261] sm:$0xff] %vm2171, %v2259
    %2263 = vst.msk [vmem:[%s2261 + $0x8] sm:$0x3] %vm2173, %v2260
    %s2264 = scalar_lea.vmem %s4, 80
    %2265 = vst.msk [vmem:[%s2264] sm:$0xff] %vm2171, %v2253
    %2266 = vst.msk [vmem:[%s2264 + $0x8] sm:$0x3] %vm2173, %v2254
    %v2267 = vmul.f32 %v2253, 0.95
    %v2268 = vmul.f32 %v2254, 0.95
    %v2269 = vadd.f32 %v2267, %v2149
    %v2270 = vadd.f32 %v2268, %v2155
    %v2271 = vsub.f32 %v2269, %v2259
    %v2272 = vsub.f32 %v2270, %v2260
    %vm2273 = vcmp.gt.f32.partialorder %v2271, 1.0
    %vm2274 = vcmp.gt.f32.partialorder %v2272, 1.0
    %v2275 = vsel %vm2273, 1, 0
    %v2276 = vsel %vm2274, 1, 0
    %v2277 = vcvt.s32.f32 %v2275
    %v2278 = vcvt.s32.f32 %v2276
    %s2279 = scalar_lea.vmem %s3, 96
    %2280 = vst.msk [vmem:[%s2279] sm:$0xff] %vm2171, %v2277
    %2281 = vst.msk [vmem:[%s2279 + $0x8] sm:$0x3] %vm2173, %v2278
    %s2282 = scalar_lea.vmem %s4, 96
    %2283 = vst.msk [vmem:[%s2282] sm:$0xff] %vm2171, %v2271
    %2284 = vst.msk [vmem:[%s2282 + $0x8] sm:$0x3] %vm2173, %v2272
    %v2285 = vmul.f32 %v2271, 0.95
    %v2286 = vmul.f32 %v2272, 0.95
    %v2287 = vadd.f32 %v2285, %v2149
    %v2288 = vadd.f32 %v2286, %v2155
    %v2289 = vsub.f32 %v2287, %v2277
    %v2290 = vsub.f32 %v2288, %v2278
    %vm2291 = vcmp.gt.f32.partialorder %v2289, 1.0
    %vm2292 = vcmp.gt.f32.partialorder %v2290, 1.0
    %v2293 = vsel %vm2291, 1, 0
    %v2294 = vsel %vm2292, 1, 0
    %v2295 = vcvt.s32.f32 %v2293
    %v2296 = vcvt.s32.f32 %v2294
    %s2297 = scalar_lea.vmem %s3, 112
    %2298 = vst.msk [vmem:[%s2297] sm:$0xff] %vm2171, %v2295
    %2299 = vst.msk [vmem:[%s2297 + $0x8] sm:$0x3] %vm2173, %v2296
    %s2300 = scalar_lea.vmem %s4, 112
    %2301 = vst.msk [vmem:[%s2300] sm:$0xff] %vm2171, %v2289
    %2302 = vst.msk [vmem:[%s2300 + $0x8] sm:$0x3] %vm2173, %v2290
    %v2303 = vmul.f32 %v2289, 0.95
    %v2304 = vmul.f32 %v2290, 0.95
    %v2305 = vadd.f32 %v2303, %v2149
    %v2306 = vadd.f32 %v2304, %v2155
    %v2307 = vsub.f32 %v2305, %v2295
    %v2308 = vsub.f32 %v2306, %v2296
    %vm2309 = vcmp.gt.f32.partialorder %v2307, 1.0
    %vm2310 = vcmp.gt.f32.partialorder %v2308, 1.0
    %v2311 = vsel %vm2309, 1, 0
    %v2312 = vsel %vm2310, 1, 0
    %v2313 = vcvt.s32.f32 %v2311
    %v2314 = vcvt.s32.f32 %v2312
    %s2315 = scalar_lea.vmem %s3, 128
    %2316 = vst.msk [vmem:[%s2315] sm:$0xff] %vm2171, %v2313
    %2317 = vst.msk [vmem:[%s2315 + $0x8] sm:$0x3] %vm2173, %v2314
    %s2318 = scalar_lea.vmem %s4, 128
    %2319 = vst.msk [vmem:[%s2318] sm:$0xff] %vm2171, %v2307
    %2320 = vst.msk [vmem:[%s2318 + $0x8] sm:$0x3] %vm2173, %v2308
    %v2321 = vmul.f32 %v2307, 0.95
    %v2322 = vmul.f32 %v2308, 0.95
    %v2323 = vadd.f32 %v2321, %v2149
    %v2324 = vadd.f32 %v2322, %v2155
    %v2325 = vsub.f32 %v2323, %v2313
    %v2326 = vsub.f32 %v2324, %v2314
    %vm2327 = vcmp.gt.f32.partialorder %v2325, 1.0
    %vm2328 = vcmp.gt.f32.partialorder %v2326, 1.0
    %v2329 = vsel %vm2327, 1, 0
    %v2330 = vsel %vm2328, 1, 0
    %v2331 = vcvt.s32.f32 %v2329
    %v2332 = vcvt.s32.f32 %v2330
    %s2333 = scalar_lea.vmem %s3, 144
    %2334 = vst.msk [vmem:[%s2333] sm:$0xff] %vm2171, %v2331
    %2335 = vst.msk [vmem:[%s2333 + $0x8] sm:$0x3] %vm2173, %v2332
    %s2336 = scalar_lea.vmem %s4, 144
    %2337 = vst.msk [vmem:[%s2336] sm:$0xff] %vm2171, %v2325
    %2338 = vst.msk [vmem:[%s2336 + $0x8] sm:$0x3] %vm2173, %v2326
    %v2339 = vmul.f32 %v2325, 0.95
    %v2340 = vmul.f32 %v2326, 0.95
    %v2341 = vadd.f32 %v2339, %v2149
    %v2342 = vadd.f32 %v2340, %v2155
    %v2343 = vsub.f32 %v2341, %v2331
    %v2344 = vsub.f32 %v2342, %v2332
    %vm2345 = vcmp.gt.f32.partialorder %v2343, 1.0
    %vm2346 = vcmp.gt.f32.partialorder %v2344, 1.0
    %v2347 = vsel %vm2345, 1, 0
    %v2348 = vsel %vm2346, 1, 0
    %v2349 = vcvt.s32.f32 %v2347
    %v2350 = vcvt.s32.f32 %v2348
    %s2351 = scalar_lea.vmem %s3, 160
    %2352 = vst.msk [vmem:[%s2351] sm:$0xff] %vm2171, %v2349
    %2353 = vst.msk [vmem:[%s2351 + $0x8] sm:$0x3] %vm2173, %v2350
    %s2354 = scalar_lea.vmem %s4, 160
    %2355 = vst.msk [vmem:[%s2354] sm:$0xff] %vm2171, %v2343
    %2356 = vst.msk [vmem:[%s2354 + $0x8] sm:$0x3] %vm2173, %v2344
    %v2357 = vmul.f32 %v2343, 0.95
    %v2358 = vmul.f32 %v2344, 0.95
    %v2359 = vadd.f32 %v2357, %v2149
    %v2360 = vadd.f32 %v2358, %v2155
    %v2361 = vsub.f32 %v2359, %v2349
    %v2362 = vsub.f32 %v2360, %v2350
    %vm2363 = vcmp.gt.f32.partialorder %v2361, 1.0
    %vm2364 = vcmp.gt.f32.partialorder %v2362, 1.0
    %v2365 = vsel %vm2363, 1, 0
    %v2366 = vsel %vm2364, 1, 0
    %v2367 = vcvt.s32.f32 %v2365
    %v2368 = vcvt.s32.f32 %v2366
    %s2369 = scalar_lea.vmem %s3, 176
    %2370 = vst.msk [vmem:[%s2369] sm:$0xff] %vm2171, %v2367
    %2371 = vst.msk [vmem:[%s2369 + $0x8] sm:$0x3] %vm2173, %v2368
    %s2372 = scalar_lea.vmem %s4, 176
    %2373 = vst.msk [vmem:[%s2372] sm:$0xff] %vm2171, %v2361
    %2374 = vst.msk [vmem:[%s2372 + $0x8] sm:$0x3] %vm2173, %v2362
    %v2375 = vmul.f32 %v2361, 0.95
    %v2376 = vmul.f32 %v2362, 0.95
    %v2377 = vadd.f32 %v2375, %v2149
    %v2378 = vadd.f32 %v2376, %v2155
    %v2379 = vsub.f32 %v2377, %v2367
    %v2380 = vsub.f32 %v2378, %v2368
    %vm2381 = vcmp.gt.f32.partialorder %v2379, 1.0
    %vm2382 = vcmp.gt.f32.partialorder %v2380, 1.0
    %v2383 = vsel %vm2381, 1, 0
    %v2384 = vsel %vm2382, 1, 0
    %v2385 = vcvt.s32.f32 %v2383
    %v2386 = vcvt.s32.f32 %v2384
    %s2387 = scalar_lea.vmem %s3, 192
    %2388 = vst.msk [vmem:[%s2387] sm:$0xff] %vm2171, %v2385
    %2389 = vst.msk [vmem:[%s2387 + $0x8] sm:$0x3] %vm2173, %v2386
    %s2390 = scalar_lea.vmem %s4, 192
    %2391 = vst.msk [vmem:[%s2390] sm:$0xff] %vm2171, %v2379
    %2392 = vst.msk [vmem:[%s2390 + $0x8] sm:$0x3] %vm2173, %v2380
    %v2393 = vmul.f32 %v2379, 0.95
    %v2394 = vmul.f32 %v2380, 0.95
    %v2395 = vadd.f32 %v2393, %v2149
    %v2396 = vadd.f32 %v2394, %v2155
    %v2397 = vsub.f32 %v2395, %v2385
    %v2398 = vsub.f32 %v2396, %v2386
    %vm2399 = vcmp.gt.f32.partialorder %v2397, 1.0
    %vm2400 = vcmp.gt.f32.partialorder %v2398, 1.0
    %v2401 = vsel %vm2399, 1, 0
    %v2402 = vsel %vm2400, 1, 0
    %v2403 = vcvt.s32.f32 %v2401
    %v2404 = vcvt.s32.f32 %v2402
    %s2405 = scalar_lea.vmem %s3, 208
    %2406 = vst.msk [vmem:[%s2405] sm:$0xff] %vm2171, %v2403
    %2407 = vst.msk [vmem:[%s2405 + $0x8] sm:$0x3] %vm2173, %v2404
    %s2408 = scalar_lea.vmem %s4, 208
    %2409 = vst.msk [vmem:[%s2408] sm:$0xff] %vm2171, %v2397
    %2410 = vst.msk [vmem:[%s2408 + $0x8] sm:$0x3] %vm2173, %v2398
    %v2411 = vmul.f32 %v2397, 0.95
    %v2412 = vmul.f32 %v2398, 0.95
    %v2413 = vadd.f32 %v2411, %v2149
    %v2414 = vadd.f32 %v2412, %v2155
    %v2415 = vsub.f32 %v2413, %v2403
    %v2416 = vsub.f32 %v2414, %v2404
    %vm2417 = vcmp.gt.f32.partialorder %v2415, 1.0
    %vm2418 = vcmp.gt.f32.partialorder %v2416, 1.0
    %v2419 = vsel %vm2417, 1, 0
    %v2420 = vsel %vm2418, 1, 0
    %v2421 = vcvt.s32.f32 %v2419
    %v2422 = vcvt.s32.f32 %v2420
    %s2423 = scalar_lea.vmem %s3, 224
    %2424 = vst.msk [vmem:[%s2423] sm:$0xff] %vm2171, %v2421
    %2425 = vst.msk [vmem:[%s2423 + $0x8] sm:$0x3] %vm2173, %v2422
    %s2426 = scalar_lea.vmem %s4, 224
    %2427 = vst.msk [vmem:[%s2426] sm:$0xff] %vm2171, %v2415
    %2428 = vst.msk [vmem:[%s2426 + $0x8] sm:$0x3] %vm2173, %v2416
    %v2429 = vmul.f32 %v2415, 0.95
    %v2430 = vmul.f32 %v2416, 0.95
    %v2431 = vadd.f32 %v2429, %v2149
    %v2432 = vadd.f32 %v2430, %v2155
    %v2433 = vsub.f32 %v2431, %v2421
    %v2434 = vsub.f32 %v2432, %v2422
    %vm2435 = vcmp.gt.f32.partialorder %v2433, 1.0
    %vm2436 = vcmp.gt.f32.partialorder %v2434, 1.0
    %v2437 = vsel %vm2435, 1, 0
    %v2438 = vsel %vm2436, 1, 0
    %v2439 = vcvt.s32.f32 %v2437
    %v2440 = vcvt.s32.f32 %v2438
    %s2441 = scalar_lea.vmem %s3, 240
    %2442 = vst.msk [vmem:[%s2441] sm:$0xff] %vm2171, %v2439
    %2443 = vst.msk [vmem:[%s2441 + $0x8] sm:$0x3] %vm2173, %v2440
    %s2444 = scalar_lea.vmem %s4, 240
    %2445 = vst.msk [vmem:[%s2444] sm:$0xff] %vm2171, %v2433
    %2446 = vst.msk [vmem:[%s2444 + $0x8] sm:$0x3] %vm2173, %v2434
    %v2447 = vmul.f32 %v2433, 0.95
    %v2448 = vmul.f32 %v2434, 0.95
    %v2449 = vadd.f32 %v2447, %v2149
    %v2450 = vadd.f32 %v2448, %v2155
    %v2451 = vsub.f32 %v2449, %v2439
    %v2452 = vsub.f32 %v2450, %v2440
    %vm2453 = vcmp.gt.f32.partialorder %v2451, 1.0
    %vm2454 = vcmp.gt.f32.partialorder %v2452, 1.0
    %v2455 = vsel %vm2453, 1, 0
    %v2456 = vsel %vm2454, 1, 0
    %v2457 = vcvt.s32.f32 %v2455
    %v2458 = vcvt.s32.f32 %v2456
    %s2459 = scalar_lea.vmem %s3, 256
    %2460 = vst.msk [vmem:[%s2459] sm:$0xff] %vm2171, %v2457
    %2461 = vst.msk [vmem:[%s2459 + $0x8] sm:$0x3] %vm2173, %v2458
    %s2462 = scalar_lea.vmem %s4, 256
    %2463 = vst.msk [vmem:[%s2462] sm:$0xff] %vm2171, %v2451
    %2464 = vst.msk [vmem:[%s2462 + $0x8] sm:$0x3] %vm2173, %v2452
    %v2465 = vmul.f32 %v2451, 0.95
    %v2466 = vmul.f32 %v2452, 0.95
    %v2467 = vadd.f32 %v2465, %v2149
    %v2468 = vadd.f32 %v2466, %v2155
    %v2469 = vsub.f32 %v2467, %v2457
    %v2470 = vsub.f32 %v2468, %v2458
    %vm2471 = vcmp.gt.f32.partialorder %v2469, 1.0
    %vm2472 = vcmp.gt.f32.partialorder %v2470, 1.0
    %v2473 = vsel %vm2471, 1, 0
    %v2474 = vsel %vm2472, 1, 0
    %v2475 = vcvt.s32.f32 %v2473
    %v2476 = vcvt.s32.f32 %v2474
    %s2477 = scalar_lea.vmem %s3, 272
    %2478 = vst.msk [vmem:[%s2477] sm:$0xff] %vm2171, %v2475
    %2479 = vst.msk [vmem:[%s2477 + $0x8] sm:$0x3] %vm2173, %v2476
    %s2480 = scalar_lea.vmem %s4, 272
    %2481 = vst.msk [vmem:[%s2480] sm:$0xff] %vm2171, %v2469
    %2482 = vst.msk [vmem:[%s2480 + $0x8] sm:$0x3] %vm2173, %v2470
    %v2483 = vmul.f32 %v2469, 0.95
    %v2484 = vmul.f32 %v2470, 0.95
    %v2485 = vadd.f32 %v2483, %v2149
    %v2486 = vadd.f32 %v2484, %v2155
    %v2487 = vsub.f32 %v2485, %v2475
    %v2488 = vsub.f32 %v2486, %v2476
    %vm2489 = vcmp.gt.f32.partialorder %v2487, 1.0
    %vm2490 = vcmp.gt.f32.partialorder %v2488, 1.0
    %v2491 = vsel %vm2489, 1, 0
    %v2492 = vsel %vm2490, 1, 0
    %v2493 = vcvt.s32.f32 %v2491
    %v2494 = vcvt.s32.f32 %v2492
    %s2495 = scalar_lea.vmem %s3, 288
    %2496 = vst.msk [vmem:[%s2495] sm:$0xff] %vm2171, %v2493
    %2497 = vst.msk [vmem:[%s2495 + $0x8] sm:$0x3] %vm2173, %v2494
    %s2498 = scalar_lea.vmem %s4, 288
    %2499 = vst.msk [vmem:[%s2498] sm:$0xff] %vm2171, %v2487
    %2500 = vst.msk [vmem:[%s2498 + $0x8] sm:$0x3] %vm2173, %v2488
    %v2501 = vmul.f32 %v2487, 0.95
    %v2502 = vmul.f32 %v2488, 0.95
    %v2503 = vadd.f32 %v2501, %v2149
    %v2504 = vadd.f32 %v2502, %v2155
    %v2505 = vsub.f32 %v2503, %v2493
    %v2506 = vsub.f32 %v2504, %v2494
    %vm2507 = vcmp.gt.f32.partialorder %v2505, 1.0
    %vm2508 = vcmp.gt.f32.partialorder %v2506, 1.0
    %v2509 = vsel %vm2507, 1, 0
    %v2510 = vsel %vm2508, 1, 0
    %v2511 = vcvt.s32.f32 %v2509
    %v2512 = vcvt.s32.f32 %v2510
    %s2513 = scalar_lea.vmem %s3, 304
    %2514 = vst.msk [vmem:[%s2513] sm:$0xff] %vm2171, %v2511
    %2515 = vst.msk [vmem:[%s2513 + $0x8] sm:$0x3] %vm2173, %v2512
    %s2516 = scalar_lea.vmem %s4, 304
    %2517 = vst.msk [vmem:[%s2516] sm:$0xff] %vm2171, %v2505
    %2518 = vst.msk [vmem:[%s2516 + $0x8] sm:$0x3] %vm2173, %v2506
    %v2519 = vmul.f32 %v2505, 0.95
    %v2520 = vmul.f32 %v2506, 0.95
    %v2521 = vadd.f32 %v2519, %v2149
    %v2522 = vadd.f32 %v2520, %v2155
    %v2523 = vsub.f32 %v2521, %v2511
    %v2524 = vsub.f32 %v2522, %v2512
    %vm2525 = vcmp.gt.f32.partialorder %v2523, 1.0
    %vm2526 = vcmp.gt.f32.partialorder %v2524, 1.0
    %v2527 = vsel %vm2525, 1, 0
    %v2528 = vsel %vm2526, 1, 0
    %v2529 = vcvt.s32.f32 %v2527
    %v2530 = vcvt.s32.f32 %v2528
    %s2531 = scalar_lea.vmem %s3, 320
    %2532 = vst.msk [vmem:[%s2531] sm:$0xff] %vm2171, %v2529
    %2533 = vst.msk [vmem:[%s2531 + $0x8] sm:$0x3] %vm2173, %v2530
    %s2534 = scalar_lea.vmem %s4, 320
    %2535 = vst.msk [vmem:[%s2534] sm:$0xff] %vm2171, %v2523
    %2536 = vst.msk [vmem:[%s2534 + $0x8] sm:$0x3] %vm2173, %v2524
    %v2537 = vmul.f32 %v2523, 0.95
    %v2538 = vmul.f32 %v2524, 0.95
    %v2539 = vadd.f32 %v2537, %v2149
    %v2540 = vadd.f32 %v2538, %v2155
    %v2541 = vsub.f32 %v2539, %v2529
    %v2542 = vsub.f32 %v2540, %v2530
    %vm2543 = vcmp.gt.f32.partialorder %v2541, 1.0
    %vm2544 = vcmp.gt.f32.partialorder %v2542, 1.0
    %v2545 = vsel %vm2543, 1, 0
    %v2546 = vsel %vm2544, 1, 0
    %v2547 = vcvt.s32.f32 %v2545
    %v2548 = vcvt.s32.f32 %v2546
    %s2549 = scalar_lea.vmem %s3, 336
    %2550 = vst.msk [vmem:[%s2549] sm:$0xff] %vm2171, %v2547
    %2551 = vst.msk [vmem:[%s2549 + $0x8] sm:$0x3] %vm2173, %v2548
    %s2552 = scalar_lea.vmem %s4, 336
    %2553 = vst.msk [vmem:[%s2552] sm:$0xff] %vm2171, %v2541
    %2554 = vst.msk [vmem:[%s2552 + $0x8] sm:$0x3] %vm2173, %v2542
    %v2555 = vmul.f32 %v2541, 0.95
    %v2556 = vmul.f32 %v2542, 0.95
    %v2557 = vadd.f32 %v2555, %v2149
    %v2558 = vadd.f32 %v2556, %v2155
    %v2559 = vsub.f32 %v2557, %v2547
    %v2560 = vsub.f32 %v2558, %v2548
    %vm2561 = vcmp.gt.f32.partialorder %v2559, 1.0
    %vm2562 = vcmp.gt.f32.partialorder %v2560, 1.0
    %v2563 = vsel %vm2561, 1, 0
    %v2564 = vsel %vm2562, 1, 0
    %v2565 = vcvt.s32.f32 %v2563
    %v2566 = vcvt.s32.f32 %v2564
    %s2567 = scalar_lea.vmem %s3, 352
    %2568 = vst.msk [vmem:[%s2567] sm:$0xff] %vm2171, %v2565
    %2569 = vst.msk [vmem:[%s2567 + $0x8] sm:$0x3] %vm2173, %v2566
    %s2570 = scalar_lea.vmem %s4, 352
    %2571 = vst.msk [vmem:[%s2570] sm:$0xff] %vm2171, %v2559
    %2572 = vst.msk [vmem:[%s2570 + $0x8] sm:$0x3] %vm2173, %v2560
    %v2573 = vmul.f32 %v2559, 0.95
    %v2574 = vmul.f32 %v2560, 0.95
    %v2575 = vadd.f32 %v2573, %v2149
    %v2576 = vadd.f32 %v2574, %v2155
    %v2577 = vsub.f32 %v2575, %v2565
    %v2578 = vsub.f32 %v2576, %v2566
    %vm2579 = vcmp.gt.f32.partialorder %v2577, 1.0
    %vm2580 = vcmp.gt.f32.partialorder %v2578, 1.0
    %v2581 = vsel %vm2579, 1, 0
    %v2582 = vsel %vm2580, 1, 0
    %v2583 = vcvt.s32.f32 %v2581
    %v2584 = vcvt.s32.f32 %v2582
    %s2585 = scalar_lea.vmem %s3, 368
    %2586 = vst.msk [vmem:[%s2585] sm:$0xff] %vm2171, %v2583
    %2587 = vst.msk [vmem:[%s2585 + $0x8] sm:$0x3] %vm2173, %v2584
    %s2588 = scalar_lea.vmem %s4, 368
    %2589 = vst.msk [vmem:[%s2588] sm:$0xff] %vm2171, %v2577
    %2590 = vst.msk [vmem:[%s2588 + $0x8] sm:$0x3] %vm2173, %v2578
    %v2591 = vmul.f32 %v2577, 0.95
    %v2592 = vmul.f32 %v2578, 0.95
    %v2593 = vadd.f32 %v2591, %v2149
    %v2594 = vadd.f32 %v2592, %v2155
    %v2595 = vsub.f32 %v2593, %v2583
    %v2596 = vsub.f32 %v2594, %v2584
    %vm2597 = vcmp.gt.f32.partialorder %v2595, 1.0
    %vm2598 = vcmp.gt.f32.partialorder %v2596, 1.0
    %v2599 = vsel %vm2597, 1, 0
    %v2600 = vsel %vm2598, 1, 0
    %v2601 = vcvt.s32.f32 %v2599
    %v2602 = vcvt.s32.f32 %v2600
    %s2603 = scalar_lea.vmem %s3, 384
    %2604 = vst.msk [vmem:[%s2603] sm:$0xff] %vm2171, %v2601
    %2605 = vst.msk [vmem:[%s2603 + $0x8] sm:$0x3] %vm2173, %v2602
    %s2606 = scalar_lea.vmem %s4, 384
    %2607 = vst.msk [vmem:[%s2606] sm:$0xff] %vm2171, %v2595
    %2608 = vst.msk [vmem:[%s2606 + $0x8] sm:$0x3] %vm2173, %v2596
    // Predicated region
    $region22: #{tpu_custom_call.1} parent=1 // pred_check
      _
    $region23: #{tpu_custom_call.1} parent=1 // pred_check_branch
      %2610 = sbr.rel (0) target = $region25
    $region24: #{tpu_custom_call.1} parent=1 // pred_region
      _
    $region25: #{tpu_custom_call.1} parent=1 // pred_fallthru
      _
    // Predicated region
    $region26: #{tpu_custom_call.1} parent=1 // pred_check
      _
    $region27: #{tpu_custom_call.1} parent=1 // pred_check_branch
      %2612 = sbr.rel (0) target = $region29
    $region28: #{tpu_custom_call.1} parent=1 // pred_region
      _
    $region29: #{tpu_custom_call.1} parent=1 // pred_fallthru
      _
    // Predicated region
    $region30: #{tpu_custom_call.1} parent=1 // pred_check
      _
    $region31: #{tpu_custom_call.1} parent=1 // pred_check_branch
      %2614 = sbr.rel (0) target = $region33
    $region32: #{tpu_custom_call.1} parent=1 // pred_region
      _
    $region33: #{tpu_custom_call.1} parent=1 // pred_fallthru
      _
    // Predicated region
    $region34: #{tpu_custom_call.1} parent=1 // pred_check
      _
    $region35: #{tpu_custom_call.1} parent=1 // pred_check_branch
      %2616 = sbr.rel (0) target = $region37
    $region36: #{tpu_custom_call.1} parent=1 // pred_region
      _
    $region37: #{tpu_custom_call.1} parent=1 // pred_fallthru
      _
    %2617 = vsyncpa [#allocation3], 1
    %2618 = vsyncpa [#allocation5], 1

</llo_original>
